<compile_context>
chip_gen: v7x
topology: tpu7x:2x2x1
jax: 0.10.0
libtpu: 0.0.40
codegen_flags: <defaults>
</compile_context>

<pallas_src>
import functools

import jax
import jax.numpy as jnp
from jax import lax
from jax.experimental import pallas as pl
from jax.experimental.pallas import tpu as pltpu

BN_EPS = 1e-5


# ---------------------------------------------------------------------------
# In-kernel conv helpers (implicit GEMM with K-concatenated column taps)
# ---------------------------------------------------------------------------
def _col_shift(v, dx):
    """shifted[:, x, :] = v[:, x + dx, :], zero-filled outside [0, W)."""
    if dx == 0:
        return v
    ho, wo, c = v.shape
    z = jnp.zeros((ho, abs(dx), c), v.dtype)
    if dx > 0:
        return jnp.concatenate([v[:, dx:, :], z], axis=1)
    return jnp.concatenate([z, v[:, :dx, :]], axis=1)


def _conv3x3_same(v, w_ref, *, cin, cout, ho, wo):
    """3x3, stride-1, 'same' conv of an unpadded (ho, wo, cin) bf16 value.

    w_ref: (3, 3*cin, cout) bf16 -- row-tap major, (col-tap, cin) minor.
    Zero padding is synthesized in-kernel while building the K-concat operand
    (3 dots of K=3*cin instead of 9 of K=cin).  Returns f32 (ho*wo, cout).
    """
    a0 = jnp.concatenate([_col_shift(v, dj - 1) for dj in range(3)],
                         axis=-1)                               # (ho, wo, 3*cin)
    zrow = jnp.zeros((1, wo, 3 * cin), a0.dtype)
    acc = jnp.zeros((ho * wo, cout), jnp.float32)
    for di in range(3):
        dy = di - 1
        if dy < 0:
            a = jnp.concatenate([zrow, a0[:-1]], axis=0)        # rows shifted down
        elif dy == 0:
            a = a0
        else:
            a = jnp.concatenate([a0[1:], zrow], axis=0)         # rows shifted up
        acc = acc + jnp.dot(a.reshape(ho * wo, 3 * cin), w_ref[di],
                            preferred_element_type=jnp.float32)
    return acc


def _conv3x3_stride2_band(x_ref, w_ref, *, cin, cout, ho, wo, R):
    """3x3, stride-2, 'same' conv from a pre-padded stride-phase band ref.

    x_ref: (4*R, C, cin) bf16 with R = ho+1, C = wo+1 (phase-major layout,
    built once per block in the wrapper).  w_ref: (3, 3*cin, cout) bf16.
    Returns f32 (ho*wo, cout).
    """
    acc = jnp.zeros((ho * wo, cout), jnp.float32)
    for di in range(3):
        si, ro = di % 2, di // 2
        cols = []
        for dj in range(3):
            sj, co = dj % 2, dj // 2
            p = si * 2 + sj
            cols.append(x_ref[p * R + ro: p * R + ro + ho, co: co + wo, :])
        a = jnp.concatenate(cols, axis=-1)                      # (ho, wo, 3*cin)
        acc = acc + jnp.dot(a.reshape(ho * wo, 3 * cin), w_ref[di],
                            preferred_element_type=jnp.float32)
    return acc


# ---------------------------------------------------------------------------
# Fused BasicBlock kernel
# ---------------------------------------------------------------------------
def _basic_block_kernel(x_ref, w1_ref, w2_ref, s1_ref, b1_ref, s2_ref, b2_ref,
                        *rest, stride, has_proj, ho, wo, cin, cout, R):
    if has_proj:
        ws_ref, ss_ref, bs_ref, o_ref = rest
    else:
        (o_ref,) = rest
    M = ho * wo

    # ---- conv1 (3x3, stride) + folded BN1 + ReLU -> bf16 ------------------
    if stride == 1:
        xv = x_ref[...]                                          # (ho, wo, cin)
        acc1 = _conv3x3_same(xv, w1_ref, cin=cin, cout=cout, ho=ho, wo=wo)
    else:
        acc1 = _conv3x3_stride2_band(x_ref, w1_ref, cin=cin, cout=cout,
                                     ho=ho, wo=wo, R=R)
    h1 = jnp.maximum(acc1 * s1_ref[...] + b1_ref[...], 0.0)
    h1 = h1.reshape(ho, wo, cout).astype(jnp.bfloat16)

    # ---- conv2 (3x3, stride 1) + folded BN2 --------------------------------
    acc2 = _conv3x3_same(h1, w2_ref, cin=cout, cout=cout, ho=ho, wo=wo)
    y = acc2 * s2_ref[...] + b2_ref[...]

    # ---- shortcut ----------------------------------------------------------
    if has_proj:
        if stride == 1:
            xs = xv.reshape(M, cin)
        else:
            # 1x1 stride-2 conv reads stride-phase (1,1): aligned slice of the
            # same band used by conv1 (no separate strided copy of x).
            xs = x_ref[3 * R: 3 * R + ho, :wo, :].reshape(M, cin)
        sc = (jnp.dot(xs, ws_ref[...], preferred_element_type=jnp.float32)
              * ss_ref[...] + bs_ref[...])
    else:
        sc = xv.reshape(M, cin).astype(jnp.float32)              # identity

    out = jnp.maximum(y + sc, 0.0)
    o_ref[...] = out.reshape(ho, wo, cout).astype(o_ref.dtype)


# ---------------------------------------------------------------------------
# Wrapper
# ---------------------------------------------------------------------------
def _fold_bn(bn):
    scale = bn["gamma"] / jnp.sqrt(bn["var"] + BN_EPS)
    bias = bn["beta"] - bn["mean"] * scale
    return scale.astype(jnp.float32), bias.astype(jnp.float32)


def basic_block_forward(x, p, *, stride, out_dtype=jnp.float32):
    """x: (N, H, W, Cin) NHWC -> (N, Ho, Wo, Cout); PyTorch BasicBlock semantics."""
    n, h, w, cin = x.shape
    cout = p["w1"].shape[-1]
    stride = int(stride)
    assert stride in (1, 2), "ResNet BasicBlock uses stride 1 or 2"
    has_proj = (stride != 1) or (cin != cout)
    if stride == 2:
        assert has_proj

    s1, b1 = _fold_bn(p["bn1"])
    s2, b2 = _fold_bn(p["bn2"])
    xb = x.astype(jnp.bfloat16)

    if stride == 1:
        ho, wo, R = h, w, 0
        xin = xb.reshape(n * h, w, cin)                 # free reshape, no copy
        x_block = (h, w, cin)
    else:
        ho = (h + 2 - 3) // 2 + 1
        wo = (w + 2 - 3) // 2 + 1
        R, C = ho + 1, wo + 1
        # Single per-block relayout: zero-pad + split into 2x2 stride phases
        # so every conv tap (and the 1x1 shortcut) is a contiguous slice.
        xp = jnp.pad(xb, ((0, 0), (1, 2 * R - h - 1), (1, 2 * C - w - 1), (0, 0)))
        xin = (xp.reshape(n, R, 2, C, 2, cin)
                 .transpose(0, 2, 4, 1, 3, 5)
                 .reshape(n * 4 * R, C, cin))
        x_block = (4 * R, C, cin)

    # Weight row-blocks for the K-concat: (kh, kw*cin, cout).
    w1r = p["w1"].reshape(3, 3 * cin, cout).astype(jnp.bfloat16)
    w2r = p["w2"].reshape(3, 3 * cout, cout).astype(jnp.bfloat16)

    args = [xin, w1r, w2r,
            s1.reshape(1, cout), b1.reshape(1, cout),
            s2.reshape(1, cout), b2.reshape(1, cout)]
    in_specs = [
        pl.BlockSpec(x_block, lambda i: (i, 0, 0)),
        pl.BlockSpec((3, 3 * cin, cout), lambda i: (0, 0, 0)),
        pl.BlockSpec((3, 3 * cout, cout), lambda i: (0, 0, 0)),
        pl.BlockSpec((1, cout), lambda i: (0, 0)),
        pl.BlockSpec((1, cout), lambda i: (0, 0)),
        pl.BlockSpec((1, cout), lambda i: (0, 0)),
        pl.BlockSpec((1, cout), lambda i: (0, 0)),
    ]
    if has_proj:
        ss, bs = _fold_bn(p["bns"])
        args += [p["ws"].reshape(cin, cout).astype(jnp.bfloat16),
                 ss.reshape(1, cout), bs.reshape(1, cout)]
        in_specs += [
            pl.BlockSpec((cin, cout), lambda i: (0, 0)),
            pl.BlockSpec((1, cout), lambda i: (0, 0)),
            pl.BlockSpec((1, cout), lambda i: (0, 0)),
        ]

    flops = 2 * n * ho * wo * cout * (9 * cin + 9 * cout
                                      + (cin if has_proj else 0))
    bytes_accessed = (xin.size * 2 + w1r.size * 2 + w2r.size * 2
                      + 8 * cout * 4
                      + n * ho * wo * cout * jnp.dtype(out_dtype).itemsize
                      + (cin * cout * 2 + 2 * cout * 4 if has_proj else 0))
    cost = pl.CostEstimate(flops=int(flops), transcendentals=0,
                           bytes_accessed=int(bytes_accessed))

    kern = functools.partial(
        _basic_block_kernel, stride=stride, has_proj=has_proj,
        ho=ho, wo=wo, cin=cin, cout=cout, R=R)

    out = pl.pallas_call(
        kern,
        out_shape=jax.ShapeDtypeStruct((n * ho, wo, cout), out_dtype),
        grid=(n,),
        in_specs=in_specs,
        out_specs=pl.BlockSpec((ho, wo, cout), lambda i: (i, 0, 0)),
        compiler_params=pltpu.CompilerParams(
            dimension_semantics=("parallel",)),
        cost_estimate=cost,
    )(*args)
    return out.reshape(n, ho, wo, cout)


def model_forward(x_nchw, params):
    """Two BasicBlocks: (64 -> 128, stride 2, projection shortcut) then
    (128 -> 128, stride 1, identity shortcut).  NCHW in / NCHW out."""
    x = jnp.transpose(x_nchw, (0, 2, 3, 1)).astype(jnp.float32)
    # Inter-block activation stays bf16 in HBM (next block casts to bf16 anyway).
    x = basic_block_forward(x, params["block1"], stride=2, out_dtype=jnp.bfloat16)
    x = basic_block_forward(x, params["block2"], stride=1, out_dtype=jnp.float32)
    return jnp.transpose(x, (0, 3, 1, 2))


# ---------------------------------------------------------------------------
# Plain-JAX reference (for correctness check only)
# ---------------------------------------------------------------------------
def _conv_ref(x, w, stride, pad):
    xq = x.astype(jnp.bfloat16).astype(jnp.float32)
    wq = w.astype(jnp.bfloat16).astype(jnp.float32)
    return lax.conv_general_dilated(
        xq, wq, (stride, stride), [(pad, pad), (pad, pad)],
        dimension_numbers=("NHWC", "HWIO", "NHWC"),
        precision=lax.Precision.HIGHEST)


def _bn_ref(x, bn):
    return (x - bn["mean"]) / jnp.sqrt(bn["var"] + BN_EPS) * bn["gamma"] + bn["beta"]


def basic_block_ref(x, p, *, stride):
    h1 = jnp.maximum(_bn_ref(_conv_ref(x, p["w1"], stride, 1), p["bn1"]), 0.0)
    h1 = h1.astype(jnp.bfloat16).astype(jnp.float32)   # kernel stores h1 in bf16
    h2 = _bn_ref(_conv_ref(h1, p["w2"], 1, 1), p["bn2"])
    if "ws" in p:
        sc = _bn_ref(_conv_ref(x[:, ::stride, ::stride, :], p["ws"], 1, 0), p["bns"])
    else:
        sc = x
    return jnp.maximum(h2 + sc, 0.0)


def model_ref(x_nchw, params):
    x = jnp.transpose(x_nchw, (0, 2, 3, 1)).astype(jnp.float32)
    x = basic_block_ref(x, params["block1"], stride=2)
    x = x.astype(jnp.bfloat16).astype(jnp.float32)      # inter-block bf16 store
    x = basic_block_ref(x, params["block2"], stride=1)
    return jnp.transpose(x, (0, 3, 1, 2))


# ---------------------------------------------------------------------------
# Parameter init
# ---------------------------------------------------------------------------
def _bn_init(key, c):
    k1, k2, k3, k4 = jax.random.split(key, 4)
    return {
        "gamma": 1.0 + 0.1 * jax.random.normal(k1, (c,), jnp.float32),
        "beta": 0.1 * jax.random.normal(k2, (c,), jnp.float32),
        "mean": 0.1 * jax.random.normal(k3, (c,), jnp.float32),
        "var": 1.0 + 0.1 * jax.random.uniform(k4, (c,), jnp.float32),
    }


def init_basic_block(key, cin, cout, stride):
    ks = jax.random.split(key, 6)

    def conv_w(k, kh, kw, ci, co):
        return jax.random.normal(k, (kh, kw, ci, co), jnp.float32) / float(kh * kw * ci) ** 0.5

    p = {"w1": conv_w(ks[0], 3, 3, cin, cout), "bn1": _bn_init(ks[1], cout),
         "w2": conv_w(ks[2], 3, 3, cout, cout), "bn2": _bn_init(ks[3], cout)}
    if stride != 1 or cin != cout:
        p["ws"] = conv_w(ks[4], 1, 1, cin, cout)
        p["bns"] = _bn_init(ks[5], cout)
    return p


# ---------------------------------------------------------------------------
if __name__ == "__main__":
    key = jax.random.PRNGKey(0)
    kb1, kb2, kx = jax.random.split(key, 3)

    params = {"block1": init_basic_block(kb1, 64, 128, 2),    # projection shortcut
              "block2": init_basic_block(kb2, 128, 128, 1)}   # identity shortcut
    x = jax.random.normal(kx, (2, 64, 16, 16), jnp.float32)   # NCHW, like PyTorch

    out = jax.block_until_ready(jax.jit(model_forward)(x, params))
    assert out.shape == (2, 128, 8, 8), out.shape
    assert bool(jnp.all(jnp.isfinite(out)))

    ref = jax.block_until_ready(jax.jit(model_ref)(x, params))
    err = float(jnp.max(jnp.abs(out - ref)))
    assert err < 5e-2, f"max |out - ref| = {err}"

    print("KERNEL_OK")
</pallas_src>

<mosaic_0001>
module attributes {stable_mosaic.version = 11 : i64} {
  func.func @_basic_block_kernel(%arg0: i32, %arg1: memref<36x9x64xbf16, #tpu.memory_space<vmem>>, %arg2: memref<3x192x128xbf16, #tpu.memory_space<vmem>>, %arg3: memref<3x384x128xbf16, #tpu.memory_space<vmem>>, %arg4: memref<1x128xf32, #tpu.memory_space<vmem>>, %arg5: memref<1x128xf32, #tpu.memory_space<vmem>>, %arg6: memref<1x128xf32, #tpu.memory_space<vmem>>, %arg7: memref<1x128xf32, #tpu.memory_space<vmem>>, %arg8: memref<64x128xbf16, #tpu.memory_space<vmem>>, %arg9: memref<1x128xf32, #tpu.memory_space<vmem>>, %arg10: memref<1x128xf32, #tpu.memory_space<vmem>>, %arg11: memref<8x8x128xbf16, #tpu.memory_space<vmem>>) attributes {dimension_semantics = [#tpu.dimension_semantics<parallel>], iteration_bounds = array<i64: 2>, scalar_prefetch = 0 : i64, scratch_operands = 0 : i64, tpu.core_type = #tpu.core_type<tc>, window_params = [{transform_indices = @transform_0, window_bounds = array<i64: 36, 9, 64>}, {pipeline_mode = #tpu.pipeline_mode<synchronous>, transform_indices = @transform_1, window_bounds = array<i64: 3, 192, 128>}, {pipeline_mode = #tpu.pipeline_mode<synchronous>, transform_indices = @transform_2, window_bounds = array<i64: 3, 384, 128>}, {pipeline_mode = #tpu.pipeline_mode<synchronous>, transform_indices = @transform_3, window_bounds = array<i64: 1, 128>}, {pipeline_mode = #tpu.pipeline_mode<synchronous>, transform_indices = @transform_4, window_bounds = array<i64: 1, 128>}, {pipeline_mode = #tpu.pipeline_mode<synchronous>, transform_indices = @transform_5, window_bounds = array<i64: 1, 128>}, {pipeline_mode = #tpu.pipeline_mode<synchronous>, transform_indices = @transform_6, window_bounds = array<i64: 1, 128>}, {pipeline_mode = #tpu.pipeline_mode<synchronous>, transform_indices = @transform_7, window_bounds = array<i64: 64, 128>}, {pipeline_mode = #tpu.pipeline_mode<synchronous>, transform_indices = @transform_8, window_bounds = array<i64: 1, 128>}, {pipeline_mode = #tpu.pipeline_mode<synchronous>, transform_indices = @transform_9, window_bounds = array<i64: 1, 128>}, {transform_indices = @transform_10, window_bounds = array<i64: 8, 8, 128>}]} {
    %cst = arith.constant 0.000000e+00 : f32
    %0 = vector.broadcast %cst : f32 to vector<64x128xf32>
    %c0 = arith.constant 0 : index
    %c0_0 = arith.constant 0 : index
    %c0_1 = arith.constant 0 : index
    %1 = vector.load %arg1[%c0, %c0_0, %c0_1] : memref<36x9x64xbf16, #tpu.memory_space<vmem>>, vector<8x8x64xbf16>
    %c9 = arith.constant 9 : index
    %c0_2 = arith.constant 0 : index
    %c0_3 = arith.constant 0 : index
    %2 = vector.load %arg1[%c9, %c0_2, %c0_3] : memref<36x9x64xbf16, #tpu.memory_space<vmem>>, vector<8x8x64xbf16>
    %c0_4 = arith.constant 0 : index
    %c1 = arith.constant 1 : index
    %c0_5 = arith.constant 0 : index
    %3 = vector.load %arg1[%c0_4, %c1, %c0_5] : memref<36x9x64xbf16, #tpu.memory_space<vmem>>, vector<8x8x64xbf16>
    %4 = tpu.concatenate %1, %2, %3 in 2 : vector<8x8x64xbf16>, vector<8x8x64xbf16>, vector<8x8x64xbf16> -> vector<8x8x192xbf16>
    %5 = vector.shape_cast %4 : vector<8x8x192xbf16> to vector<64x192xbf16>
    %c0_6 = arith.constant 0 : index
    %c0_7 = arith.constant 0 : index
    %c0_8 = arith.constant 0 : index
    %6 = vector.load %arg2[%c0_6, %c0_7, %c0_8] : memref<3x192x128xbf16, #tpu.memory_space<vmem>>, vector<1x192x128xbf16>
    %7 = vector.shape_cast %6 : vector<1x192x128xbf16> to vector<192x128xbf16>
    %cst_9 = arith.constant dense<0.000000e+00> : vector<64x128xf32>
    %8 = tpu.matmul %5, %7, %cst_9 {dimension_numbers = #tpu.dot_dimension_numbers<[1], [0], [0], [1], [0, 0, 1, 1], [], []>} : vector<64x192xbf16>, vector<192x128xbf16>, vector<64x128xf32> -> vector<64x128xf32>
    %9 = arith.addf %0, %8 : vector<64x128xf32>
    %c18 = arith.constant 18 : index
    %c0_10 = arith.constant 0 : index
    %c0_11 = arith.constant 0 : index
    %10 = vector.load %arg1[%c18, %c0_10, %c0_11] : memref<36x9x64xbf16, #tpu.memory_space<vmem>>, vector<8x8x64xbf16>
    %c27 = arith.constant 27 : index
    %c0_12 = arith.constant 0 : index
    %c0_13 = arith.constant 0 : index
    %11 = vector.load %arg1[%c27, %c0_12, %c0_13] : memref<36x9x64xbf16, #tpu.memory_space<vmem>>, vector<8x8x64xbf16>
    %c18_14 = arith.constant 18 : index
    %c1_15 = arith.constant 1 : index
    %c0_16 = arith.constant 0 : index
    %12 = vector.load %arg1[%c18_14, %c1_15, %c0_16] : memref<36x9x64xbf16, #tpu.memory_space<vmem>>, vector<8x8x64xbf16>
    %13 = tpu.concatenate %10, %11, %12 in 2 : vector<8x8x64xbf16>, vector<8x8x64xbf16>, vector<8x8x64xbf16> -> vector<8x8x192xbf16>
    %14 = vector.shape_cast %13 : vector<8x8x192xbf16> to vector<64x192xbf16>
    %c1_17 = arith.constant 1 : index
    %c0_18 = arith.constant 0 : index
    %c0_19 = arith.constant 0 : index
    %15 = vector.load %arg2[%c1_17, %c0_18, %c0_19] : memref<3x192x128xbf16, #tpu.memory_space<vmem>>, vector<1x192x128xbf16>
    %16 = vector.shape_cast %15 : vector<1x192x128xbf16> to vector<192x128xbf16>
    %cst_20 = arith.constant dense<0.000000e+00> : vector<64x128xf32>
    %17 = tpu.matmul %14, %16, %cst_20 {dimension_numbers = #tpu.dot_dimension_numbers<[1], [0], [0], [1], [0, 0, 1, 1], [], []>} : vector<64x192xbf16>, vector<192x128xbf16>, vector<64x128xf32> -> vector<64x128xf32>
    %18 = arith.addf %9, %17 : vector<64x128xf32>
    %c1_21 = arith.constant 1 : index
    %c0_22 = arith.constant 0 : index
    %c0_23 = arith.constant 0 : index
    %19 = vector.load %arg1[%c1_21, %c0_22, %c0_23] : memref<36x9x64xbf16, #tpu.memory_space<vmem>>, vector<8x8x64xbf16>
    %c10 = arith.constant 10 : index
    %c0_24 = arith.constant 0 : index
    %c0_25 = arith.constant 0 : index
    %20 = vector.load %arg1[%c10, %c0_24, %c0_25] : memref<36x9x64xbf16, #tpu.memory_space<vmem>>, vector<8x8x64xbf16>
    %c1_26 = arith.constant 1 : index
    %c1_27 = arith.constant 1 : index
    %c0_28 = arith.constant 0 : index
    %21 = vector.load %arg1[%c1_26, %c1_27, %c0_28] : memref<36x9x64xbf16, #tpu.memory_space<vmem>>, vector<8x8x64xbf16>
    %22 = tpu.concatenate %19, %20, %21 in 2 : vector<8x8x64xbf16>, vector<8x8x64xbf16>, vector<8x8x64xbf16> -> vector<8x8x192xbf16>
    %23 = vector.shape_cast %22 : vector<8x8x192xbf16> to vector<64x192xbf16>
    %c2 = arith.constant 2 : index
    %c0_29 = arith.constant 0 : index
    %c0_30 = arith.constant 0 : index
    %24 = vector.load %arg2[%c2, %c0_29, %c0_30] : memref<3x192x128xbf16, #tpu.memory_space<vmem>>, vector<1x192x128xbf16>
    %25 = vector.shape_cast %24 : vector<1x192x128xbf16> to vector<192x128xbf16>
    %cst_31 = arith.constant dense<0.000000e+00> : vector<64x128xf32>
    %26 = tpu.matmul %23, %25, %cst_31 {dimension_numbers = #tpu.dot_dimension_numbers<[1], [0], [0], [1], [0, 0, 1, 1], [], []>} : vector<64x192xbf16>, vector<192x128xbf16>, vector<64x128xf32> -> vector<64x128xf32>
    %27 = arith.addf %18, %26 : vector<64x128xf32>
    %c0_32 = arith.constant 0 : index
    %c0_33 = arith.constant 0 : index
    %28 = vector.load %arg4[%c0_32, %c0_33] : memref<1x128xf32, #tpu.memory_space<vmem>>, vector<1x128xf32>
    %29 = vector.broadcast %28 : vector<1x128xf32> to vector<64x128xf32>
    %30 = arith.mulf %27, %29 : vector<64x128xf32>
    %c0_34 = arith.constant 0 : index
    %c0_35 = arith.constant 0 : index
    %31 = vector.load %arg5[%c0_34, %c0_35] : memref<1x128xf32, #tpu.memory_space<vmem>>, vector<1x128xf32>
    %32 = vector.broadcast %31 : vector<1x128xf32> to vector<64x128xf32>
    %33 = arith.addf %30, %32 : vector<64x128xf32>
    %cst_36 = arith.constant 0.000000e+00 : f32
    %34 = vector.broadcast %cst_36 : f32 to vector<64x128xf32>
    %35 = arith.maximumf %33, %34 : vector<64x128xf32>
    %36 = vector.shape_cast %35 : vector<64x128xf32> to vector<8x8x128xf32>
    %37 = arith.truncf %36 : vector<8x8x128xf32> to vector<8x8x128xbf16>
    %cst_37 = arith.constant 0.000000e+00 : bf16
    %38 = vector.broadcast %cst_37 : bf16 to vector<8x1x128xbf16>
    %39 = vector.extract_strided_slice %37 {offsets = [0, 0, 0], sizes = [8, 7, 128], strides = [1, 1, 1]} : vector<8x8x128xbf16> to vector<8x7x128xbf16>
    %40 = tpu.concatenate %38, %39 in 1 : vector<8x1x128xbf16>, vector<8x7x128xbf16> -> vector<8x8x128xbf16>
    %cst_38 = arith.constant 0.000000e+00 : bf16
    %41 = vector.broadcast %cst_38 : bf16 to vector<8x1x128xbf16>
    %42 = vector.extract_strided_slice %37 {offsets = [0, 1, 0], sizes = [8, 7, 128], strides = [1, 1, 1]} : vector<8x8x128xbf16> to vector<8x7x128xbf16>
    %43 = tpu.concatenate %42, %41 in 1 : vector<8x7x128xbf16>, vector<8x1x128xbf16> -> vector<8x8x128xbf16>
    %44 = tpu.concatenate %40, %37, %43 in 2 : vector<8x8x128xbf16>, vector<8x8x128xbf16>, vector<8x8x128xbf16> -> vector<8x8x384xbf16>
    %cst_39 = arith.constant 0.000000e+00 : bf16
    %45 = vector.broadcast %cst_39 : bf16 to vector<1x8x384xbf16>
    %cst_40 = arith.constant 0.000000e+00 : f32
    %46 = vector.broadcast %cst_40 : f32 to vector<64x128xf32>
    %47 = vector.extract_strided_slice %44 {offsets = [0, 0, 0], sizes = [7, 8, 384], strides = [1, 1, 1]} : vector<8x8x384xbf16> to vector<7x8x384xbf16>
    %48 = tpu.concatenate %45, %47 in 0 : vector<1x8x384xbf16>, vector<7x8x384xbf16> -> vector<8x8x384xbf16>
    %49 = vector.shape_cast %48 : vector<8x8x384xbf16> to vector<64x384xbf16>
    %c0_41 = arith.constant 0 : index
    %c0_42 = arith.constant 0 : index
    %c0_43 = arith.constant 0 : index
    %50 = vector.load %arg3[%c0_41, %c0_42, %c0_43] : memref<3x384x128xbf16, #tpu.memory_space<vmem>>, vector<1x384x128xbf16>
    %51 = vector.shape_cast %50 : vector<1x384x128xbf16> to vector<384x128xbf16>
    %cst_44 = arith.constant dense<0.000000e+00> : vector<64x128xf32>
    %52 = tpu.matmul %49, %51, %cst_44 {dimension_numbers = #tpu.dot_dimension_numbers<[1], [0], [0], [1], [0, 0, 1, 1], [], []>} : vector<64x384xbf16>, vector<384x128xbf16>, vector<64x128xf32> -> vector<64x128xf32>
    %53 = arith.addf %46, %52 : vector<64x128xf32>
    %54 = vector.shape_cast %44 : vector<8x8x384xbf16> to vector<64x384xbf16>
    %c1_45 = arith.constant 1 : index
    %c0_46 = arith.constant 0 : index
    %c0_47 = arith.constant 0 : index
    %55 = vector.load %arg3[%c1_45, %c0_46, %c0_47] : memref<3x384x128xbf16, #tpu.memory_space<vmem>>, vector<1x384x128xbf16>
    %56 = vector.shape_cast %55 : vector<1x384x128xbf16> to vector<384x128xbf16>
    %cst_48 = arith.constant dense<0.000000e+00> : vector<64x128xf32>
    %57 = tpu.matmul %54, %56, %cst_48 {dimension_numbers = #tpu.dot_dimension_numbers<[1], [0], [0], [1], [0, 0, 1, 1], [], []>} : vector<64x384xbf16>, vector<384x128xbf16>, vector<64x128xf32> -> vector<64x128xf32>
    %58 = arith.addf %53, %57 : vector<64x128xf32>
    %59 = vector.extract_strided_slice %44 {offsets = [1, 0, 0], sizes = [7, 8, 384], strides = [1, 1, 1]} : vector<8x8x384xbf16> to vector<7x8x384xbf16>
    %60 = tpu.concatenate %59, %45 in 0 : vector<7x8x384xbf16>, vector<1x8x384xbf16> -> vector<8x8x384xbf16>
    %61 = vector.shape_cast %60 : vector<8x8x384xbf16> to vector<64x384xbf16>
    %c2_49 = arith.constant 2 : index
    %c0_50 = arith.constant 0 : index
    %c0_51 = arith.constant 0 : index
    %62 = vector.load %arg3[%c2_49, %c0_50, %c0_51] : memref<3x384x128xbf16, #tpu.memory_space<vmem>>, vector<1x384x128xbf16>
    %63 = vector.shape_cast %62 : vector<1x384x128xbf16> to vector<384x128xbf16>
    %cst_52 = arith.constant dense<0.000000e+00> : vector<64x128xf32>
    %64 = tpu.matmul %61, %63, %cst_52 {dimension_numbers = #tpu.dot_dimension_numbers<[1], [0], [0], [1], [0, 0, 1, 1], [], []>} : vector<64x384xbf16>, vector<384x128xbf16>, vector<64x128xf32> -> vector<64x128xf32>
    %65 = arith.addf %58, %64 : vector<64x128xf32>
    %c0_53 = arith.constant 0 : index
    %c0_54 = arith.constant 0 : index
    %66 = vector.load %arg6[%c0_53, %c0_54] : memref<1x128xf32, #tpu.memory_space<vmem>>, vector<1x128xf32>
    %67 = vector.broadcast %66 : vector<1x128xf32> to vector<64x128xf32>
    %68 = arith.mulf %65, %67 : vector<64x128xf32>
    %c0_55 = arith.constant 0 : index
    %c0_56 = arith.constant 0 : index
    %69 = vector.load %arg7[%c0_55, %c0_56] : memref<1x128xf32, #tpu.memory_space<vmem>>, vector<1x128xf32>
    %70 = vector.broadcast %69 : vector<1x128xf32> to vector<64x128xf32>
    %71 = arith.addf %68, %70 : vector<64x128xf32>
    %c27_57 = arith.constant 27 : index
    %c0_58 = arith.constant 0 : index
    %c0_59 = arith.constant 0 : index
    %72 = vector.load %arg1[%c27_57, %c0_58, %c0_59] : memref<36x9x64xbf16, #tpu.memory_space<vmem>>, vector<8x8x64xbf16>
    %73 = vector.shape_cast %72 : vector<8x8x64xbf16> to vector<64x64xbf16>
    %c0_60 = arith.constant 0 : index
    %c0_61 = arith.constant 0 : index
    %74 = vector.load %arg8[%c0_60, %c0_61] : memref<64x128xbf16, #tpu.memory_space<vmem>>, vector<64x128xbf16>
    %cst_62 = arith.constant dense<0.000000e+00> : vector<64x128xf32>
    %75 = tpu.matmul %73, %74, %cst_62 {dimension_numbers = #tpu.dot_dimension_numbers<[1], [0], [0], [1], [0, 0, 1, 1], [], []>} : vector<64x64xbf16>, vector<64x128xbf16>, vector<64x128xf32> -> vector<64x128xf32>
    %c0_63 = arith.constant 0 : index
    %c0_64 = arith.constant 0 : index
    %76 = vector.load %arg9[%c0_63, %c0_64] : memref<1x128xf32, #tpu.memory_space<vmem>>, vector<1x128xf32>
    %77 = vector.broadcast %76 : vector<1x128xf32> to vector<64x128xf32>
    %78 = arith.mulf %75, %77 : vector<64x128xf32>
    %c0_65 = arith.constant 0 : index
    %c0_66 = arith.constant 0 : index
    %79 = vector.load %arg10[%c0_65, %c0_66] : memref<1x128xf32, #tpu.memory_space<vmem>>, vector<1x128xf32>
    %80 = vector.broadcast %79 : vector<1x128xf32> to vector<64x128xf32>
    %81 = arith.addf %78, %80 : vector<64x128xf32>
    %82 = arith.addf %71, %81 : vector<64x128xf32>
    %cst_67 = arith.constant 0.000000e+00 : f32
    %83 = vector.broadcast %cst_67 : f32 to vector<64x128xf32>
    %84 = arith.maximumf %82, %83 : vector<64x128xf32>
    %85 = vector.shape_cast %84 : vector<64x128xf32> to vector<8x8x128xf32>
    %86 = arith.truncf %85 : vector<8x8x128xf32> to vector<8x8x128xbf16>
    %c0_68 = arith.constant 0 : index
    %c0_69 = arith.constant 0 : index
    %c0_70 = arith.constant 0 : index
    %87 = vector.load %arg11[%c0_68, %c0_69, %c0_70] : memref<8x8x128xbf16, #tpu.memory_space<vmem>>, vector<8x8x128xbf16>
    tpu.vector_store %arg11[%c0_68, %c0_69, %c0_70], %86 {strides = array<i32>} : memref<8x8x128xbf16, #tpu.memory_space<vmem>>, vector<8x8x128xbf16>,
    return
  }
  func.func @transform_0(%arg0: i32) -> (i32, i32, i32) {
    %c0_i32 = arith.constant 0 : i32
    %c0_i32_0 = arith.constant 0 : i32
    %c0_i32_1 = arith.constant 0 : i32
    return %arg0, %c0_i32, %c0_i32_0 : i32, i32, i32
  }
  func.func @transform_1(%arg0: i32) -> (i32, i32, i32) {
    %c0_i32 = arith.constant 0 : i32
    %c0_i32_0 = arith.constant 0 : i32
    %c0_i32_1 = arith.constant 0 : i32
    %c0_i32_2 = arith.constant 0 : i32
    return %c0_i32, %c0_i32_0, %c0_i32_1 : i32, i32, i32
  }
  func.func @transform_2(%arg0: i32) -> (i32, i32, i32) {
    %c0_i32 = arith.constant 0 : i32
    %c0_i32_0 = arith.constant 0 : i32
    %c0_i32_1 = arith.constant 0 : i32
    %c0_i32_2 = arith.constant 0 : i32
    return %c0_i32, %c0_i32_0, %c0_i32_1 : i32, i32, i32
  }
  func.func @transform_3(%arg0: i32) -> (i32, i32) {
    %c0_i32 = arith.constant 0 : i32
    %c0_i32_0 = arith.constant 0 : i32
    %c0_i32_1 = arith.constant 0 : i32
    return %c0_i32, %c0_i32_0 : i32, i32
  }
  func.func @transform_4(%arg0: i32) -> (i32, i32) {
    %c0_i32 = arith.constant 0 : i32
    %c0_i32_0 = arith.constant 0 : i32
    %c0_i32_1 = arith.constant 0 : i32
    return %c0_i32, %c0_i32_0 : i32, i32
  }
  func.func @transform_5(%arg0: i32) -> (i32, i32) {
    %c0_i32 = arith.constant 0 : i32
    %c0_i32_0 = arith.constant 0 : i32
    %c0_i32_1 = arith.constant 0 : i32
    return %c0_i32, %c0_i32_0 : i32, i32
  }
  func.func @transform_6(%arg0: i32) -> (i32, i32) {
    %c0_i32 = arith.constant 0 : i32
    %c0_i32_0 = arith.constant 0 : i32
    %c0_i32_1 = arith.constant 0 : i32
    return %c0_i32, %c0_i32_0 : i32, i32
  }
  func.func @transform_7(%arg0: i32) -> (i32, i32) {
    %c0_i32 = arith.constant 0 : i32
    %c0_i32_0 = arith.constant 0 : i32
    %c0_i32_1 = arith.constant 0 : i32
    return %c0_i32, %c0_i32_0 : i32, i32
  }
  func.func @transform_8(%arg0: i32) -> (i32, i32) {
    %c0_i32 = arith.constant 0 : i32
    %c0_i32_0 = arith.constant 0 : i32
    %c0_i32_1 = arith.constant 0 : i32
    return %c0_i32, %c0_i32_0 : i32, i32
  }
  func.func @transform_9(%arg0: i32) -> (i32, i32) {
    %c0_i32 = arith.constant 0 : i32
    %c0_i32_0 = arith.constant 0 : i32
    %c0_i32_1 = arith.constant 0 : i32
    return %c0_i32, %c0_i32_0 : i32, i32
  }
  func.func @transform_10(%arg0: i32) -> (i32, i32, i32) {
    %c0_i32 = arith.constant 0 : i32
    %c0_i32_0 = arith.constant 0 : i32
    %c0_i32_1 = arith.constant 0 : i32
    return %arg0, %c0_i32, %c0_i32_0 : i32, i32, i32
  }
}

module attributes {stable_mosaic.version = 11 : i64} {
  func.func @_basic_block_kernel(%arg0: i32, %arg1: memref<8x8x128xbf16, #tpu.memory_space<vmem>>, %arg2: memref<3x384x128xbf16, #tpu.memory_space<vmem>>, %arg3: memref<3x384x128xbf16, #tpu.memory_space<vmem>>, %arg4: memref<1x128xf32, #tpu.memory_space<vmem>>, %arg5: memref<1x128xf32, #tpu.memory_space<vmem>>, %arg6: memref<1x128xf32, #tpu.memory_space<vmem>>, %arg7: memref<1x128xf32, #tpu.memory_space<vmem>>, %arg8: memref<8x8x128xf32, #tpu.memory_space<vmem>>) attributes {dimension_semantics = [#tpu.dimension_semantics<parallel>], iteration_bounds = array<i64: 2>, scalar_prefetch = 0 : i64, scratch_operands = 0 : i64, tpu.core_type = #tpu.core_type<tc>, window_params = [{transform_indices = @transform_0, window_bounds = array<i64: 8, 8, 128>}, {pipeline_mode = #tpu.pipeline_mode<synchronous>, transform_indices = @transform_1, window_bounds = array<i64: 3, 384, 128>}, {pipeline_mode = #tpu.pipeline_mode<synchronous>, transform_indices = @transform_2, window_bounds = array<i64: 3, 384, 128>}, {pipeline_mode = #tpu.pipeline_mode<synchronous>, transform_indices = @transform_3, window_bounds = array<i64: 1, 128>}, {pipeline_mode = #tpu.pipeline_mode<synchronous>, transform_indices = @transform_4, window_bounds = array<i64: 1, 128>}, {pipeline_mode = #tpu.pipeline_mode<synchronous>, transform_indices = @transform_5, window_bounds = array<i64: 1, 128>}, {pipeline_mode = #tpu.pipeline_mode<synchronous>, transform_indices = @transform_6, window_bounds = array<i64: 1, 128>}, {transform_indices = @transform_7, window_bounds = array<i64: 8, 8, 128>}]} {
    %c0 = arith.constant 0 : index
    %c0_0 = arith.constant 0 : index
    %c0_1 = arith.constant 0 : index
    %0 = vector.load %arg1[%c0, %c0_0, %c0_1] : memref<8x8x128xbf16, #tpu.memory_space<vmem>>, vector<8x8x128xbf16>
    %cst = arith.constant 0.000000e+00 : bf16
    %1 = vector.broadcast %cst : bf16 to vector<8x1x128xbf16>
    %2 = vector.extract_strided_slice %0 {offsets = [0, 0, 0], sizes = [8, 7, 128], strides = [1, 1, 1]} : vector<8x8x128xbf16> to vector<8x7x128xbf16>
    %3 = tpu.concatenate %1, %2 in 1 : vector<8x1x128xbf16>, vector<8x7x128xbf16> -> vector<8x8x128xbf16>
    %cst_2 = arith.constant 0.000000e+00 : bf16
    %4 = vector.broadcast %cst_2 : bf16 to vector<8x1x128xbf16>
    %5 = vector.extract_strided_slice %0 {offsets = [0, 1, 0], sizes = [8, 7, 128], strides = [1, 1, 1]} : vector<8x8x128xbf16> to vector<8x7x128xbf16>
    %6 = tpu.concatenate %5, %4 in 1 : vector<8x7x128xbf16>, vector<8x1x128xbf16> -> vector<8x8x128xbf16>
    %7 = tpu.concatenate %3, %0, %6 in 2 : vector<8x8x128xbf16>, vector<8x8x128xbf16>, vector<8x8x128xbf16> -> vector<8x8x384xbf16>
    %cst_3 = arith.constant 0.000000e+00 : bf16
    %8 = vector.broadcast %cst_3 : bf16 to vector<1x8x384xbf16>
    %cst_4 = arith.constant 0.000000e+00 : f32
    %9 = vector.broadcast %cst_4 : f32 to vector<64x128xf32>
    %10 = vector.extract_strided_slice %7 {offsets = [0, 0, 0], sizes = [7, 8, 384], strides = [1, 1, 1]} : vector<8x8x384xbf16> to vector<7x8x384xbf16>
    %11 = tpu.concatenate %8, %10 in 0 : vector<1x8x384xbf16>, vector<7x8x384xbf16> -> vector<8x8x384xbf16>
    %12 = vector.shape_cast %11 : vector<8x8x384xbf16> to vector<64x384xbf16>
    %c0_5 = arith.constant 0 : index
    %c0_6 = arith.constant 0 : index
    %c0_7 = arith.constant 0 : index
    %13 = vector.load %arg2[%c0_5, %c0_6, %c0_7] : memref<3x384x128xbf16, #tpu.memory_space<vmem>>, vector<1x384x128xbf16>
    %14 = vector.shape_cast %13 : vector<1x384x128xbf16> to vector<384x128xbf16>
    %cst_8 = arith.constant dense<0.000000e+00> : vector<64x128xf32>
    %15 = tpu.matmul %12, %14, %cst_8 {dimension_numbers = #tpu.dot_dimension_numbers<[1], [0], [0], [1], [0, 0, 1, 1], [], []>} : vector<64x384xbf16>, vector<384x128xbf16>, vector<64x128xf32> -> vector<64x128xf32>
    %16 = arith.addf %9, %15 : vector<64x128xf32>
    %17 = vector.shape_cast %7 : vector<8x8x384xbf16> to vector<64x384xbf16>
    %c1 = arith.constant 1 : index
    %c0_9 = arith.constant 0 : index
    %c0_10 = arith.constant 0 : index
    %18 = vector.load %arg2[%c1, %c0_9, %c0_10] : memref<3x384x128xbf16, #tpu.memory_space<vmem>>, vector<1x384x128xbf16>
    %19 = vector.shape_cast %18 : vector<1x384x128xbf16> to vector<384x128xbf16>
    %cst_11 = arith.constant dense<0.000000e+00> : vector<64x128xf32>
    %20 = tpu.matmul %17, %19, %cst_11 {dimension_numbers = #tpu.dot_dimension_numbers<[1], [0], [0], [1], [0, 0, 1, 1], [], []>} : vector<64x384xbf16>, vector<384x128xbf16>, vector<64x128xf32> -> vector<64x128xf32>
    %21 = arith.addf %16, %20 : vector<64x128xf32>
    %22 = vector.extract_strided_slice %7 {offsets = [1, 0, 0], sizes = [7, 8, 384], strides = [1, 1, 1]} : vector<8x8x384xbf16> to vector<7x8x384xbf16>
    %23 = tpu.concatenate %22, %8 in 0 : vector<7x8x384xbf16>, vector<1x8x384xbf16> -> vector<8x8x384xbf16>
    %24 = vector.shape_cast %23 : vector<8x8x384xbf16> to vector<64x384xbf16>
    %c2 = arith.constant 2 : index
    %c0_12 = arith.constant 0 : index
    %c0_13 = arith.constant 0 : index
    %25 = vector.load %arg2[%c2, %c0_12, %c0_13] : memref<3x384x128xbf16, #tpu.memory_space<vmem>>, vector<1x384x128xbf16>
    %26 = vector.shape_cast %25 : vector<1x384x128xbf16> to vector<384x128xbf16>
    %cst_14 = arith.constant dense<0.000000e+00> : vector<64x128xf32>
    %27 = tpu.matmul %24, %26, %cst_14 {dimension_numbers = #tpu.dot_dimension_numbers<[1], [0], [0], [1], [0, 0, 1, 1], [], []>} : vector<64x384xbf16>, vector<384x128xbf16>, vector<64x128xf32> -> vector<64x128xf32>
    %28 = arith.addf %21, %27 : vector<64x128xf32>
    %c0_15 = arith.constant 0 : index
    %c0_16 = arith.constant 0 : index
    %29 = vector.load %arg4[%c0_15, %c0_16] : memref<1x128xf32, #tpu.memory_space<vmem>>, vector<1x128xf32>
    %30 = vector.broadcast %29 : vector<1x128xf32> to vector<64x128xf32>
    %31 = arith.mulf %28, %30 : vector<64x128xf32>
    %c0_17 = arith.constant 0 : index
    %c0_18 = arith.constant 0 : index
    %32 = vector.load %arg5[%c0_17, %c0_18] : memref<1x128xf32, #tpu.memory_space<vmem>>, vector<1x128xf32>
    %33 = vector.broadcast %32 : vector<1x128xf32> to vector<64x128xf32>
    %34 = arith.addf %31, %33 : vector<64x128xf32>
    %cst_19 = arith.constant 0.000000e+00 : f32
    %35 = vector.broadcast %cst_19 : f32 to vector<64x128xf32>
    %36 = arith.maximumf %34, %35 : vector<64x128xf32>
    %37 = vector.shape_cast %36 : vector<64x128xf32> to vector<8x8x128xf32>
    %38 = arith.truncf %37 : vector<8x8x128xf32> to vector<8x8x128xbf16>
    %cst_20 = arith.constant 0.000000e+00 : bf16
    %39 = vector.broadcast %cst_20 : bf16 to vector<8x1x128xbf16>
    %40 = vector.extract_strided_slice %38 {offsets = [0, 0, 0], sizes = [8, 7, 128], strides = [1, 1, 1]} : vector<8x8x128xbf16> to vector<8x7x128xbf16>
    %41 = tpu.concatenate %39, %40 in 1 : vector<8x1x128xbf16>, vector<8x7x128xbf16> -> vector<8x8x128xbf16>
    %cst_21 = arith.constant 0.000000e+00 : bf16
    %42 = vector.broadcast %cst_21 : bf16 to vector<8x1x128xbf16>
    %43 = vector.extract_strided_slice %38 {offsets = [0, 1, 0], sizes = [8, 7, 128], strides = [1, 1, 1]} : vector<8x8x128xbf16> to vector<8x7x128xbf16>
    %44 = tpu.concatenate %43, %42 in 1 : vector<8x7x128xbf16>, vector<8x1x128xbf16> -> vector<8x8x128xbf16>
    %45 = tpu.concatenate %41, %38, %44 in 2 : vector<8x8x128xbf16>, vector<8x8x128xbf16>, vector<8x8x128xbf16> -> vector<8x8x384xbf16>
    %cst_22 = arith.constant 0.000000e+00 : bf16
    %46 = vector.broadcast %cst_22 : bf16 to vector<1x8x384xbf16>
    %cst_23 = arith.constant 0.000000e+00 : f32
    %47 = vector.broadcast %cst_23 : f32 to vector<64x128xf32>
    %48 = vector.extract_strided_slice %45 {offsets = [0, 0, 0], sizes = [7, 8, 384], strides = [1, 1, 1]} : vector<8x8x384xbf16> to vector<7x8x384xbf16>
    %49 = tpu.concatenate %46, %48 in 0 : vector<1x8x384xbf16>, vector<7x8x384xbf16> -> vector<8x8x384xbf16>
    %50 = vector.shape_cast %49 : vector<8x8x384xbf16> to vector<64x384xbf16>
    %c0_24 = arith.constant 0 : index
    %c0_25 = arith.constant 0 : index
    %c0_26 = arith.constant 0 : index
    %51 = vector.load %arg3[%c0_24, %c0_25, %c0_26] : memref<3x384x128xbf16, #tpu.memory_space<vmem>>, vector<1x384x128xbf16>
    %52 = vector.shape_cast %51 : vector<1x384x128xbf16> to vector<384x128xbf16>
    %cst_27 = arith.constant dense<0.000000e+00> : vector<64x128xf32>
    %53 = tpu.matmul %50, %52, %cst_27 {dimension_numbers = #tpu.dot_dimension_numbers<[1], [0], [0], [1], [0, 0, 1, 1], [], []>} : vector<64x384xbf16>, vector<384x128xbf16>, vector<64x128xf32> -> vector<64x128xf32>
    %54 = arith.addf %47, %53 : vector<64x128xf32>
    %55 = vector.shape_cast %45 : vector<8x8x384xbf16> to vector<64x384xbf16>
    %c1_28 = arith.constant 1 : index
    %c0_29 = arith.constant 0 : index
    %c0_30 = arith.constant 0 : index
    %56 = vector.load %arg3[%c1_28, %c0_29, %c0_30] : memref<3x384x128xbf16, #tpu.memory_space<vmem>>, vector<1x384x128xbf16>
    %57 = vector.shape_cast %56 : vector<1x384x128xbf16> to vector<384x128xbf16>
    %cst_31 = arith.constant dense<0.000000e+00> : vector<64x128xf32>
    %58 = tpu.matmul %55, %57, %cst_31 {dimension_numbers = #tpu.dot_dimension_numbers<[1], [0], [0], [1], [0, 0, 1, 1], [], []>} : vector<64x384xbf16>, vector<384x128xbf16>, vector<64x128xf32> -> vector<64x128xf32>
    %59 = arith.addf %54, %58 : vector<64x128xf32>
    %60 = vector.extract_strided_slice %45 {offsets = [1, 0, 0], sizes = [7, 8, 384], strides = [1, 1, 1]} : vector<8x8x384xbf16> to vector<7x8x384xbf16>
    %61 = tpu.concatenate %60, %46 in 0 : vector<7x8x384xbf16>, vector<1x8x384xbf16> -> vector<8x8x384xbf16>
    %62 = vector.shape_cast %61 : vector<8x8x384xbf16> to vector<64x384xbf16>
    %c2_32 = arith.constant 2 : index
    %c0_33 = arith.constant 0 : index
    %c0_34 = arith.constant 0 : index
    %63 = vector.load %arg3[%c2_32, %c0_33, %c0_34] : memref<3x384x128xbf16, #tpu.memory_space<vmem>>, vector<1x384x128xbf16>
    %64 = vector.shape_cast %63 : vector<1x384x128xbf16> to vector<384x128xbf16>
    %cst_35 = arith.constant dense<0.000000e+00> : vector<64x128xf32>
    %65 = tpu.matmul %62, %64, %cst_35 {dimension_numbers = #tpu.dot_dimension_numbers<[1], [0], [0], [1], [0, 0, 1, 1], [], []>} : vector<64x384xbf16>, vector<384x128xbf16>, vector<64x128xf32> -> vector<64x128xf32>
    %66 = arith.addf %59, %65 : vector<64x128xf32>
    %c0_36 = arith.constant 0 : index
    %c0_37 = arith.constant 0 : index
    %67 = vector.load %arg6[%c0_36, %c0_37] : memref<1x128xf32, #tpu.memory_space<vmem>>, vector<1x128xf32>
    %68 = vector.broadcast %67 : vector<1x128xf32> to vector<64x128xf32>
    %69 = arith.mulf %66, %68 : vector<64x128xf32>
    %c0_38 = arith.constant 0 : index
    %c0_39 = arith.constant 0 : index
    %70 = vector.load %arg7[%c0_38, %c0_39] : memref<1x128xf32, #tpu.memory_space<vmem>>, vector<1x128xf32>
    %71 = vector.broadcast %70 : vector<1x128xf32> to vector<64x128xf32>
    %72 = arith.addf %69, %71 : vector<64x128xf32>
    %73 = vector.shape_cast %0 : vector<8x8x128xbf16> to vector<64x128xbf16>
    %74 = arith.extf %73 : vector<64x128xbf16> to vector<64x128xf32>
    %75 = arith.addf %72, %74 : vector<64x128xf32>
    %cst_40 = arith.constant 0.000000e+00 : f32
    %76 = vector.broadcast %cst_40 : f32 to vector<64x128xf32>
    %77 = arith.maximumf %75, %76 : vector<64x128xf32>
    %78 = vector.shape_cast %77 : vector<64x128xf32> to vector<8x8x128xf32>
    %c0_41 = arith.constant 0 : index
    %c0_42 = arith.constant 0 : index
    %c0_43 = arith.constant 0 : index
    %79 = vector.load %arg8[%c0_41, %c0_42, %c0_43] : memref<8x8x128xf32, #tpu.memory_space<vmem>>, vector<8x8x128xf32>
    tpu.vector_store %arg8[%c0_41, %c0_42, %c0_43], %78 {strides = array<i32>} : memref<8x8x128xf32, #tpu.memory_space<vmem>>, vector<8x8x128xf32>,
    return
  }
  func.func @transform_0(%arg0: i32) -> (i32, i32, i32) {
    %c0_i32 = arith.constant 0 : i32
    %c0_i32_0 = arith.constant 0 : i32
    %c0_i32_1 = arith.constant 0 : i32
    return %arg0, %c0_i32, %c0_i32_0 : i32, i32, i32
  }
  func.func @transform_1(%arg0: i32) -> (i32, i32, i32) {
    %c0_i32 = arith.constant 0 : i32
    %c0_i32_0 = arith.constant 0 : i32
    %c0_i32_1 = arith.constant 0 : i32
    %c0_i32_2 = arith.constant 0 : i32
    return %c0_i32, %c0_i32_0, %c0_i32_1 : i32, i32, i32
  }
  func.func @transform_2(%arg0: i32) -> (i32, i32, i32) {
    %c0_i32 = arith.constant 0 : i32
    %c0_i32_0 = arith.constant 0 : i32
    %c0_i32_1 = arith.constant 0 : i32
    %c0_i32_2 = arith.constant 0 : i32
    return %c0_i32, %c0_i32_0, %c0_i32_1 : i32, i32, i32
  }
  func.func @transform_3(%arg0: i32) -> (i32, i32) {
    %c0_i32 = arith.constant 0 : i32
    %c0_i32_0 = arith.constant 0 : i32
    %c0_i32_1 = arith.constant 0 : i32
    return %c0_i32, %c0_i32_0 : i32, i32
  }
  func.func @transform_4(%arg0: i32) -> (i32, i32) {
    %c0_i32 = arith.constant 0 : i32
    %c0_i32_0 = arith.constant 0 : i32
    %c0_i32_1 = arith.constant 0 : i32
    return %c0_i32, %c0_i32_0 : i32, i32
  }
  func.func @transform_5(%arg0: i32) -> (i32, i32) {
    %c0_i32 = arith.constant 0 : i32
    %c0_i32_0 = arith.constant 0 : i32
    %c0_i32_1 = arith.constant 0 : i32
    return %c0_i32, %c0_i32_0 : i32, i32
  }
  func.func @transform_6(%arg0: i32) -> (i32, i32) {
    %c0_i32 = arith.constant 0 : i32
    %c0_i32_0 = arith.constant 0 : i32
    %c0_i32_1 = arith.constant 0 : i32
    return %c0_i32, %c0_i32_0 : i32, i32
  }
  func.func @transform_7(%arg0: i32) -> (i32, i32, i32) {
    %c0_i32 = arith.constant 0 : i32
    %c0_i32_0 = arith.constant 0 : i32
    %c0_i32_1 = arith.constant 0 : i32
    return %arg0, %c0_i32, %c0_i32_0 : i32, i32, i32
  }
}

</mosaic_0001>

<llo_original>
// kernel: model_forward.2
$region0: #{model_forward.2}
  #allocation0 [shape = 'u32[]', space=smem, size = 0x4, offset = 0x4, fixed_abs, tag = 'smem constant byte address 0x4 - core index']
  #allocation1 [shape = 'u32[144,128]{1,0:T(1,128)}', space=vmem, size = 0x12000, scoped, tag = 'internal scratch']
  %s0 = inlined_call_operand.vmem [shape: bf16[72,9,64], index: 0, kind: input, shape index: {}]
  %s1 = inlined_call_operand.vmem [shape: bf16[3,192,128], index: 1, kind: input, shape index: {}]
  %s2 = inlined_call_operand.vmem [shape: bf16[3,384,128], index: 2, kind: input, shape index: {}]
  %s3 = inlined_call_operand.vmem [shape: f32[1,128], index: 3, kind: input, shape index: {}]
  %s4 = inlined_call_operand.vmem [shape: f32[1,128], index: 4, kind: input, shape index: {}]
  %s5 = inlined_call_operand.vmem [shape: f32[1,128], index: 5, kind: input, shape index: {}]
  %s6 = inlined_call_operand.vmem [shape: f32[1,128], index: 6, kind: input, shape index: {}]
  %s7 = inlined_call_operand.vmem [shape: bf16[64,128], index: 7, kind: input, shape index: {}]
  %s8 = inlined_call_operand.vmem [shape: f32[1,128], index: 8, kind: input, shape index: {}]
  %s9 = inlined_call_operand.vmem [shape: f32[1,128], index: 9, kind: input, shape index: {}]
  %s10 = inlined_call_operand.vmem [shape: bf16[16,8,128], index: 10, kind: output, shape index: {}]
  %s11 = sld [smem:[#allocation0]]
  $region73: #{model_forward.2} parent=0
    _
  %s13 = ssub.s32 1, %s11
  %s14 = scalar_select 0, %s13, %s11
  loop: start=0, step=1, limit=4
  $region2: #{model_forward.2} parent=0 // loop_pre_header
    _
  $region3: #{model_forward.2} parent=0 // loop_header
    %s16 = sphi 0, %s20
    %p17 = scmp.ge.s32.totalorder %s16, 4
    %s26 = sphi 0, %s28
    %s29 = sphi 0, %s26
    %s30 = sphi 0, %s29
    %s46 = sphi 0, %s30
    %s50 = sphi 0, %s50
    %s52 = sphi 0, %s50
    %s53 = sphi 0, %s52
    %s67 = sphi 0, %s53
    %s71 = sphi 0, %s71
    %s73 = sphi 0, %s71
    %s74 = sphi 0, %s73
    %s88 = sphi 0, %s74
    %s92 = sphi 0, %s92
    %s94 = sphi 0, %s92
    %s95 = sphi 0, %s94
    %s109 = sphi 0, %s95
    %s113 = sphi 0, %s113
    %s115 = sphi 0, %s113
    %s116 = sphi 0, %s115
    %s130 = sphi 0, %s116
    %s134 = sphi 0, %s134
    %s136 = sphi 0, %s134
    %s137 = sphi 0, %s136
    %s151 = sphi 0, %s137
    %s155 = sphi 0, %s155
    %s157 = sphi 0, %s155
    %s158 = sphi 0, %s157
    %s172 = sphi 0, %s158
    %s176 = sphi 0, %s176
    %s178 = sphi 0, %s176
    %s179 = sphi 0, %s178
    %s193 = sphi 0, %s179
    %s197 = sphi 0, %s197
    %s199 = sphi 0, %s197
    %s200 = sphi 0, %s199
    %s214 = sphi 0, %s200
    %s218 = sphi 0, %s218
    %s220 = sphi 0, %s218
    %s221 = sphi 0, %s220
    %s235 = sphi 0, %s221
    %s241 = sphi 0, %s243
    %s244 = sphi 0, %s241
    %s245 = sphi 0, %s244
    %s261 = sphi 0, %s245
  $region4: #{model_forward.2} parent=0 // loop_header_branch
    %19 = sbr.rel (%p17) target = $region8
  $region5: #{model_forward.2} parent=0 // loop_body
    %s21 = ssub.s32 %s16, 1
    %s22 = ssub.s32 %s16, 2
    %s23 = sadd.s32 %s16, 1
    %s24 = ssub.s32 %s16, %s23
    %p25 = scmp.eq.s32.totalorder %s24, 0
    %s27 = sadd.s32 %s26, 1
    %s28 = scalar_select %p25, %s26, %s27
    %p31 = pneg %p25
    %p32 = scmp.eq.s32.totalorder %s16, 1
    %p33 = por %p31, %p32
    %p34 = scmp.ne.s32.totalorder %s26, %s29
    %p35 = scmp.eq.s32.totalorder %s16, 0
    %p36 = por %p34, %p35
    %p37 = scmp.ne.s32.totalorder %s26, %s29
    %p38 = scmp.eq.s32.totalorder %s21, 1
    %p39 = por %p37, %p38
    %p40 = scmp.ne.s32.totalorder %s29, %s30
    %p41 = scmp.eq.s32.totalorder %s21, 0
    %p42 = por %p40, %p41
    %p43 = scmp.ne.s32.totalorder %s29, %s30
    %p44 = scmp.eq.s32.totalorder %s22, 1
    %p45 = por %p43, %p44
    %p47 = scmp.ne.s32.totalorder %s30, %s46
    %p48 = scmp.eq.s32.totalorder %s22, 0
    %p49 = por %p47, %p48
    %s51 = sadd.s32 %s50, 1
    %p54 = scmp.eq.s32.totalorder %s16, 1
    %p55 = scmp.ne.s32.totalorder %s50, %s52
    %p56 = scmp.eq.s32.totalorder %s16, 0
    %p57 = por %p55, %p56
    %p58 = scmp.ne.s32.totalorder %s50, %s52
    %p59 = scmp.eq.s32.totalorder %s21, 1
    %p60 = por %p58, %p59
    %p61 = scmp.ne.s32.totalorder %s52, %s53
    %p62 = scmp.eq.s32.totalorder %s21, 0
    %p63 = por %p61, %p62
    %p64 = scmp.ne.s32.totalorder %s52, %s53
    %p65 = scmp.eq.s32.totalorder %s22, 1
    %p66 = por %p64, %p65
    %p68 = scmp.ne.s32.totalorder %s53, %s67
    %p69 = scmp.eq.s32.totalorder %s22, 0
    %p70 = por %p68, %p69
    %s72 = sadd.s32 %s71, 1
    %p75 = scmp.eq.s32.totalorder %s16, 1
    %p76 = scmp.ne.s32.totalorder %s71, %s73
    %p77 = scmp.eq.s32.totalorder %s16, 0
    %p78 = por %p76, %p77
    %p79 = scmp.ne.s32.totalorder %s71, %s73
    %p80 = scmp.eq.s32.totalorder %s21, 1
    %p81 = por %p79, %p80
    %p82 = scmp.ne.s32.totalorder %s73, %s74
    %p83 = scmp.eq.s32.totalorder %s21, 0
    %p84 = por %p82, %p83
    %p85 = scmp.ne.s32.totalorder %s73, %s74
    %p86 = scmp.eq.s32.totalorder %s22, 1
    %p87 = por %p85, %p86
    %p89 = scmp.ne.s32.totalorder %s74, %s88
    %p90 = scmp.eq.s32.totalorder %s22, 0
    %p91 = por %p89, %p90
    %s93 = sadd.s32 %s92, 1
    %p96 = scmp.eq.s32.totalorder %s16, 1
    %p97 = scmp.ne.s32.totalorder %s92, %s94
    %p98 = scmp.eq.s32.totalorder %s16, 0
    %p99 = por %p97, %p98
    %p100 = scmp.ne.s32.totalorder %s92, %s94
    %p101 = scmp.eq.s32.totalorder %s21, 1
    %p102 = por %p100, %p101
    %p103 = scmp.ne.s32.totalorder %s94, %s95
    %p104 = scmp.eq.s32.totalorder %s21, 0
    %p105 = por %p103, %p104
    %p106 = scmp.ne.s32.totalorder %s94, %s95
    %p107 = scmp.eq.s32.totalorder %s22, 1
    %p108 = por %p106, %p107
    %p110 = scmp.ne.s32.totalorder %s95, %s109
    %p111 = scmp.eq.s32.totalorder %s22, 0
    %p112 = por %p110, %p111
    %s114 = sadd.s32 %s113, 1
    %p117 = scmp.eq.s32.totalorder %s16, 1
    %p118 = scmp.ne.s32.totalorder %s113, %s115
    %p119 = scmp.eq.s32.totalorder %s16, 0
    %p120 = por %p118, %p119
    %p121 = scmp.ne.s32.totalorder %s113, %s115
    %p122 = scmp.eq.s32.totalorder %s21, 1
    %p123 = por %p121, %p122
    %p124 = scmp.ne.s32.totalorder %s115, %s116
    %p125 = scmp.eq.s32.totalorder %s21, 0
    %p126 = por %p124, %p125
    %p127 = scmp.ne.s32.totalorder %s115, %s116
    %p128 = scmp.eq.s32.totalorder %s22, 1
    %p129 = por %p127, %p128
    %p131 = scmp.ne.s32.totalorder %s116, %s130
    %p132 = scmp.eq.s32.totalorder %s22, 0
    %p133 = por %p131, %p132
    %s135 = sadd.s32 %s134, 1
    %p138 = scmp.eq.s32.totalorder %s16, 1
    %p139 = scmp.ne.s32.totalorder %s134, %s136
    %p140 = scmp.eq.s32.totalorder %s16, 0
    %p141 = por %p139, %p140
    %p142 = scmp.ne.s32.totalorder %s134, %s136
    %p143 = scmp.eq.s32.totalorder %s21, 1
    %p144 = por %p142, %p143
    %p145 = scmp.ne.s32.totalorder %s136, %s137
    %p146 = scmp.eq.s32.totalorder %s21, 0
    %p147 = por %p145, %p146
    %p148 = scmp.ne.s32.totalorder %s136, %s137
    %p149 = scmp.eq.s32.totalorder %s22, 1
    %p150 = por %p148, %p149
    %p152 = scmp.ne.s32.totalorder %s137, %s151
    %p153 = scmp.eq.s32.totalorder %s22, 0
    %p154 = por %p152, %p153
    %s156 = sadd.s32 %s155, 1
    %p159 = scmp.eq.s32.totalorder %s16, 1
    %p160 = scmp.ne.s32.totalorder %s155, %s157
    %p161 = scmp.eq.s32.totalorder %s16, 0
    %p162 = por %p160, %p161
    %p163 = scmp.ne.s32.totalorder %s155, %s157
    %p164 = scmp.eq.s32.totalorder %s21, 1
    %p165 = por %p163, %p164
    %p166 = scmp.ne.s32.totalorder %s157, %s158
    %p167 = scmp.eq.s32.totalorder %s21, 0
    %p168 = por %p166, %p167
    %p169 = scmp.ne.s32.totalorder %s157, %s158
    %p170 = scmp.eq.s32.totalorder %s22, 1
    %p171 = por %p169, %p170
    %p173 = scmp.ne.s32.totalorder %s158, %s172
    %p174 = scmp.eq.s32.totalorder %s22, 0
    %p175 = por %p173, %p174
    %s177 = sadd.s32 %s176, 1
    %p180 = scmp.eq.s32.totalorder %s16, 1
    %p181 = scmp.ne.s32.totalorder %s176, %s178
    %p182 = scmp.eq.s32.totalorder %s16, 0
    %p183 = por %p181, %p182
    %p184 = scmp.ne.s32.totalorder %s176, %s178
    %p185 = scmp.eq.s32.totalorder %s21, 1
    %p186 = por %p184, %p185
    %p187 = scmp.ne.s32.totalorder %s178, %s179
    %p188 = scmp.eq.s32.totalorder %s21, 0
    %p189 = por %p187, %p188
    %p190 = scmp.ne.s32.totalorder %s178, %s179
    %p191 = scmp.eq.s32.totalorder %s22, 1
    %p192 = por %p190, %p191
    %p194 = scmp.ne.s32.totalorder %s179, %s193
    %p195 = scmp.eq.s32.totalorder %s22, 0
    %p196 = por %p194, %p195
    %s198 = sadd.s32 %s197, 1
    %p201 = scmp.eq.s32.totalorder %s16, 1
    %p202 = scmp.ne.s32.totalorder %s197, %s199
    %p203 = scmp.eq.s32.totalorder %s16, 0
    %p204 = por %p202, %p203
    %p205 = scmp.ne.s32.totalorder %s197, %s199
    %p206 = scmp.eq.s32.totalorder %s21, 1
    %p207 = por %p205, %p206
    %p208 = scmp.ne.s32.totalorder %s199, %s200
    %p209 = scmp.eq.s32.totalorder %s21, 0
    %p210 = por %p208, %p209
    %p211 = scmp.ne.s32.totalorder %s199, %s200
    %p212 = scmp.eq.s32.totalorder %s22, 1
    %p213 = por %p211, %p212
    %p215 = scmp.ne.s32.totalorder %s200, %s214
    %p216 = scmp.eq.s32.totalorder %s22, 0
    %p217 = por %p215, %p216
    %s219 = sadd.s32 %s218, 1
    %p222 = scmp.eq.s32.totalorder %s16, 1
    %p223 = scmp.ne.s32.totalorder %s218, %s220
    %p224 = scmp.eq.s32.totalorder %s16, 0
    %p225 = por %p223, %p224
    %p226 = scmp.ne.s32.totalorder %s218, %s220
    %p227 = scmp.eq.s32.totalorder %s21, 1
    %p228 = por %p226, %p227
    %p229 = scmp.ne.s32.totalorder %s220, %s221
    %p230 = scmp.eq.s32.totalorder %s21, 0
    %p231 = por %p229, %p230
    %p232 = scmp.ne.s32.totalorder %s220, %s221
    %p233 = scmp.eq.s32.totalorder %s22, 1
    %p234 = por %p232, %p233
    %p236 = scmp.ne.s32.totalorder %s221, %s235
    %p237 = scmp.eq.s32.totalorder %s22, 0
    %p238 = por %p236, %p237
    %s239 = ssub.s32 %s16, %s23
    %p240 = scmp.eq.s32.totalorder %s239, 0
    %s242 = sadd.s32 %s241, 1
    %s243 = scalar_select %p240, %s241, %s242
    %p246 = pneg %p240
    %p247 = scmp.eq.s32.totalorder %s16, 1
    %p248 = por %p246, %p247
    %p249 = scmp.ne.s32.totalorder %s241, %s244
    %p250 = scmp.eq.s32.totalorder %s16, 0
    %p251 = por %p249, %p250
    %p252 = scmp.ne.s32.totalorder %s241, %s244
    %p253 = scmp.eq.s32.totalorder %s21, 1
    %p254 = por %p252, %p253
    %p255 = scmp.ne.s32.totalorder %s244, %s245
    %p256 = scmp.eq.s32.totalorder %s21, 0
    %p257 = por %p255, %p256
    %p258 = scmp.ne.s32.totalorder %s244, %s245
    %p259 = scmp.eq.s32.totalorder %s22, 1
    %p260 = por %p258, %p259
    %p262 = scmp.ne.s32.totalorder %s245, %s261
    %p263 = scmp.eq.s32.totalorder %s22, 0
    %p264 = por %p262, %p263
    %p265 = scmp.le.s32.totalorder 1, %s16
    %p266 = scmp.lt.s32.totalorder %s16, 3
    %p267 = pnand %p265, %p266
    %p268 = pneg %p267
    // Predicated region
    $region9: #{model_forward.2} parent=5 // pred_check
      _
    $region10: #{model_forward.2} parent=5 // pred_check_branch
      %270 = sbr.rel (%p267) target = $region12
    $region11: #{model_forward.2} parent=5 // pred_region
      %s271 = ssub.s32 %s16, 1
      // Predicated region
      $region13: #{model_forward.2} parent=11 // pred_check
        %p272 = pneg %p63
      $region14: #{model_forward.2} parent=11 // pred_check_branch
        %274 = sbr.rel (%p272) target = $region16
      $region15: #{model_forward.2} parent=11 // pred_region
        _
      $region16: #{model_forward.2} parent=11 // pred_fallthru
        _
      // Predicated region
      $region17: #{model_forward.2} parent=11 // pred_check
        %p275 = pneg %p84
      $region18: #{model_forward.2} parent=11 // pred_check_branch
        %277 = sbr.rel (%p275) target = $region20
      $region19: #{model_forward.2} parent=11 // pred_region
        _
      $region20: #{model_forward.2} parent=11 // pred_fallthru
        _
      // Predicated region
      $region21: #{model_forward.2} parent=11 // pred_check
        %p278 = pneg %p105
      $region22: #{model_forward.2} parent=11 // pred_check_branch
        %280 = sbr.rel (%p278) target = $region24
      $region23: #{model_forward.2} parent=11 // pred_region
        _
      $region24: #{model_forward.2} parent=11 // pred_fallthru
        _
      // Predicated region
      $region25: #{model_forward.2} parent=11 // pred_check
        %p281 = pneg %p126
      $region26: #{model_forward.2} parent=11 // pred_check_branch
        %283 = sbr.rel (%p281) target = $region28
      $region27: #{model_forward.2} parent=11 // pred_region
        _
      $region28: #{model_forward.2} parent=11 // pred_fallthru
        _
      // Predicated region
      $region29: #{model_forward.2} parent=11 // pred_check
        %p284 = pneg %p147
      $region30: #{model_forward.2} parent=11 // pred_check_branch
        %286 = sbr.rel (%p284) target = $region32
      $region31: #{model_forward.2} parent=11 // pred_region
        _
      $region32: #{model_forward.2} parent=11 // pred_fallthru
        _
      // Predicated region
      $region33: #{model_forward.2} parent=11 // pred_check
        %p287 = pneg %p168
      $region34: #{model_forward.2} parent=11 // pred_check_branch
        %289 = sbr.rel (%p287) target = $region36
      $region35: #{model_forward.2} parent=11 // pred_region
        _
      $region36: #{model_forward.2} parent=11 // pred_fallthru
        _
      // Predicated region
      $region37: #{model_forward.2} parent=11 // pred_check
        %p290 = pneg %p189
      $region38: #{model_forward.2} parent=11 // pred_check_branch
        %292 = sbr.rel (%p290) target = $region40
      $region39: #{model_forward.2} parent=11 // pred_region
        _
      $region40: #{model_forward.2} parent=11 // pred_fallthru
        _
      // Predicated region
      $region41: #{model_forward.2} parent=11 // pred_check
        %p293 = pneg %p210
      $region42: #{model_forward.2} parent=11 // pred_check_branch
        %295 = sbr.rel (%p293) target = $region44
      $region43: #{model_forward.2} parent=11 // pred_region
        _
      $region44: #{model_forward.2} parent=11 // pred_fallthru
        _
      // Predicated region
      $region45: #{model_forward.2} parent=11 // pred_check
        %p296 = pneg %p231
      $region46: #{model_forward.2} parent=11 // pred_check_branch
        %298 = sbr.rel (%p296) target = $region48
      $region47: #{model_forward.2} parent=11 // pred_region
        _
      $region48: #{model_forward.2} parent=11 // pred_fallthru
        _
    $region12: #{model_forward.2} parent=5 // pred_fallthru
      _
    %p299 = scmp.lt.s32.totalorder %s16, 2
    // Predicated region
    $region49: #{model_forward.2} parent=5 // pred_check
      %p300 = pneg %p299
    $region50: #{model_forward.2} parent=5 // pred_check_branch
      %302 = sbr.rel (%p300) target = $region52
    $region51: #{model_forward.2} parent=5 // pred_region
      // Predicated region
      $region53: #{model_forward.2} parent=51 // pred_check
        %p303 = pneg %p36
      $region54: #{model_forward.2} parent=51 // pred_check_branch
        %305 = sbr.rel (%p303) target = $region56
      $region55: #{model_forward.2} parent=51 // pred_region
        %s306 = smul.u32 36, %s16
        %p307 = scmp.lt.s32.totalorder %s306, 71
        %s308 = scalar_select %p307, %s306, 71
        %s309 = smul.addr %s308, 2
        %s310 = smul.addr %s309, 4
        %s311 = scalar_lea.vmem %s0, %s310
        %s312 = smul.u32 36, %s16
      $region56: #{model_forward.2} parent=51 // pred_fallthru
        _
    $region52: #{model_forward.2} parent=5 // pred_fallthru
      _
    %p313 = scmp.le.s32.totalorder 1, %s16
    %p314 = scmp.lt.s32.totalorder %s16, 3
    %p315 = pnand %p313, %p314
    %p316 = pneg %p315
    // Predicated region
    $region57: #{model_forward.2} parent=5 // pred_check
      _
    $region58: #{model_forward.2} parent=5 // pred_check_branch
      %318 = sbr.rel (%p315) target = $region60
    $region59: #{model_forward.2} parent=5 // pred_region
      %s319 = ssub.s32 %s16, 1
      %s320 = smul.u32 36, %s21
      %p321 = scmp.lt.s32.totalorder %s320, 71
      %s322 = scalar_select %p321, %s320, 71
      %s323 = smul.addr %s322, 2
      %s324 = smul.addr %s323, 4
      %s325 = scalar_lea.vmem %s0, %s324
      %p326 = pneg %p42
      %p327 = pneg %p39
      %p328 = pneg %p63
      %p329 = pneg %p60
      %p330 = pneg %p84
      %p331 = pneg %p81
      %p332 = pneg %p105
      %p333 = pneg %p102
      %p334 = pneg %p126
      %p335 = pneg %p123
      %p336 = pneg %p147
      %p337 = pneg %p144
      %p338 = pneg %p168
      %p339 = pneg %p165
      %p340 = pneg %p189
      %p341 = pneg %p186
      %p342 = pneg %p210
      %p343 = pneg %p207
      %p344 = pneg %p231
      %p345 = pneg %p228
      %p346 = pneg %p257
      %p347 = pneg %p254
      %s348 = smul.u32 8, %s21
      %p349 = scmp.lt.s32.totalorder %s348, 15
      %s350 = scalar_select %p349, %s348, 15
      %s351 = smul.addr %s350, 4
      %s352 = scalar_lea.vmem %s10, %s351
      %s353 = smul.u32 36, %s21
      %p354 = scmp.lt.s32.totalorder %s353, 71
      %s355 = scalar_select %p354, %s353, 71
      %s356 = smul.addr %s355, 2
      %s357 = smul.addr %s356, 4
      %s358 = scalar_lea.vmem %s0, %s357
      %s359 = smul.u32 36, %s21
      %s360 = smul.u32 8, %s21
      %p361 = scmp.lt.s32.totalorder %s360, 15
      %s362 = scalar_select %p361, %s360, 15
      %s363 = smul.addr %s362, 4
      %s364 = scalar_lea.vmem %s10, %s363
      %s365 = smul.u32 8, %s21
      %v367 = vld [vmem:[%s358] sm:$0xf]
      %v368 = vld [vmem:[%s358 + $0x8] sm:$0xf]
      %v369 = vld [vmem:[%s358 + $0x10] sm:$0xf]
      %v370 = vld [vmem:[%s358 + $0x18] sm:$0xf]
      %v371 = vld [vmem:[%s358 + $0x20] sm:$0xf]
      %v372 = vld [vmem:[%s358 + $0x28] sm:$0xf]
      %v373 = vld [vmem:[%s358 + $0x30] sm:$0xf]
      %v374 = vld [vmem:[%s358 + $0x38] sm:$0xf]
      %s375 = scalar_lea.vmem %s358, 72
      %v376 = vld [vmem:[%s375] sm:$0xf]
      %v377 = vld [vmem:[%s375 + $0x8] sm:$0xf]
      %v378 = vld [vmem:[%s375 + $0x10] sm:$0xf]
      %v379 = vld [vmem:[%s375 + $0x18] sm:$0xf]
      %v380 = vld [vmem:[%s375 + $0x20] sm:$0xf]
      %v381 = vld [vmem:[%s375 + $0x28] sm:$0xf]
      %v382 = vld [vmem:[%s375 + $0x30] sm:$0xf]
      %v383 = vld [vmem:[%s375 + $0x38] sm:$0xf]
      %v384 = vld [vmem:[%s358 + $0x4] sm:$0x1]
      %v385 = vld [vmem:[%s358 + $0xc] sm:$0x1]
      %v386 = vld [vmem:[%s358 + $0x14] sm:$0x1]
      %v387 = vld [vmem:[%s358 + $0x1c] sm:$0x1]
      %v388 = vld [vmem:[%s358 + $0x24] sm:$0x1]
      %v389 = vld [vmem:[%s358 + $0x2c] sm:$0x1]
      %v390 = vld [vmem:[%s358 + $0x34] sm:$0x1]
      %v391 = vld [vmem:[%s358 + $0x3c] sm:$0x1]
      %v400 = vunpack.c.l.b16 %v376
      %v401 = vunpack.c.l.b16 %v377
      %v402 = vunpack.c.l.b16 %v378
      %v403 = vunpack.c.l.b16 %v379
      %v404 = vunpack.c.l.b16 %v380
      %v405 = vunpack.c.l.b16 %v381
      %v406 = vunpack.c.l.b16 %v382
      %v407 = vunpack.c.l.b16 %v383
      %v408 = vpack.c.b16 %v400, %v400
      %v409 = vpack.c.b16 %v401, %v401
      %v410 = vpack.c.b16 %v402, %v402
      %v411 = vpack.c.b16 %v403, %v403
      %v412 = vpack.c.b16 %v404, %v404
      %v413 = vpack.c.b16 %v405, %v405
      %v414 = vpack.c.b16 %v406, %v406
      %v415 = vpack.c.b16 %v407, %v407
      %416 = vrot.lane.b32.xlu0 %v408, 64
      %v417 = vpop.permute.xlu0 %416
      %418 = vrot.lane.b32.xlu0 %v409, 64
      %v419 = vpop.permute.xlu0 %418
      %420 = vrot.lane.b32.xlu0 %v410, 64
      %v421 = vpop.permute.xlu0 %420
      %422 = vrot.lane.b32.xlu0 %v411, 64
      %v423 = vpop.permute.xlu0 %422
      %424 = vrot.lane.b32.xlu0 %v412, 64
      %v425 = vpop.permute.xlu0 %424
      %426 = vrot.lane.b32.xlu0 %v413, 64
      %v427 = vpop.permute.xlu0 %426
      %428 = vrot.lane.b32.xlu0 %v414, 64
      %v429 = vpop.permute.xlu0 %428
      %430 = vrot.lane.b32.xlu0 %v415, 64
      %v431 = vpop.permute.xlu0 %430
      %v448 = vunpack.c.l.b16 %v367
      %v449 = vunpack.c.l.b16 %v384
      %v450 = vunpack.c.l.b16 %v368
      %v451 = vunpack.c.l.b16 %v385
      %v452 = vunpack.c.l.b16 %v369
      %v453 = vunpack.c.l.b16 %v386
      %v454 = vunpack.c.l.b16 %v370
      %v455 = vunpack.c.l.b16 %v387
      %v456 = vunpack.c.l.b16 %v371
      %v457 = vunpack.c.l.b16 %v388
      %v458 = vunpack.c.l.b16 %v372
      %v459 = vunpack.c.l.b16 %v389
      %v460 = vunpack.c.l.b16 %v373
      %v461 = vunpack.c.l.b16 %v390
      %v462 = vunpack.c.l.b16 %v374
      %v463 = vunpack.c.l.b16 %v391
      %v464 = vpack.c.b16 %v449, %v448
      %v465 = vpack.c.b16 %v451, %v450
      %v466 = vpack.c.b16 %v453, %v452
      %v467 = vpack.c.b16 %v455, %v454
      %v468 = vpack.c.b16 %v457, %v456
      %v469 = vpack.c.b16 %v459, %v458
      %v470 = vpack.c.b16 %v461, %v460
      %v471 = vpack.c.b16 %v463, %v462
      %v473 = vshrl.u32 %v464, 16
      %v475 = vshll.u32 %v464, 16
      %v477 = vrot.slane %v475, 1
      %v478 = vor.u32 %v473, %v477
      %v480 = vshrl.u32 %v465, 16
      %v482 = vshll.u32 %v465, 16
      %v484 = vrot.slane %v482, 1
      %v485 = vor.u32 %v480, %v484
      %v487 = vshrl.u32 %v466, 16
      %v489 = vshll.u32 %v466, 16
      %v491 = vrot.slane %v489, 1
      %v492 = vor.u32 %v487, %v491
      %v494 = vshrl.u32 %v467, 16
      %v496 = vshll.u32 %v467, 16
      %v498 = vrot.slane %v496, 1
      %v499 = vor.u32 %v494, %v498
      %v501 = vshrl.u32 %v468, 16
      %v503 = vshll.u32 %v468, 16
      %v505 = vrot.slane %v503, 1
      %v506 = vor.u32 %v501, %v505
      %v508 = vshrl.u32 %v469, 16
      %v510 = vshll.u32 %v469, 16
      %v512 = vrot.slane %v510, 1
      %v513 = vor.u32 %v508, %v512
      %v515 = vshrl.u32 %v470, 16
      %v517 = vshll.u32 %v470, 16
      %v519 = vrot.slane %v517, 1
      %v520 = vor.u32 %v515, %v519
      %v522 = vshrl.u32 %v471, 16
      %v524 = vshll.u32 %v471, 16
      %v526 = vrot.slane %v524, 1
      %v527 = vor.u32 %v522, %v526
      %vm528 = vcmask 523264
      %v531 = vsel %vm528, %v367, %v417
      %v534 = vsel %vm528, %v368, %v419
      %v537 = vsel %vm528, %v369, %v421
      %v540 = vsel %vm528, %v370, %v423
      %v543 = vsel %vm528, %v371, %v425
      %v546 = vsel %vm528, %v372, %v427
      %v549 = vsel %vm528, %v373, %v429
      %v552 = vsel %vm528, %v374, %v431
      %v561 = vunpack.c.l.b16 %v531
      %v562 = vunpack.c.l.b16 %v478
      %v563 = vunpack.c.l.b16 %v534
      %v564 = vunpack.c.l.b16 %v485
      %v565 = vunpack.c.l.b16 %v537
      %v566 = vunpack.c.l.b16 %v492
      %v567 = vunpack.c.l.b16 %v540
      %v568 = vunpack.c.l.b16 %v499
      %v569 = vunpack.c.l.b16 %v543
      %v570 = vunpack.c.l.b16 %v506
      %v571 = vunpack.c.l.b16 %v546
      %v572 = vunpack.c.l.b16 %v513
      %v573 = vunpack.c.l.b16 %v549
      %v574 = vunpack.c.l.b16 %v520
      %v575 = vunpack.c.l.b16 %v552
      %v576 = vunpack.c.l.b16 %v527
      %v577 = vld [vmem:[%s1] sm:$0xf]
      %v578 = vld [vmem:[%s1 + $0x4] sm:$0xf]
      %v579 = vld [vmem:[%s1 + $0x8] sm:$0xf]
      %v580 = vld [vmem:[%s1 + $0xc] sm:$0xf]
      %v581 = vld [vmem:[%s1 + $0x10] sm:$0xf]
      %v582 = vld [vmem:[%s1 + $0x14] sm:$0xf]
      %v583 = vld [vmem:[%s1 + $0x18] sm:$0xf]
      %v584 = vld [vmem:[%s1 + $0x1c] sm:$0xf]
      %v585 = vld [vmem:[%s1 + $0x20] sm:$0xf]
      %v586 = vld [vmem:[%s1 + $0x24] sm:$0xf]
      %v587 = vld [vmem:[%s1 + $0x28] sm:$0xf]
      %v588 = vld [vmem:[%s1 + $0x2c] sm:$0xf]
      %v589 = vld [vmem:[%s1 + $0x30] sm:$0xf]
      %v590 = vld [vmem:[%s1 + $0x34] sm:$0xf]
      %v591 = vld [vmem:[%s1 + $0x38] sm:$0xf]
      %v592 = vld [vmem:[%s1 + $0x3c] sm:$0xf]
      %v593 = vld [vmem:[%s1 + $0x40] sm:$0xf]
      %v594 = vld [vmem:[%s1 + $0x44] sm:$0xf]
      %v595 = vld [vmem:[%s1 + $0x48] sm:$0xf]
      %v596 = vld [vmem:[%s1 + $0x4c] sm:$0xf]
      %v597 = vld [vmem:[%s1 + $0x50] sm:$0xf]
      %v598 = vld [vmem:[%s1 + $0x54] sm:$0xf]
      %v599 = vld [vmem:[%s1 + $0x58] sm:$0xf]
      %v600 = vld [vmem:[%s1 + $0x5c] sm:$0xf]
      %s601 = scalar_lea.vmem %s358, 144
      %v602 = vld [vmem:[%s601] sm:$0xf]
      %v603 = vld [vmem:[%s601 + $0x8] sm:$0xf]
      %v604 = vld [vmem:[%s601 + $0x10] sm:$0xf]
      %v605 = vld [vmem:[%s601 + $0x18] sm:$0xf]
      %v606 = vld [vmem:[%s601 + $0x20] sm:$0xf]
      %v607 = vld [vmem:[%s601 + $0x28] sm:$0xf]
      %v608 = vld [vmem:[%s601 + $0x30] sm:$0xf]
      %v609 = vld [vmem:[%s601 + $0x38] sm:$0xf]
      %s610 = scalar_lea.vmem %s358, 216
      %v611 = vld [vmem:[%s610] sm:$0xf]
      %v612 = vld [vmem:[%s610 + $0x8] sm:$0xf]
      %v613 = vld [vmem:[%s610 + $0x10] sm:$0xf]
      %v614 = vld [vmem:[%s610 + $0x18] sm:$0xf]
      %v615 = vld [vmem:[%s610 + $0x20] sm:$0xf]
      %v616 = vld [vmem:[%s610 + $0x28] sm:$0xf]
      %v617 = vld [vmem:[%s610 + $0x30] sm:$0xf]
      %v618 = vld [vmem:[%s610 + $0x38] sm:$0xf]
      %v619 = vld [vmem:[%s601 + $0x4] sm:$0x1]
      %v620 = vld [vmem:[%s601 + $0xc] sm:$0x1]
      %v621 = vld [vmem:[%s601 + $0x14] sm:$0x1]
      %v622 = vld [vmem:[%s601 + $0x1c] sm:$0x1]
      %v623 = vld [vmem:[%s601 + $0x24] sm:$0x1]
      %v624 = vld [vmem:[%s601 + $0x2c] sm:$0x1]
      %v625 = vld [vmem:[%s601 + $0x34] sm:$0x1]
      %v626 = vld [vmem:[%s601 + $0x3c] sm:$0x1]
      %v635 = vunpack.c.l.b16 %v611
      %v636 = vunpack.c.l.b16 %v612
      %v637 = vunpack.c.l.b16 %v613
      %v638 = vunpack.c.l.b16 %v614
      %v639 = vunpack.c.l.b16 %v615
      %v640 = vunpack.c.l.b16 %v616
      %v641 = vunpack.c.l.b16 %v617
      %v642 = vunpack.c.l.b16 %v618
      %v643 = vpack.c.b16 %v635, %v635
      %v644 = vpack.c.b16 %v636, %v636
      %v645 = vpack.c.b16 %v637, %v637
      %v646 = vpack.c.b16 %v638, %v638
      %v647 = vpack.c.b16 %v639, %v639
      %v648 = vpack.c.b16 %v640, %v640
      %v649 = vpack.c.b16 %v641, %v641
      %v650 = vpack.c.b16 %v642, %v642
      %651 = vrot.lane.b32.xlu0 %v643, 64
      %v652 = vpop.permute.xlu0 %651
      %653 = vrot.lane.b32.xlu0 %v644, 64
      %v654 = vpop.permute.xlu0 %653
      %655 = vrot.lane.b32.xlu0 %v645, 64
      %v656 = vpop.permute.xlu0 %655
      %657 = vrot.lane.b32.xlu0 %v646, 64
      %v658 = vpop.permute.xlu0 %657
      %659 = vrot.lane.b32.xlu0 %v647, 64
      %v660 = vpop.permute.xlu0 %659
      %661 = vrot.lane.b32.xlu0 %v648, 64
      %v662 = vpop.permute.xlu0 %661
      %663 = vrot.lane.b32.xlu0 %v649, 64
      %v664 = vpop.permute.xlu0 %663
      %665 = vrot.lane.b32.xlu0 %v650, 64
      %v666 = vpop.permute.xlu0 %665
      %v683 = vunpack.c.l.b16 %v602
      %v684 = vunpack.c.l.b16 %v619
      %v685 = vunpack.c.l.b16 %v603
      %v686 = vunpack.c.l.b16 %v620
      %v687 = vunpack.c.l.b16 %v604
      %v688 = vunpack.c.l.b16 %v621
      %v689 = vunpack.c.l.b16 %v605
      %v690 = vunpack.c.l.b16 %v622
      %v691 = vunpack.c.l.b16 %v606
      %v692 = vunpack.c.l.b16 %v623
      %v693 = vunpack.c.l.b16 %v607
      %v694 = vunpack.c.l.b16 %v624
      %v695 = vunpack.c.l.b16 %v608
      %v696 = vunpack.c.l.b16 %v625
      %v697 = vunpack.c.l.b16 %v609
      %v698 = vunpack.c.l.b16 %v626
      %v699 = vpack.c.b16 %v684, %v683
      %v700 = vpack.c.b16 %v686, %v685
      %v701 = vpack.c.b16 %v688, %v687
      %v702 = vpack.c.b16 %v690, %v689
      %v703 = vpack.c.b16 %v692, %v691
      %v704 = vpack.c.b16 %v694, %v693
      %v705 = vpack.c.b16 %v696, %v695
      %v706 = vpack.c.b16 %v698, %v697
      %v708 = vshrl.u32 %v699, 16
      %v710 = vshll.u32 %v699, 16
      %v712 = vrot.slane %v710, 1
      %v713 = vor.u32 %v708, %v712
      %v715 = vshrl.u32 %v700, 16
      %v717 = vshll.u32 %v700, 16
      %v719 = vrot.slane %v717, 1
      %v720 = vor.u32 %v715, %v719
      %v722 = vshrl.u32 %v701, 16
      %v724 = vshll.u32 %v701, 16
      %v726 = vrot.slane %v724, 1
      %v727 = vor.u32 %v722, %v726
      %v729 = vshrl.u32 %v702, 16
      %v731 = vshll.u32 %v702, 16
      %v733 = vrot.slane %v731, 1
      %v734 = vor.u32 %v729, %v733
      %v736 = vshrl.u32 %v703, 16
      %v738 = vshll.u32 %v703, 16
      %v740 = vrot.slane %v738, 1
      %v741 = vor.u32 %v736, %v740
      %v743 = vshrl.u32 %v704, 16
      %v745 = vshll.u32 %v704, 16
      %v747 = vrot.slane %v745, 1
      %v748 = vor.u32 %v743, %v747
      %v750 = vshrl.u32 %v705, 16
      %v752 = vshll.u32 %v705, 16
      %v754 = vrot.slane %v752, 1
      %v755 = vor.u32 %v750, %v754
      %v757 = vshrl.u32 %v706, 16
      %v759 = vshll.u32 %v706, 16
      %v761 = vrot.slane %v759, 1
      %v762 = vor.u32 %v757, %v761
      %v765 = vsel %vm528, %v602, %v652
      %v768 = vsel %vm528, %v603, %v654
      %v771 = vsel %vm528, %v604, %v656
      %v774 = vsel %vm528, %v605, %v658
      %v777 = vsel %vm528, %v606, %v660
      %v780 = vsel %vm528, %v607, %v662
      %v783 = vsel %vm528, %v608, %v664
      %v786 = vsel %vm528, %v609, %v666
      %v795 = vunpack.c.l.b16 %v765
      %v796 = vunpack.c.l.b16 %v713
      %v797 = vunpack.c.l.b16 %v768
      %v798 = vunpack.c.l.b16 %v720
      %v799 = vunpack.c.l.b16 %v771
      %v800 = vunpack.c.l.b16 %v727
      %v801 = vunpack.c.l.b16 %v774
      %v802 = vunpack.c.l.b16 %v734
      %v803 = vunpack.c.l.b16 %v777
      %v804 = vunpack.c.l.b16 %v741
      %v805 = vunpack.c.l.b16 %v780
      %v806 = vunpack.c.l.b16 %v748
      %v807 = vunpack.c.l.b16 %v783
      %v808 = vunpack.c.l.b16 %v755
      %v809 = vunpack.c.l.b16 %v786
      %v810 = vunpack.c.l.b16 %v762
      %s811 = scalar_lea.vmem %s1, 96
      %v812 = vld [vmem:[%s811] sm:$0xf]
      %v813 = vld [vmem:[%s811 + $0x4] sm:$0xf]
      %v814 = vld [vmem:[%s811 + $0x8] sm:$0xf]
      %v815 = vld [vmem:[%s811 + $0xc] sm:$0xf]
      %v816 = vld [vmem:[%s811 + $0x10] sm:$0xf]
      %v817 = vld [vmem:[%s811 + $0x14] sm:$0xf]
      %v818 = vld [vmem:[%s811 + $0x18] sm:$0xf]
      %v819 = vld [vmem:[%s811 + $0x1c] sm:$0xf]
      %v820 = vld [vmem:[%s811 + $0x20] sm:$0xf]
      %v821 = vld [vmem:[%s811 + $0x24] sm:$0xf]
      %v822 = vld [vmem:[%s811 + $0x28] sm:$0xf]
      %v823 = vld [vmem:[%s811 + $0x2c] sm:$0xf]
      %v824 = vld [vmem:[%s811 + $0x30] sm:$0xf]
      %v825 = vld [vmem:[%s811 + $0x34] sm:$0xf]
      %v826 = vld [vmem:[%s811 + $0x38] sm:$0xf]
      %v827 = vld [vmem:[%s811 + $0x3c] sm:$0xf]
      %v828 = vld [vmem:[%s811 + $0x40] sm:$0xf]
      %v829 = vld [vmem:[%s811 + $0x44] sm:$0xf]
      %v830 = vld [vmem:[%s811 + $0x48] sm:$0xf]
      %v831 = vld [vmem:[%s811 + $0x4c] sm:$0xf]
      %v832 = vld [vmem:[%s811 + $0x50] sm:$0xf]
      %v833 = vld [vmem:[%s811 + $0x54] sm:$0xf]
      %v834 = vld [vmem:[%s811 + $0x58] sm:$0xf]
      %v835 = vld [vmem:[%s811 + $0x5c] sm:$0xf]
      %v836 = vpack.c.b16 %v797, %v795
      %v837 = vpack.c.b16 %v798, %v796
      %v838 = vpack.c.b16 %v801, %v799
      %v839 = vpack.c.b16 %v802, %v800
      %v840 = vpack.c.b16 %v805, %v803
      %v841 = vpack.c.b16 %v806, %v804
      %v842 = vpack.c.b16 %v809, %v807
      %v843 = vpack.c.b16 %v810, %v808
      %v872 = vunpack.c.l.b16 %v812
      %v873 = vunpack.c.l.b16 %v813
      %v874 = vunpack.c.l.b16 %v814
      %v875 = vunpack.c.l.b16 %v815
      %v876 = vunpack.c.l.b16 %v816
      %v877 = vunpack.c.l.b16 %v817
      %v878 = vunpack.c.l.b16 %v818
      %v879 = vunpack.c.l.b16 %v819
      %v880 = vunpack.c.l.b16 %v820
      %v881 = vunpack.c.l.b16 %v821
      %v882 = vunpack.c.l.b16 %v822
      %v883 = vunpack.c.l.b16 %v823
      %v884 = vunpack.c.l.b16 %v824
      %v885 = vunpack.c.l.b16 %v825
      %v886 = vunpack.c.l.b16 %v826
      %v887 = vunpack.c.l.b16 %v827
      %v888 = vunpack.c.l.b16 %v828
      %v889 = vunpack.c.l.b16 %v829
      %v890 = vunpack.c.l.b16 %v830
      %v891 = vunpack.c.l.b16 %v831
      %v892 = vunpack.c.l.b16 %v832
      %v893 = vunpack.c.l.b16 %v833
      %v894 = vunpack.c.l.b16 %v834
      %v895 = vunpack.c.l.b16 %v835
      %v896 = vpack.c.b16 %v873, %v872
      %v897 = vpack.c.b16 %v875, %v874
      %v898 = vpack.c.b16 %v877, %v876
      %v899 = vpack.c.b16 %v879, %v878
      %v900 = vpack.c.b16 %v881, %v880
      %v901 = vpack.c.b16 %v883, %v882
      %v902 = vpack.c.b16 %v885, %v884
      %v903 = vpack.c.b16 %v887, %v886
      %v904 = vpack.c.b16 %v889, %v888
      %v905 = vpack.c.b16 %v891, %v890
      %v906 = vpack.c.b16 %v893, %v892
      %v907 = vpack.c.b16 %v895, %v894
      %v921 = vsel %vm528, %v837, 0
      %v924 = vsel %vm528, %v839, 0
      %v927 = vsel %vm528, %v841, 0
      %v930 = vsel %vm528, %v843, 0
      %932 = vmatprep.subr.bf16.mxu0 0
      %933 = vmatpush1.bf16.msra.mxu0 %v896
      %934 = vmatprep.subr.bf16.mxu0 0
      %935 = vmatpush1.bf16.msra.mxu0 %v897
      %936 = vmatprep.subr.bf16.mxu0 0
      %937 = vmatpush1.bf16.msra.mxu0 %v898
      %938 = vmatprep.subr.bf16.mxu0 0
      %939 = vmatpush1.bf16.msra.mxu0 %v899
      %940 = vmatprep.subr.bf16.mxu0 0
      %941 = vmatpush1.bf16.msra.mxu0 %v900
      %942 = vmatprep.subr.bf16.mxu0 0
      %943 = vmatpush1.bf16.msra.mxu0 %v901
      %944 = vmatprep.subr.bf16.mxu0 0
      %945 = vmatpush1.bf16.msra.mxu0 %v902
      %946 = vmatprep.subr.bf16.mxu0 0
      %947 = vmatpush1.bf16.msra.mxu0 %v903
      %948 = vmatprep.subr.bf16.mxu0 0
      %949 = vmatpush1.bf16.msra.mxu0 %v904
      %950 = vmatprep.subr.bf16.mxu0 0
      %951 = vmatpush1.bf16.msra.mxu0 %v905
      %952 = vmatprep.subr.bf16.mxu0 0
      %953 = vmatpush1.bf16.msra.mxu0 %v906
      %954 = vmatprep.subr.bf16.mxu0 0
      %955 = vmatpush1.bf16.msra.mxu0 %v907
      %956 = vmatprep.subr.bf16.mxu0 0
      %957 = vmatpush1.bf16.msra.mxu0 0
      %958 = vmatprep.subr.bf16.mxu0 0
      %959 = vmatpush1.bf16.msra.mxu0 0
      %960 = vmatprep.subr.bf16.mxu0 0
      %961 = vmatpush1.bf16.msra.mxu0 0
      %962 = vmatprep.subr.bf16.mxu0 0
      %963 = vmatpush1.bf16.msra.mxu0 0
      %964 = vmatprep.mubr.bf16.mxu0 %v921
      %965 = vmatmul.mubr.bf16.gmra.mrb[0].mxu0 %v836
      %v966 = vpop.f32.mrb[0].mxu0
      %v967 = vadd.f32 0.0, %v966
      %v968 = vpop.f32.mrb[0].mxu0
      %v969 = vpop.f32.mrb[0].mxu0
      %v970 = vadd.f32 0.0, %v969
      %v971 = vpop.f32.mrb[0].mxu0
      %972 = vmatprep.mubr.bf16.mxu0 %v924
      %973 = vmatmul.mubr.bf16.gmra.mrb[0].mxu0 %v838
      %v974 = vpop.f32.mrb[0].mxu0
      %v975 = vadd.f32 0.0, %v974
      %v976 = vpop.f32.mrb[0].mxu0
      %v977 = vpop.f32.mrb[0].mxu0
      %v978 = vadd.f32 0.0, %v977
      %v979 = vpop.f32.mrb[0].mxu0
      %980 = vmatprep.mubr.bf16.mxu0 %v927
      %981 = vmatmul.mubr.bf16.gmra.mrb[0].mxu0 %v840
      %v982 = vpop.f32.mrb[0].mxu0
      %v983 = vadd.f32 0.0, %v982
      %v984 = vpop.f32.mrb[0].mxu0
      %v985 = vpop.f32.mrb[0].mxu0
      %v986 = vadd.f32 0.0, %v985
      %v987 = vpop.f32.mrb[0].mxu0
      %988 = vmatprep.mubr.bf16.mxu0 %v930
      %989 = vmatmul.mubr.bf16.gmra.mrb[0].mxu0 %v842
      %v990 = vpop.f32.mrb[0].mxu0
      %v991 = vadd.f32 0.0, %v990
      %v992 = vpop.f32.mrb[0].mxu0
      %v993 = vpop.f32.mrb[0].mxu0
      %v994 = vadd.f32 0.0, %v993
      %v995 = vpop.f32.mrb[0].mxu0
      %996 = vdwg.mxu0
      %v997 = vpack.c.b16 %v563, %v561
      %v998 = vpack.c.b16 %v564, %v562
      %v999 = vpack.c.b16 %v567, %v565
      %v1000 = vpack.c.b16 %v568, %v566
      %v1001 = vpack.c.b16 %v571, %v569
      %v1002 = vpack.c.b16 %v572, %v570
      %v1003 = vpack.c.b16 %v575, %v573
      %v1004 = vpack.c.b16 %v576, %v574
      %v1033 = vunpack.c.l.b16 %v577
      %v1034 = vunpack.c.l.b16 %v578
      %v1035 = vunpack.c.l.b16 %v579
      %v1036 = vunpack.c.l.b16 %v580
      %v1037 = vunpack.c.l.b16 %v581
      %v1038 = vunpack.c.l.b16 %v582
      %v1039 = vunpack.c.l.b16 %v583
      %v1040 = vunpack.c.l.b16 %v584
      %v1041 = vunpack.c.l.b16 %v585
      %v1042 = vunpack.c.l.b16 %v586
      %v1043 = vunpack.c.l.b16 %v587
      %v1044 = vunpack.c.l.b16 %v588
      %v1045 = vunpack.c.l.b16 %v589
      %v1046 = vunpack.c.l.b16 %v590
      %v1047 = vunpack.c.l.b16 %v591
      %v1048 = vunpack.c.l.b16 %v592
      %v1049 = vunpack.c.l.b16 %v593
      %v1050 = vunpack.c.l.b16 %v594
      %v1051 = vunpack.c.l.b16 %v595
      %v1052 = vunpack.c.l.b16 %v596
      %v1053 = vunpack.c.l.b16 %v597
      %v1054 = vunpack.c.l.b16 %v598
      %v1055 = vunpack.c.l.b16 %v599
      %v1056 = vunpack.c.l.b16 %v600
      %v1057 = vpack.c.b16 %v1034, %v1033
      %v1058 = vpack.c.b16 %v1036, %v1035
      %v1059 = vpack.c.b16 %v1038, %v1037
      %v1060 = vpack.c.b16 %v1040, %v1039
      %v1061 = vpack.c.b16 %v1042, %v1041
      %v1062 = vpack.c.b16 %v1044, %v1043
      %v1063 = vpack.c.b16 %v1046, %v1045
      %v1064 = vpack.c.b16 %v1048, %v1047
      %v1065 = vpack.c.b16 %v1050, %v1049
      %v1066 = vpack.c.b16 %v1052, %v1051
      %v1067 = vpack.c.b16 %v1054, %v1053
      %v1068 = vpack.c.b16 %v1056, %v1055
      %v1082 = vsel %vm528, %v998, 0
      %v1085 = vsel %vm528, %v1000, 0
      %v1088 = vsel %vm528, %v1002, 0
      %v1091 = vsel %vm528, %v1004, 0
      %1093 = vmatprep.subr.bf16.mxu0 0
      %1094 = vmatpush1.bf16.msra.mxu0 %v1057
      %1095 = vmatprep.subr.bf16.mxu0 0
      %1096 = vmatpush1.bf16.msra.mxu0 %v1058
      %1097 = vmatprep.subr.bf16.mxu0 0
      %1098 = vmatpush1.bf16.msra.mxu0 %v1059
      %1099 = vmatprep.subr.bf16.mxu0 0
      %1100 = vmatpush1.bf16.msra.mxu0 %v1060
      %1101 = vmatprep.subr.bf16.mxu0 0
      %1102 = vmatpush1.bf16.msra.mxu0 %v1061
      %1103 = vmatprep.subr.bf16.mxu0 0
      %1104 = vmatpush1.bf16.msra.mxu0 %v1062
      %1105 = vmatprep.subr.bf16.mxu0 0
      %1106 = vmatpush1.bf16.msra.mxu0 %v1063
      %1107 = vmatprep.subr.bf16.mxu0 0
      %1108 = vmatpush1.bf16.msra.mxu0 %v1064
      %1109 = vmatprep.subr.bf16.mxu0 0
      %1110 = vmatpush1.bf16.msra.mxu0 %v1065
      %1111 = vmatprep.subr.bf16.mxu0 0
      %1112 = vmatpush1.bf16.msra.mxu0 %v1066
      %1113 = vmatprep.subr.bf16.mxu0 0
      %1114 = vmatpush1.bf16.msra.mxu0 %v1067
      %1115 = vmatprep.subr.bf16.mxu0 0
      %1116 = vmatpush1.bf16.msra.mxu0 %v1068
      %1117 = vmatprep.subr.bf16.mxu0 0
      %1118 = vmatpush1.bf16.msra.mxu0 0
      %1119 = vmatprep.subr.bf16.mxu0 0
      %1120 = vmatpush1.bf16.msra.mxu0 0
      %1121 = vmatprep.subr.bf16.mxu0 0
      %1122 = vmatpush1.bf16.msra.mxu0 0
      %1123 = vmatprep.subr.bf16.mxu0 0
      %1124 = vmatpush1.bf16.msra.mxu0 0
      %1125 = vmatprep.mubr.bf16.mxu0 %v1082
      %1126 = vmatmul.mubr.bf16.gmra.mrb[0].mxu0 %v997
      %v1127 = vpop.f32.mrb[0].mxu0
      %v1128 = vadd.f32 %v967, %v1127
      %v1129 = vpop.f32.mrb[0].mxu0
      %v1130 = vpop.f32.mrb[0].mxu0
      %v1131 = vadd.f32 %v970, %v1130
      %v1132 = vpop.f32.mrb[0].mxu0
      %1133 = vmatprep.mubr.bf16.mxu0 %v1085
      %1134 = vmatmul.mubr.bf16.gmra.mrb[0].mxu0 %v999
      %v1135 = vpop.f32.mrb[0].mxu0
      %v1136 = vadd.f32 %v975, %v1135
      %v1137 = vpop.f32.mrb[0].mxu0
      %v1138 = vpop.f32.mrb[0].mxu0
      %v1139 = vadd.f32 %v978, %v1138
      %v1140 = vpop.f32.mrb[0].mxu0
      %1141 = vmatprep.mubr.bf16.mxu0 %v1088
      %1142 = vmatmul.mubr.bf16.gmra.mrb[0].mxu0 %v1001
      %v1143 = vpop.f32.mrb[0].mxu0
      %v1144 = vadd.f32 %v983, %v1143
      %v1145 = vpop.f32.mrb[0].mxu0
      %v1146 = vpop.f32.mrb[0].mxu0
      %v1147 = vadd.f32 %v986, %v1146
      %v1148 = vpop.f32.mrb[0].mxu0
      %1149 = vmatprep.mubr.bf16.mxu0 %v1091
      %1150 = vmatmul.mubr.bf16.gmra.mrb[0].mxu0 %v1003
      %v1151 = vpop.f32.mrb[0].mxu0
      %v1152 = vadd.f32 %v991, %v1151
      %v1153 = vpop.f32.mrb[0].mxu0
      %v1154 = vpop.f32.mrb[0].mxu0
      %v1155 = vadd.f32 %v994, %v1154
      %v1156 = vpop.f32.mrb[0].mxu0
      %1157 = vdwg.mxu0
      %s1158 = scalar_lea.vmem %s358, 8
      %v1159 = vld [vmem:[%s1158] sm:$0xf]
      %v1160 = vld [vmem:[%s1158 + $0x8] sm:$0xf]
      %v1161 = vld [vmem:[%s1158 + $0x10] sm:$0xf]
      %v1162 = vld [vmem:[%s1158 + $0x18] sm:$0xf]
      %v1163 = vld [vmem:[%s1158 + $0x20] sm:$0xf]
      %v1164 = vld [vmem:[%s1158 + $0x28] sm:$0xf]
      %v1165 = vld [vmem:[%s1158 + $0x30] sm:$0xf]
      %v1166 = vld [vmem:[%s1158 + $0x38] sm:$0xf]
      %s1167 = scalar_lea.vmem %s358, 80
      %v1168 = vld [vmem:[%s1167] sm:$0xf]
      %v1169 = vld [vmem:[%s1167 + $0x8] sm:$0xf]
      %v1170 = vld [vmem:[%s1167 + $0x10] sm:$0xf]
      %v1171 = vld [vmem:[%s1167 + $0x18] sm:$0xf]
      %v1172 = vld [vmem:[%s1167 + $0x20] sm:$0xf]
      %v1173 = vld [vmem:[%s1167 + $0x28] sm:$0xf]
      %v1174 = vld [vmem:[%s1167 + $0x30] sm:$0xf]
      %v1175 = vld [vmem:[%s1167 + $0x38] sm:$0xf]
      %v1176 = vld [vmem:[%s1158 + $0x4] sm:$0x1]
      %v1177 = vld [vmem:[%s1158 + $0xc] sm:$0x1]
      %v1178 = vld [vmem:[%s1158 + $0x14] sm:$0x1]
      %v1179 = vld [vmem:[%s1158 + $0x1c] sm:$0x1]
      %v1180 = vld [vmem:[%s1158 + $0x24] sm:$0x1]
      %v1181 = vld [vmem:[%s1158 + $0x2c] sm:$0x1]
      %v1182 = vld [vmem:[%s1158 + $0x34] sm:$0x1]
      %v1183 = vld [vmem:[%s1158 + $0x3c] sm:$0x1]
      %v1192 = vunpack.c.l.b16 %v1168
      %v1193 = vunpack.c.l.b16 %v1169
      %v1194 = vunpack.c.l.b16 %v1170
      %v1195 = vunpack.c.l.b16 %v1171
      %v1196 = vunpack.c.l.b16 %v1172
      %v1197 = vunpack.c.l.b16 %v1173
      %v1198 = vunpack.c.l.b16 %v1174
      %v1199 = vunpack.c.l.b16 %v1175
      %v1200 = vpack.c.b16 %v1192, %v1192
      %v1201 = vpack.c.b16 %v1193, %v1193
      %v1202 = vpack.c.b16 %v1194, %v1194
      %v1203 = vpack.c.b16 %v1195, %v1195
      %v1204 = vpack.c.b16 %v1196, %v1196
      %v1205 = vpack.c.b16 %v1197, %v1197
      %v1206 = vpack.c.b16 %v1198, %v1198
      %v1207 = vpack.c.b16 %v1199, %v1199
      %1208 = vrot.lane.b32.xlu0 %v1200, 64
      %v1209 = vpop.permute.xlu0 %1208
      %1210 = vrot.lane.b32.xlu0 %v1201, 64
      %v1211 = vpop.permute.xlu0 %1210
      %1212 = vrot.lane.b32.xlu0 %v1202, 64
      %v1213 = vpop.permute.xlu0 %1212
      %1214 = vrot.lane.b32.xlu0 %v1203, 64
      %v1215 = vpop.permute.xlu0 %1214
      %1216 = vrot.lane.b32.xlu0 %v1204, 64
      %v1217 = vpop.permute.xlu0 %1216
      %1218 = vrot.lane.b32.xlu0 %v1205, 64
      %v1219 = vpop.permute.xlu0 %1218
      %1220 = vrot.lane.b32.xlu0 %v1206, 64
      %v1221 = vpop.permute.xlu0 %1220
      %1222 = vrot.lane.b32.xlu0 %v1207, 64
      %v1223 = vpop.permute.xlu0 %1222
      %v1240 = vunpack.c.l.b16 %v1159
      %v1241 = vunpack.c.l.b16 %v1176
      %v1242 = vunpack.c.l.b16 %v1160
      %v1243 = vunpack.c.l.b16 %v1177
      %v1244 = vunpack.c.l.b16 %v1161
      %v1245 = vunpack.c.l.b16 %v1178
      %v1246 = vunpack.c.l.b16 %v1162
      %v1247 = vunpack.c.l.b16 %v1179
      %v1248 = vunpack.c.l.b16 %v1163
      %v1249 = vunpack.c.l.b16 %v1180
      %v1250 = vunpack.c.l.b16 %v1164
      %v1251 = vunpack.c.l.b16 %v1181
      %v1252 = vunpack.c.l.b16 %v1165
      %v1253 = vunpack.c.l.b16 %v1182
      %v1254 = vunpack.c.l.b16 %v1166
      %v1255 = vunpack.c.l.b16 %v1183
      %v1256 = vpack.c.b16 %v1241, %v1240
      %v1257 = vpack.c.b16 %v1243, %v1242
      %v1258 = vpack.c.b16 %v1245, %v1244
      %v1259 = vpack.c.b16 %v1247, %v1246
      %v1260 = vpack.c.b16 %v1249, %v1248
      %v1261 = vpack.c.b16 %v1251, %v1250
      %v1262 = vpack.c.b16 %v1253, %v1252
      %v1263 = vpack.c.b16 %v1255, %v1254
      %v1265 = vshrl.u32 %v1256, 16
      %v1267 = vshll.u32 %v1256, 16
      %v1269 = vrot.slane %v1267, 1
      %v1270 = vor.u32 %v1265, %v1269
      %v1272 = vshrl.u32 %v1257, 16
      %v1274 = vshll.u32 %v1257, 16
      %v1276 = vrot.slane %v1274, 1
      %v1277 = vor.u32 %v1272, %v1276
      %v1279 = vshrl.u32 %v1258, 16
      %v1281 = vshll.u32 %v1258, 16
      %v1283 = vrot.slane %v1281, 1
      %v1284 = vor.u32 %v1279, %v1283
      %v1286 = vshrl.u32 %v1259, 16
      %v1288 = vshll.u32 %v1259, 16
      %v1290 = vrot.slane %v1288, 1
      %v1291 = vor.u32 %v1286, %v1290
      %v1293 = vshrl.u32 %v1260, 16
      %v1295 = vshll.u32 %v1260, 16
      %v1297 = vrot.slane %v1295, 1
      %v1298 = vor.u32 %v1293, %v1297
      %v1300 = vshrl.u32 %v1261, 16
      %v1302 = vshll.u32 %v1261, 16
      %v1304 = vrot.slane %v1302, 1
      %v1305 = vor.u32 %v1300, %v1304
      %v1307 = vshrl.u32 %v1262, 16
      %v1309 = vshll.u32 %v1262, 16
      %v1311 = vrot.slane %v1309, 1
      %v1312 = vor.u32 %v1307, %v1311
      %v1314 = vshrl.u32 %v1263, 16
      %v1316 = vshll.u32 %v1263, 16
      %v1318 = vrot.slane %v1316, 1
      %v1319 = vor.u32 %v1314, %v1318
      %v1322 = vsel %vm528, %v1159, %v1209
      %v1325 = vsel %vm528, %v1160, %v1211
      %v1328 = vsel %vm528, %v1161, %v1213
      %v1331 = vsel %vm528, %v1162, %v1215
      %v1334 = vsel %vm528, %v1163, %v1217
      %v1337 = vsel %vm528, %v1164, %v1219
      %v1340 = vsel %vm528, %v1165, %v1221
      %v1343 = vsel %vm528, %v1166, %v1223
      %v1352 = vunpack.c.l.b16 %v1322
      %v1353 = vunpack.c.l.b16 %v1270
      %v1354 = vunpack.c.l.b16 %v1325
      %v1355 = vunpack.c.l.b16 %v1277
      %v1356 = vunpack.c.l.b16 %v1328
      %v1357 = vunpack.c.l.b16 %v1284
      %v1358 = vunpack.c.l.b16 %v1331
      %v1359 = vunpack.c.l.b16 %v1291
      %v1360 = vunpack.c.l.b16 %v1334
      %v1361 = vunpack.c.l.b16 %v1298
      %v1362 = vunpack.c.l.b16 %v1337
      %v1363 = vunpack.c.l.b16 %v1305
      %v1364 = vunpack.c.l.b16 %v1340
      %v1365 = vunpack.c.l.b16 %v1312
      %v1366 = vunpack.c.l.b16 %v1343
      %v1367 = vunpack.c.l.b16 %v1319
      %s1368 = scalar_lea.vmem %s1, 192
      %v1369 = vld [vmem:[%s1368] sm:$0xf]
      %v1370 = vld [vmem:[%s1368 + $0x4] sm:$0xf]
      %v1371 = vld [vmem:[%s1368 + $0x8] sm:$0xf]
      %v1372 = vld [vmem:[%s1368 + $0xc] sm:$0xf]
      %v1373 = vld [vmem:[%s1368 + $0x10] sm:$0xf]
      %v1374 = vld [vmem:[%s1368 + $0x14] sm:$0xf]
      %v1375 = vld [vmem:[%s1368 + $0x18] sm:$0xf]
      %v1376 = vld [vmem:[%s1368 + $0x1c] sm:$0xf]
      %v1377 = vld [vmem:[%s1368 + $0x20] sm:$0xf]
      %v1378 = vld [vmem:[%s1368 + $0x24] sm:$0xf]
      %v1379 = vld [vmem:[%s1368 + $0x28] sm:$0xf]
      %v1380 = vld [vmem:[%s1368 + $0x2c] sm:$0xf]
      %v1381 = vld [vmem:[%s1368 + $0x30] sm:$0xf]
      %v1382 = vld [vmem:[%s1368 + $0x34] sm:$0xf]
      %v1383 = vld [vmem:[%s1368 + $0x38] sm:$0xf]
      %v1384 = vld [vmem:[%s1368 + $0x3c] sm:$0xf]
      %v1385 = vld [vmem:[%s1368 + $0x40] sm:$0xf]
      %v1386 = vld [vmem:[%s1368 + $0x44] sm:$0xf]
      %v1387 = vld [vmem:[%s1368 + $0x48] sm:$0xf]
      %v1388 = vld [vmem:[%s1368 + $0x4c] sm:$0xf]
      %v1389 = vld [vmem:[%s1368 + $0x50] sm:$0xf]
      %v1390 = vld [vmem:[%s1368 + $0x54] sm:$0xf]
      %v1391 = vld [vmem:[%s1368 + $0x58] sm:$0xf]
      %v1392 = vld [vmem:[%s1368 + $0x5c] sm:$0xf]
      %v1393 = vpack.c.b16 %v1354, %v1352
      %v1394 = vpack.c.b16 %v1355, %v1353
      %v1395 = vpack.c.b16 %v1358, %v1356
      %v1396 = vpack.c.b16 %v1359, %v1357
      %v1397 = vpack.c.b16 %v1362, %v1360
      %v1398 = vpack.c.b16 %v1363, %v1361
      %v1399 = vpack.c.b16 %v1366, %v1364
      %v1400 = vpack.c.b16 %v1367, %v1365
      %v1429 = vunpack.c.l.b16 %v1369
      %v1430 = vunpack.c.l.b16 %v1370
      %v1431 = vunpack.c.l.b16 %v1371
      %v1432 = vunpack.c.l.b16 %v1372
      %v1433 = vunpack.c.l.b16 %v1373
      %v1434 = vunpack.c.l.b16 %v1374
      %v1435 = vunpack.c.l.b16 %v1375
      %v1436 = vunpack.c.l.b16 %v1376
      %v1437 = vunpack.c.l.b16 %v1377
      %v1438 = vunpack.c.l.b16 %v1378
      %v1439 = vunpack.c.l.b16 %v1379
      %v1440 = vunpack.c.l.b16 %v1380
      %v1441 = vunpack.c.l.b16 %v1381
      %v1442 = vunpack.c.l.b16 %v1382
      %v1443 = vunpack.c.l.b16 %v1383
      %v1444 = vunpack.c.l.b16 %v1384
      %v1445 = vunpack.c.l.b16 %v1385
      %v1446 = vunpack.c.l.b16 %v1386
      %v1447 = vunpack.c.l.b16 %v1387
      %v1448 = vunpack.c.l.b16 %v1388
      %v1449 = vunpack.c.l.b16 %v1389
      %v1450 = vunpack.c.l.b16 %v1390
      %v1451 = vunpack.c.l.b16 %v1391
      %v1452 = vunpack.c.l.b16 %v1392
      %v1453 = vpack.c.b16 %v1430, %v1429
      %v1454 = vpack.c.b16 %v1432, %v1431
      %v1455 = vpack.c.b16 %v1434, %v1433
      %v1456 = vpack.c.b16 %v1436, %v1435
      %v1457 = vpack.c.b16 %v1438, %v1437
      %v1458 = vpack.c.b16 %v1440, %v1439
      %v1459 = vpack.c.b16 %v1442, %v1441
      %v1460 = vpack.c.b16 %v1444, %v1443
      %v1461 = vpack.c.b16 %v1446, %v1445
      %v1462 = vpack.c.b16 %v1448, %v1447
      %v1463 = vpack.c.b16 %v1450, %v1449
      %v1464 = vpack.c.b16 %v1452, %v1451
      %v1478 = vsel %vm528, %v1394, 0
      %v1481 = vsel %vm528, %v1396, 0
      %v1484 = vsel %vm528, %v1398, 0
      %v1487 = vsel %vm528, %v1400, 0
      %1489 = vmatprep.subr.bf16.mxu0 0
      %1490 = vmatpush1.bf16.msra.mxu0 %v1453
      %1491 = vmatprep.subr.bf16.mxu0 0
      %1492 = vmatpush1.bf16.msra.mxu0 %v1454
      %1493 = vmatprep.subr.bf16.mxu0 0
      %1494 = vmatpush1.bf16.msra.mxu0 %v1455
      %1495 = vmatprep.subr.bf16.mxu0 0
      %1496 = vmatpush1.bf16.msra.mxu0 %v1456
      %1497 = vmatprep.subr.bf16.mxu0 0
      %1498 = vmatpush1.bf16.msra.mxu0 %v1457
      %1499 = vmatprep.subr.bf16.mxu0 0
      %1500 = vmatpush1.bf16.msra.mxu0 %v1458
      %1501 = vmatprep.subr.bf16.mxu0 0
      %1502 = vmatpush1.bf16.msra.mxu0 %v1459
      %1503 = vmatprep.subr.bf16.mxu0 0
      %1504 = vmatpush1.bf16.msra.mxu0 %v1460
      %1505 = vmatprep.subr.bf16.mxu0 0
      %1506 = vmatpush1.bf16.msra.mxu0 %v1461
      %1507 = vmatprep.subr.bf16.mxu0 0
      %1508 = vmatpush1.bf16.msra.mxu0 %v1462
      %1509 = vmatprep.subr.bf16.mxu0 0
      %1510 = vmatpush1.bf16.msra.mxu0 %v1463
      %1511 = vmatprep.subr.bf16.mxu0 0
      %1512 = vmatpush1.bf16.msra.mxu0 %v1464
      %1513 = vmatprep.subr.bf16.mxu0 0
      %1514 = vmatpush1.bf16.msra.mxu0 0
      %1515 = vmatprep.subr.bf16.mxu0 0
      %1516 = vmatpush1.bf16.msra.mxu0 0
      %1517 = vmatprep.subr.bf16.mxu0 0
      %1518 = vmatpush1.bf16.msra.mxu0 0
      %1519 = vmatprep.subr.bf16.mxu0 0
      %1520 = vmatpush1.bf16.msra.mxu0 0
      %1521 = vmatprep.mubr.bf16.mxu0 %v1478
      %1522 = vmatmul.mubr.bf16.gmra.mrb[0].mxu0 %v1393
      %v1523 = vpop.f32.mrb[0].mxu0
      %v1524 = vadd.f32 0.0, %v1523
      %v1525 = vpop.f32.mrb[0].mxu0
      %v1526 = vpop.f32.mrb[0].mxu0
      %v1527 = vadd.f32 0.0, %v1526
      %v1528 = vpop.f32.mrb[0].mxu0
      %1529 = vmatprep.mubr.bf16.mxu0 %v1481
      %1530 = vmatmul.mubr.bf16.gmra.mrb[0].mxu0 %v1395
      %v1531 = vpop.f32.mrb[0].mxu0
      %v1532 = vadd.f32 0.0, %v1531
      %v1533 = vpop.f32.mrb[0].mxu0
      %v1534 = vpop.f32.mrb[0].mxu0
      %v1535 = vadd.f32 0.0, %v1534
      %v1536 = vpop.f32.mrb[0].mxu0
      %1537 = vmatprep.mubr.bf16.mxu0 %v1484
      %1538 = vmatmul.mubr.bf16.gmra.mrb[0].mxu0 %v1397
      %v1539 = vpop.f32.mrb[0].mxu0
      %v1540 = vadd.f32 0.0, %v1539
      %v1541 = vpop.f32.mrb[0].mxu0
      %v1542 = vpop.f32.mrb[0].mxu0
      %v1543 = vadd.f32 0.0, %v1542
      %v1544 = vpop.f32.mrb[0].mxu0
      %1545 = vmatprep.mubr.bf16.mxu0 %v1487
      %1546 = vmatmul.mubr.bf16.gmra.mrb[0].mxu0 %v1399
      %v1547 = vpop.f32.mrb[0].mxu0
      %v1548 = vadd.f32 0.0, %v1547
      %v1549 = vpop.f32.mrb[0].mxu0
      %v1550 = vpop.f32.mrb[0].mxu0
      %v1551 = vadd.f32 0.0, %v1550
      %v1552 = vpop.f32.mrb[0].mxu0
      %1553 = vdwg.mxu0
      %v1554 = vadd.f32 %v1128, %v1524
      %v1555 = vadd.f32 %v1131, %v1527
      %v1556 = vadd.f32 %v1136, %v1532
      %v1557 = vadd.f32 %v1139, %v1535
      %v1558 = vadd.f32 %v1144, %v1540
      %v1559 = vadd.f32 %v1147, %v1543
      %v1560 = vadd.f32 %v1152, %v1548
      %v1561 = vadd.f32 %v1155, %v1551
      %v1562 = vld [vmem:[%s3] sm:$0x1]
      %v1564 = vlaneseq
      %v1565 = vshrl.u32 %v1564, 7
      %v1566 = vsub.s32 0, %v1565
      %v1567 = vrot.slane %v1562, %v1566
      %v1569 = vmul.f32 %v1554, %v1567
      %v1570 = vmul.f32 %v1555, %v1567
      %v1571 = vmul.f32 %v1556, %v1567
      %v1572 = vmul.f32 %v1557, %v1567
      %v1573 = vmul.f32 %v1558, %v1567
      %v1574 = vmul.f32 %v1559, %v1567
      %v1575 = vmul.f32 %v1560, %v1567
      %v1576 = vmul.f32 %v1561, %v1567
      %v1577 = vld [vmem:[%s4] sm:$0x1]
      %v1579 = vlaneseq
      %v1580 = vshrl.u32 %v1579, 7
      %v1581 = vsub.s32 0, %v1580
      %v1582 = vrot.slane %v1577, %v1581
      %v1584 = vadd.f32 %v1569, %v1582
      %v1585 = vadd.f32 %v1570, %v1582
      %v1586 = vadd.f32 %v1571, %v1582
      %v1587 = vadd.f32 %v1572, %v1582
      %v1588 = vadd.f32 %v1573, %v1582
      %v1589 = vadd.f32 %v1574, %v1582
      %v1590 = vadd.f32 %v1575, %v1582
      %v1591 = vadd.f32 %v1576, %v1582
      %v1592 = vmax.f32 %v1584, 0.0
      %v1593 = vmax.f32 %v1585, 0.0
      %v1594 = vmax.f32 %v1586, 0.0
      %v1595 = vmax.f32 %v1587, 0.0
      %v1596 = vmax.f32 %v1588, 0.0
      %v1597 = vmax.f32 %v1589, 0.0
      %v1598 = vmax.f32 %v1590, 0.0
      %v1599 = vmax.f32 %v1591, 0.0
      %v1600 = vpack.c.bf16 %v1592, %v1592
      %v1601 = vpack.c.bf16 %v1593, %v1593
      %v1602 = vpack.c.bf16 %v1594, %v1594
      %v1603 = vpack.c.bf16 %v1595, %v1595
      %v1604 = vpack.c.bf16 %v1596, %v1596
      %v1605 = vpack.c.bf16 %v1597, %v1597
      %v1606 = vpack.c.bf16 %v1598, %v1598
      %v1607 = vpack.c.bf16 %v1599, %v1599
      %v1609 = vshrl.u32 %v1600, 16
      %v1611 = vrot.slane %v1609, 7
      %v1612 = vshll.u32 %v1600, 16
      %v1614 = vor.u32 %v1611, %v1612
      %v1616 = vshrl.u32 %v1601, 16
      %v1618 = vrot.slane %v1616, 7
      %v1619 = vshll.u32 %v1601, 16
      %v1621 = vor.u32 %v1618, %v1619
      %v1623 = vshrl.u32 %v1602, 16
      %v1625 = vrot.slane %v1623, 7
      %v1626 = vshll.u32 %v1602, 16
      %v1628 = vor.u32 %v1625, %v1626
      %v1630 = vshrl.u32 %v1603, 16
      %v1632 = vrot.slane %v1630, 7
      %v1633 = vshll.u32 %v1603, 16
      %v1635 = vor.u32 %v1632, %v1633
      %v1637 = vshrl.u32 %v1604, 16
      %v1639 = vrot.slane %v1637, 7
      %v1640 = vshll.u32 %v1604, 16
      %v1642 = vor.u32 %v1639, %v1640
      %v1644 = vshrl.u32 %v1605, 16
      %v1646 = vrot.slane %v1644, 7
      %v1647 = vshll.u32 %v1605, 16
      %v1649 = vor.u32 %v1646, %v1647
      %v1651 = vshrl.u32 %v1606, 16
      %v1653 = vrot.slane %v1651, 7
      %v1654 = vshll.u32 %v1606, 16
      %v1656 = vor.u32 %v1653, %v1654
      %v1658 = vshrl.u32 %v1607, 16
      %v1660 = vrot.slane %v1658, 7
      %v1661 = vshll.u32 %v1607, 16
      %v1663 = vor.u32 %v1660, %v1661
      %vm1672 = vcmask 1040384
      %vm1673 = vsmask.f32 256
      %vm1674 = vmand %vm1672, %vm1673
      %v1675 = vsel %vm1674, 0, %v1614
      %v1676 = vsel %vm1674, 0, %v1621
      %v1677 = vsel %vm1674, 0, %v1628
      %v1678 = vsel %vm1674, 0, %v1635
      %v1679 = vsel %vm1674, 0, %v1642
      %v1680 = vsel %vm1674, 0, %v1649
      %v1681 = vsel %vm1674, 0, %v1656
      %v1682 = vsel %vm1674, 0, %v1663
      %v1683 = vrot.slane %v1612, 1
      %v1684 = vor.u32 %v1609, %v1683
      %v1685 = vrot.slane %v1619, 1
      %v1686 = vor.u32 %v1616, %v1685
      %v1687 = vrot.slane %v1626, 1
      %v1688 = vor.u32 %v1623, %v1687
      %v1689 = vrot.slane %v1633, 1
      %v1690 = vor.u32 %v1630, %v1689
      %v1691 = vrot.slane %v1640, 1
      %v1692 = vor.u32 %v1637, %v1691
      %v1693 = vrot.slane %v1647, 1
      %v1694 = vor.u32 %v1644, %v1693
      %v1695 = vrot.slane %v1654, 1
      %v1696 = vor.u32 %v1651, %v1695
      %v1697 = vrot.slane %v1661, 1
      %v1698 = vor.u32 %v1658, %v1697
      %vm1707 = vcmask 1043456
      %vm1708 = vsmask.f32 3328
      %vm1709 = vmand %vm1707, %vm1708
      %v1710 = vsel %vm1709, %v1684, 0
      %v1711 = vsel %vm1709, %v1686, 0
      %v1712 = vsel %vm1709, %v1688, 0
      %v1713 = vsel %vm1709, %v1690, 0
      %v1714 = vsel %vm1709, %v1692, 0
      %v1715 = vsel %vm1709, %v1694, 0
      %v1716 = vsel %vm1709, %v1696, 0
      %v1717 = vsel %vm1709, %v1698, 0
      %v1740 = vunpack.c.l.b16 0
      %v1741 = vunpack.c.l.b16 %v1675
      %v1742 = vunpack.c.l.b16 %v1600
      %v1743 = vunpack.c.l.b16 %v1710
      %v1744 = vunpack.c.l.b16 %v1676
      %v1745 = vunpack.c.l.b16 %v1601
      %v1746 = vunpack.c.l.b16 %v1711
      %v1747 = vunpack.c.l.b16 %v1677
      %v1748 = vunpack.c.l.b16 %v1602
      %v1749 = vunpack.c.l.b16 %v1712
      %v1750 = vunpack.c.l.b16 %v1678
      %v1751 = vunpack.c.l.b16 %v1603
      %v1752 = vunpack.c.l.b16 %v1713
      %v1753 = vunpack.c.l.b16 %v1679
      %v1754 = vunpack.c.l.b16 %v1604
      %v1755 = vunpack.c.l.b16 %v1714
      %v1756 = vunpack.c.l.b16 %v1680
      %v1757 = vunpack.c.l.b16 %v1605
      %v1758 = vunpack.c.l.b16 %v1715
      %v1759 = vunpack.c.l.b16 %v1681
      %v1760 = vunpack.c.l.b16 %v1606
      %v1761 = vunpack.c.l.b16 %v1716
      %v1762 = vld [vmem:[%s2] sm:$0xf]
      %v1763 = vld [vmem:[%s2 + $0x4] sm:$0xf]
      %v1764 = vld [vmem:[%s2 + $0x8] sm:$0xf]
      %v1765 = vld [vmem:[%s2 + $0xc] sm:$0xf]
      %v1766 = vld [vmem:[%s2 + $0x10] sm:$0xf]
      %v1767 = vld [vmem:[%s2 + $0x14] sm:$0xf]
      %v1768 = vld [vmem:[%s2 + $0x18] sm:$0xf]
      %v1769 = vld [vmem:[%s2 + $0x1c] sm:$0xf]
      %v1770 = vld [vmem:[%s2 + $0x20] sm:$0xf]
      %v1771 = vld [vmem:[%s2 + $0x24] sm:$0xf]
      %v1772 = vld [vmem:[%s2 + $0x28] sm:$0xf]
      %v1773 = vld [vmem:[%s2 + $0x2c] sm:$0xf]
      %v1774 = vld [vmem:[%s2 + $0x30] sm:$0xf]
      %v1775 = vld [vmem:[%s2 + $0x34] sm:$0xf]
      %v1776 = vld [vmem:[%s2 + $0x38] sm:$0xf]
      %v1777 = vld [vmem:[%s2 + $0x3c] sm:$0xf]
      %v1778 = vld [vmem:[%s2 + $0x40] sm:$0xf]
      %v1779 = vld [vmem:[%s2 + $0x44] sm:$0xf]
      %v1780 = vld [vmem:[%s2 + $0x48] sm:$0xf]
      %v1781 = vld [vmem:[%s2 + $0x4c] sm:$0xf]
      %v1782 = vld [vmem:[%s2 + $0x50] sm:$0xf]
      %v1783 = vld [vmem:[%s2 + $0x54] sm:$0xf]
      %v1784 = vld [vmem:[%s2 + $0x58] sm:$0xf]
      %v1785 = vld [vmem:[%s2 + $0x5c] sm:$0xf]
      %v1786 = vld [vmem:[%s2 + $0x60] sm:$0xf]
      %v1787 = vld [vmem:[%s2 + $0x64] sm:$0xf]
      %v1788 = vld [vmem:[%s2 + $0x68] sm:$0xf]
      %v1789 = vld [vmem:[%s2 + $0x6c] sm:$0xf]
      %v1790 = vld [vmem:[%s2 + $0x70] sm:$0xf]
      %v1791 = vld [vmem:[%s2 + $0x74] sm:$0xf]
      %v1792 = vld [vmem:[%s2 + $0x78] sm:$0xf]
      %v1793 = vld [vmem:[%s2 + $0x7c] sm:$0xf]
      %v1794 = vld [vmem:[%s2 + $0x80] sm:$0xf]
      %v1795 = vld [vmem:[%s2 + $0x84] sm:$0xf]
      %v1796 = vld [vmem:[%s2 + $0x88] sm:$0xf]
      %v1797 = vld [vmem:[%s2 + $0x8c] sm:$0xf]
      %v1798 = vld [vmem:[%s2 + $0x90] sm:$0xf]
      %v1799 = vld [vmem:[%s2 + $0x94] sm:$0xf]
      %v1800 = vld [vmem:[%s2 + $0x98] sm:$0xf]
      %v1801 = vld [vmem:[%s2 + $0x9c] sm:$0xf]
      %v1802 = vld [vmem:[%s2 + $0xa0] sm:$0xf]
      %v1803 = vld [vmem:[%s2 + $0xa4] sm:$0xf]
      %v1804 = vld [vmem:[%s2 + $0xa8] sm:$0xf]
      %v1805 = vld [vmem:[%s2 + $0xac] sm:$0xf]
      %v1806 = vld [vmem:[%s2 + $0xb0] sm:$0xf]
      %v1807 = vld [vmem:[%s2 + $0xb4] sm:$0xf]
      %v1808 = vld [vmem:[%s2 + $0xb8] sm:$0xf]
      %v1809 = vld [vmem:[%s2 + $0xbc] sm:$0xf]
      %v1813 = vunpack.c.l.b16 %v1682
      %v1814 = vunpack.c.l.b16 %v1607
      %v1815 = vunpack.c.l.b16 %v1717
      %s1816 = scalar_lea.vmem %s2, 192
      %v1817 = vld [vmem:[%s1816] sm:$0xf]
      %v1818 = vld [vmem:[%s1816 + $0x4] sm:$0xf]
      %v1819 = vld [vmem:[%s1816 + $0x8] sm:$0xf]
      %v1820 = vld [vmem:[%s1816 + $0xc] sm:$0xf]
      %v1821 = vld [vmem:[%s1816 + $0x10] sm:$0xf]
      %v1822 = vld [vmem:[%s1816 + $0x14] sm:$0xf]
      %v1823 = vld [vmem:[%s1816 + $0x18] sm:$0xf]
      %v1824 = vld [vmem:[%s1816 + $0x1c] sm:$0xf]
      %v1825 = vld [vmem:[%s1816 + $0x20] sm:$0xf]
      %v1826 = vld [vmem:[%s1816 + $0x24] sm:$0xf]
      %v1827 = vld [vmem:[%s1816 + $0x28] sm:$0xf]
      %v1828 = vld [vmem:[%s1816 + $0x2c] sm:$0xf]
      %v1829 = vld [vmem:[%s1816 + $0x30] sm:$0xf]
      %v1830 = vld [vmem:[%s1816 + $0x34] sm:$0xf]
      %v1831 = vld [vmem:[%s1816 + $0x38] sm:$0xf]
      %v1832 = vld [vmem:[%s1816 + $0x3c] sm:$0xf]
      %v1833 = vld [vmem:[%s1816 + $0x40] sm:$0xf]
      %v1834 = vld [vmem:[%s1816 + $0x44] sm:$0xf]
      %v1835 = vld [vmem:[%s1816 + $0x48] sm:$0xf]
      %v1836 = vld [vmem:[%s1816 + $0x4c] sm:$0xf]
      %v1837 = vld [vmem:[%s1816 + $0x50] sm:$0xf]
      %v1838 = vld [vmem:[%s1816 + $0x54] sm:$0xf]
      %v1839 = vld [vmem:[%s1816 + $0x58] sm:$0xf]
      %v1840 = vld [vmem:[%s1816 + $0x5c] sm:$0xf]
      %v1841 = vld [vmem:[%s1816 + $0x60] sm:$0xf]
      %v1842 = vld [vmem:[%s1816 + $0x64] sm:$0xf]
      %v1843 = vld [vmem:[%s1816 + $0x68] sm:$0xf]
      %v1844 = vld [vmem:[%s1816 + $0x6c] sm:$0xf]
      %v1845 = vld [vmem:[%s1816 + $0x70] sm:$0xf]
      %v1846 = vld [vmem:[%s1816 + $0x74] sm:$0xf]
      %v1847 = vld [vmem:[%s1816 + $0x78] sm:$0xf]
      %v1848 = vld [vmem:[%s1816 + $0x7c] sm:$0xf]
      %v1849 = vld [vmem:[%s1816 + $0x80] sm:$0xf]
      %v1850 = vld [vmem:[%s1816 + $0x84] sm:$0xf]
      %v1851 = vld [vmem:[%s1816 + $0x88] sm:$0xf]
      %v1852 = vld [vmem:[%s1816 + $0x8c] sm:$0xf]
      %v1853 = vld [vmem:[%s1816 + $0x90] sm:$0xf]
      %v1854 = vld [vmem:[%s1816 + $0x94] sm:$0xf]
      %v1855 = vld [vmem:[%s1816 + $0x98] sm:$0xf]
      %v1856 = vld [vmem:[%s1816 + $0x9c] sm:$0xf]
      %v1857 = vld [vmem:[%s1816 + $0xa0] sm:$0xf]
      %v1858 = vld [vmem:[%s1816 + $0xa4] sm:$0xf]
      %v1859 = vld [vmem:[%s1816 + $0xa8] sm:$0xf]
      %v1860 = vld [vmem:[%s1816 + $0xac] sm:$0xf]
      %v1861 = vld [vmem:[%s1816 + $0xb0] sm:$0xf]
      %v1862 = vld [vmem:[%s1816 + $0xb4] sm:$0xf]
      %v1863 = vld [vmem:[%s1816 + $0xb8] sm:$0xf]
      %v1864 = vld [vmem:[%s1816 + $0xbc] sm:$0xf]
      %v1865 = vpack.c.b16 %v1744, %v1741
      %v1866 = vpack.c.b16 %v1745, %v1742
      %v1867 = vpack.c.b16 %v1746, %v1743
      %v1868 = vpack.c.b16 %v1750, %v1747
      %v1869 = vpack.c.b16 %v1751, %v1748
      %v1870 = vpack.c.b16 %v1752, %v1749
      %v1871 = vpack.c.b16 %v1756, %v1753
      %v1872 = vpack.c.b16 %v1757, %v1754
      %v1873 = vpack.c.b16 %v1758, %v1755
      %v1874 = vpack.c.b16 %v1813, %v1759
      %v1875 = vpack.c.b16 %v1814, %v1760
      %v1876 = vpack.c.b16 %v1815, %v1761
      %v1937 = vunpack.c.l.b16 %v1817
      %v1938 = vunpack.c.l.b16 %v1818
      %v1939 = vunpack.c.l.b16 %v1819
      %v1940 = vunpack.c.l.b16 %v1820
      %v1941 = vunpack.c.l.b16 %v1821
      %v1942 = vunpack.c.l.b16 %v1822
      %v1943 = vunpack.c.l.b16 %v1823
      %v1944 = vunpack.c.l.b16 %v1824
      %v1945 = vunpack.c.l.b16 %v1825
      %v1946 = vunpack.c.l.b16 %v1826
      %v1947 = vunpack.c.l.b16 %v1827
      %v1948 = vunpack.c.l.b16 %v1828
      %v1949 = vunpack.c.l.b16 %v1829
      %v1950 = vunpack.c.l.b16 %v1830
      %v1951 = vunpack.c.l.b16 %v1831
      %v1952 = vunpack.c.l.b16 %v1832
      %v1953 = vunpack.c.l.b16 %v1833
      %v1954 = vunpack.c.l.b16 %v1834
      %v1955 = vunpack.c.l.b16 %v1835
      %v1956 = vunpack.c.l.b16 %v1836
      %v1957 = vunpack.c.l.b16 %v1837
      %v1958 = vunpack.c.l.b16 %v1838
      %v1959 = vunpack.c.l.b16 %v1839
      %v1960 = vunpack.c.l.b16 %v1840
      %v1961 = vunpack.c.l.b16 %v1841
      %v1962 = vunpack.c.l.b16 %v1842
      %v1963 = vunpack.c.l.b16 %v1843
      %v1964 = vunpack.c.l.b16 %v1844
      %v1965 = vunpack.c.l.b16 %v1845
      %v1966 = vunpack.c.l.b16 %v1846
      %v1967 = vunpack.c.l.b16 %v1847
      %v1968 = vunpack.c.l.b16 %v1848
      %v1969 = vunpack.c.l.b16 %v1849
      %v1970 = vunpack.c.l.b16 %v1850
      %v1971 = vunpack.c.l.b16 %v1851
      %v1972 = vunpack.c.l.b16 %v1852
      %v1973 = vunpack.c.l.b16 %v1853
      %v1974 = vunpack.c.l.b16 %v1854
      %v1975 = vunpack.c.l.b16 %v1855
      %v1976 = vunpack.c.l.b16 %v1856
      %v1977 = vunpack.c.l.b16 %v1857
      %v1978 = vunpack.c.l.b16 %v1858
      %v1979 = vunpack.c.l.b16 %v1859
      %v1980 = vunpack.c.l.b16 %v1860
      %v1981 = vunpack.c.l.b16 %v1861
      %v1982 = vunpack.c.l.b16 %v1862
      %v1983 = vunpack.c.l.b16 %v1863
      %v1984 = vunpack.c.l.b16 %v1864
      %v1985 = vpack.c.b16 %v1938, %v1937
      %v1986 = vpack.c.b16 %v1940, %v1939
      %v1987 = vpack.c.b16 %v1942, %v1941
      %v1988 = vpack.c.b16 %v1944, %v1943
      %v1989 = vpack.c.b16 %v1946, %v1945
      %v1990 = vpack.c.b16 %v1948, %v1947
      %v1991 = vpack.c.b16 %v1950, %v1949
      %v1992 = vpack.c.b16 %v1952, %v1951
      %v1993 = vpack.c.b16 %v1954, %v1953
      %v1994 = vpack.c.b16 %v1956, %v1955
      %v1995 = vpack.c.b16 %v1958, %v1957
      %v1996 = vpack.c.b16 %v1960, %v1959
      %v1997 = vpack.c.b16 %v1962, %v1961
      %v1998 = vpack.c.b16 %v1964, %v1963
      %v1999 = vpack.c.b16 %v1966, %v1965
      %v2000 = vpack.c.b16 %v1968, %v1967
      %v2001 = vpack.c.b16 %v1970, %v1969
      %v2002 = vpack.c.b16 %v1972, %v1971
      %v2003 = vpack.c.b16 %v1974, %v1973
      %v2004 = vpack.c.b16 %v1976, %v1975
      %v2005 = vpack.c.b16 %v1978, %v1977
      %v2006 = vpack.c.b16 %v1980, %v1979
      %v2007 = vpack.c.b16 %v1982, %v1981
      %v2008 = vpack.c.b16 %v1984, %v1983
      %2033 = vmatprep.subr.bf16.mxu0 0
      %2034 = vmatpush1.bf16.msra.mxu0 %v1985
      %2035 = vmatprep.subr.bf16.mxu0 0
      %2036 = vmatpush1.bf16.msra.mxu0 %v1986
      %2037 = vmatprep.subr.bf16.mxu0 0
      %2038 = vmatpush1.bf16.msra.mxu0 %v1987
      %2039 = vmatprep.subr.bf16.mxu0 0
      %2040 = vmatpush1.bf16.msra.mxu0 %v1988
      %2041 = vmatprep.subr.bf16.mxu0 0
      %2042 = vmatpush1.bf16.msra.mxu0 %v1989
      %2043 = vmatprep.subr.bf16.mxu0 0
      %2044 = vmatpush1.bf16.msra.mxu0 %v1990
      %2045 = vmatprep.subr.bf16.mxu0 0
      %2046 = vmatpush1.bf16.msra.mxu0 %v1991
      %2047 = vmatprep.subr.bf16.mxu0 0
      %2048 = vmatpush1.bf16.msra.mxu0 %v1992
      %2049 = vmatprep.subr.bf16.mxu0 0
      %2050 = vmatpush1.bf16.msra.mxu0 %v1993
      %2051 = vmatprep.subr.bf16.mxu0 0
      %2052 = vmatpush1.bf16.msra.mxu0 %v1994
      %2053 = vmatprep.subr.bf16.mxu0 0
      %2054 = vmatpush1.bf16.msra.mxu0 %v1995
      %2055 = vmatprep.subr.bf16.mxu0 0
      %2056 = vmatpush1.bf16.msra.mxu0 %v1996
      %2057 = vmatprep.subr.bf16.mxu0 0
      %2058 = vmatpush1.bf16.msra.mxu0 %v1997
      %2059 = vmatprep.subr.bf16.mxu0 0
      %2060 = vmatpush1.bf16.msra.mxu0 %v1998
      %2061 = vmatprep.subr.bf16.mxu0 0
      %2062 = vmatpush1.bf16.msra.mxu0 %v1999
      %2063 = vmatprep.subr.bf16.mxu0 0
      %2064 = vmatpush1.bf16.msra.mxu0 %v2000
      %2065 = vmatprep.mubr.bf16.mxu0 %v1866
      %2066 = vmatmul.mubr.bf16.gmra.mrb[0].mxu0 %v1865
      %v2067 = vpop.f32.mrb[0].mxu0
      %v2068 = vadd.f32 0.0, %v2067
      %v2069 = vpop.f32.mrb[0].mxu0
      %v2070 = vpop.f32.mrb[0].mxu0
      %v2071 = vadd.f32 0.0, %v2070
      %v2072 = vpop.f32.mrb[0].mxu0
      %2073 = vmatprep.mubr.bf16.mxu0 %v1869
      %2074 = vmatmul.mubr.bf16.gmra.mrb[0].mxu0 %v1868
      %v2075 = vpop.f32.mrb[0].mxu0
      %v2076 = vadd.f32 0.0, %v2075
      %v2077 = vpop.f32.mrb[0].mxu0
      %v2078 = vpop.f32.mrb[0].mxu0
      %v2079 = vadd.f32 0.0, %v2078
      %v2080 = vpop.f32.mrb[0].mxu0
      %2081 = vmatprep.mubr.bf16.mxu0 %v1872
      %2082 = vmatmul.mubr.bf16.gmra.mrb[0].mxu0 %v1871
      %v2083 = vpop.f32.mrb[0].mxu0
      %v2084 = vadd.f32 0.0, %v2083
      %v2085 = vpop.f32.mrb[0].mxu0
      %v2086 = vpop.f32.mrb[0].mxu0
      %v2087 = vadd.f32 0.0, %v2086
      %v2088 = vpop.f32.mrb[0].mxu0
      %2089 = vmatprep.mubr.bf16.mxu0 %v1875
      %2090 = vmatmul.mubr.bf16.gmra.mrb[0].mxu0 %v1874
      %v2091 = vpop.f32.mrb[0].mxu0
      %v2092 = vadd.f32 0.0, %v2091
      %v2093 = vpop.f32.mrb[0].mxu0
      %v2094 = vpop.f32.mrb[0].mxu0
      %v2095 = vadd.f32 0.0, %v2094
      %v2096 = vpop.f32.mrb[0].mxu0
      %2097 = vdwg.mxu0
      %2098 = vmatprep.subr.bf16.mxu0 0
      %2099 = vmatpush1.bf16.msra.mxu0 %v2001
      %2100 = vmatprep.subr.bf16.mxu0 0
      %2101 = vmatpush1.bf16.msra.mxu0 %v2002
      %2102 = vmatprep.subr.bf16.mxu0 0
      %2103 = vmatpush1.bf16.msra.mxu0 %v2003
      %2104 = vmatprep.subr.bf16.mxu0 0
      %2105 = vmatpush1.bf16.msra.mxu0 %v2004
      %2106 = vmatprep.subr.bf16.mxu0 0
      %2107 = vmatpush1.bf16.msra.mxu0 %v2005
      %2108 = vmatprep.subr.bf16.mxu0 0
      %2109 = vmatpush1.bf16.msra.mxu0 %v2006
      %2110 = vmatprep.subr.bf16.mxu0 0
      %2111 = vmatpush1.bf16.msra.mxu0 %v2007
      %2112 = vmatprep.subr.bf16.mxu0 0
      %2113 = vmatpush1.bf16.msra.mxu0 %v2008
      %2114 = vmatprep.subr.bf16.mxu0 0
      %2115 = vmatpush1.bf16.msra.mxu0 0
      %2116 = vmatprep.subr.bf16.mxu0 0
      %2117 = vmatpush1.bf16.msra.mxu0 0
      %2118 = vmatprep.subr.bf16.mxu0 0
      %2119 = vmatpush1.bf16.msra.mxu0 0
      %2120 = vmatprep.subr.bf16.mxu0 0
      %2121 = vmatpush1.bf16.msra.mxu0 0
      %2122 = vmatprep.subr.bf16.mxu0 0
      %2123 = vmatpush1.bf16.msra.mxu0 0
      %2124 = vmatprep.subr.bf16.mxu0 0
      %2125 = vmatpush1.bf16.msra.mxu0 0
      %2126 = vmatprep.subr.bf16.mxu0 0
      %2127 = vmatpush1.bf16.msra.mxu0 0
      %2128 = vmatprep.subr.bf16.mxu0 0
      %2129 = vmatpush1.bf16.msra.mxu0 0
      %2130 = vmatprep.mubr.bf16.mxu0 0
      %2131 = vmatmul.mubr.bf16.gmra.mrb[0].mxu0 %v1867
      %v2132 = vpop.f32.mrb[0].mxu0
      %v2133 = vadd.f32 %v2068, %v2132
      %v2134 = vpop.f32.mrb[0].mxu0
      %v2135 = vpop.f32.mrb[0].mxu0
      %v2136 = vadd.f32 %v2071, %v2135
      %v2137 = vpop.f32.mrb[0].mxu0
      %2138 = vmatprep.mubr.bf16.mxu0 0
      %2139 = vmatmul.mubr.bf16.gmra.mrb[0].mxu0 %v1870
      %v2140 = vpop.f32.mrb[0].mxu0
      %v2141 = vadd.f32 %v2076, %v2140
      %v2142 = vpop.f32.mrb[0].mxu0
      %v2143 = vpop.f32.mrb[0].mxu0
      %v2144 = vadd.f32 %v2079, %v2143
      %v2145 = vpop.f32.mrb[0].mxu0
      %2146 = vmatprep.mubr.bf16.mxu0 0
      %2147 = vmatmul.mubr.bf16.gmra.mrb[0].mxu0 %v1873
      %v2148 = vpop.f32.mrb[0].mxu0
      %v2149 = vadd.f32 %v2084, %v2148
      %v2150 = vpop.f32.mrb[0].mxu0
      %v2151 = vpop.f32.mrb[0].mxu0
      %v2152 = vadd.f32 %v2087, %v2151
      %v2153 = vpop.f32.mrb[0].mxu0
      %2154 = vmatprep.mubr.bf16.mxu0 0
      %2155 = vmatmul.mubr.bf16.gmra.mrb[0].mxu0 %v1876
      %v2156 = vpop.f32.mrb[0].mxu0
      %v2157 = vadd.f32 %v2092, %v2156
      %v2158 = vpop.f32.mrb[0].mxu0
      %v2159 = vpop.f32.mrb[0].mxu0
      %v2160 = vadd.f32 %v2095, %v2159
      %v2161 = vpop.f32.mrb[0].mxu0
      %2162 = vdwg.mxu0
      %v2163 = vpack.c.b16 %v1741, %v1740
      %v2164 = vpack.c.b16 %v1742, %v1740
      %v2165 = vpack.c.b16 %v1743, %v1740
      %v2166 = vpack.c.b16 %v1747, %v1744
      %v2167 = vpack.c.b16 %v1748, %v1745
      %v2168 = vpack.c.b16 %v1749, %v1746
      %v2169 = vpack.c.b16 %v1753, %v1750
      %v2170 = vpack.c.b16 %v1754, %v1751
      %v2171 = vpack.c.b16 %v1755, %v1752
      %v2172 = vpack.c.b16 %v1759, %v1756
      %v2173 = vpack.c.b16 %v1760, %v1757
      %v2174 = vpack.c.b16 %v1761, %v1758
      %v2235 = vunpack.c.l.b16 %v1762
      %v2236 = vunpack.c.l.b16 %v1763
      %v2237 = vunpack.c.l.b16 %v1764
      %v2238 = vunpack.c.l.b16 %v1765
      %v2239 = vunpack.c.l.b16 %v1766
      %v2240 = vunpack.c.l.b16 %v1767
      %v2241 = vunpack.c.l.b16 %v1768
      %v2242 = vunpack.c.l.b16 %v1769
      %v2243 = vunpack.c.l.b16 %v1770
      %v2244 = vunpack.c.l.b16 %v1771
      %v2245 = vunpack.c.l.b16 %v1772
      %v2246 = vunpack.c.l.b16 %v1773
      %v2247 = vunpack.c.l.b16 %v1774
      %v2248 = vunpack.c.l.b16 %v1775
      %v2249 = vunpack.c.l.b16 %v1776
      %v2250 = vunpack.c.l.b16 %v1777
      %v2251 = vunpack.c.l.b16 %v1778
      %v2252 = vunpack.c.l.b16 %v1779
      %v2253 = vunpack.c.l.b16 %v1780
      %v2254 = vunpack.c.l.b16 %v1781
      %v2255 = vunpack.c.l.b16 %v1782
      %v2256 = vunpack.c.l.b16 %v1783
      %v2257 = vunpack.c.l.b16 %v1784
      %v2258 = vunpack.c.l.b16 %v1785
      %v2259 = vunpack.c.l.b16 %v1786
      %v2260 = vunpack.c.l.b16 %v1787
      %v2261 = vunpack.c.l.b16 %v1788
      %v2262 = vunpack.c.l.b16 %v1789
      %v2263 = vunpack.c.l.b16 %v1790
      %v2264 = vunpack.c.l.b16 %v1791
      %v2265 = vunpack.c.l.b16 %v1792
      %v2266 = vunpack.c.l.b16 %v1793
      %v2267 = vunpack.c.l.b16 %v1794
      %v2268 = vunpack.c.l.b16 %v1795
      %v2269 = vunpack.c.l.b16 %v1796
      %v2270 = vunpack.c.l.b16 %v1797
      %v2271 = vunpack.c.l.b16 %v1798
      %v2272 = vunpack.c.l.b16 %v1799
      %v2273 = vunpack.c.l.b16 %v1800
      %v2274 = vunpack.c.l.b16 %v1801
      %v2275 = vunpack.c.l.b16 %v1802
      %v2276 = vunpack.c.l.b16 %v1803
      %v2277 = vunpack.c.l.b16 %v1804
      %v2278 = vunpack.c.l.b16 %v1805
      %v2279 = vunpack.c.l.b16 %v1806
      %v2280 = vunpack.c.l.b16 %v1807
      %v2281 = vunpack.c.l.b16 %v1808
      %v2282 = vunpack.c.l.b16 %v1809
      %v2283 = vpack.c.b16 %v2236, %v2235
      %v2284 = vpack.c.b16 %v2238, %v2237
      %v2285 = vpack.c.b16 %v2240, %v2239
      %v2286 = vpack.c.b16 %v2242, %v2241
      %v2287 = vpack.c.b16 %v2244, %v2243
      %v2288 = vpack.c.b16 %v2246, %v2245
      %v2289 = vpack.c.b16 %v2248, %v2247
      %v2290 = vpack.c.b16 %v2250, %v2249
      %v2291 = vpack.c.b16 %v2252, %v2251
      %v2292 = vpack.c.b16 %v2254, %v2253
      %v2293 = vpack.c.b16 %v2256, %v2255
      %v2294 = vpack.c.b16 %v2258, %v2257
      %v2295 = vpack.c.b16 %v2260, %v2259
      %v2296 = vpack.c.b16 %v2262, %v2261
      %v2297 = vpack.c.b16 %v2264, %v2263
      %v2298 = vpack.c.b16 %v2266, %v2265
      %v2299 = vpack.c.b16 %v2268, %v2267
      %v2300 = vpack.c.b16 %v2270, %v2269
      %v2301 = vpack.c.b16 %v2272, %v2271
      %v2302 = vpack.c.b16 %v2274, %v2273
      %v2303 = vpack.c.b16 %v2276, %v2275
      %v2304 = vpack.c.b16 %v2278, %v2277
      %v2305 = vpack.c.b16 %v2280, %v2279
      %v2306 = vpack.c.b16 %v2282, %v2281
      %2331 = vmatprep.subr.bf16.mxu0 0
      %2332 = vmatpush1.bf16.msra.mxu0 %v2283
      %2333 = vmatprep.subr.bf16.mxu0 0
      %2334 = vmatpush1.bf16.msra.mxu0 %v2284
      %2335 = vmatprep.subr.bf16.mxu0 0
      %2336 = vmatpush1.bf16.msra.mxu0 %v2285
      %2337 = vmatprep.subr.bf16.mxu0 0
      %2338 = vmatpush1.bf16.msra.mxu0 %v2286
      %2339 = vmatprep.subr.bf16.mxu0 0
      %2340 = vmatpush1.bf16.msra.mxu0 %v2287
      %2341 = vmatprep.subr.bf16.mxu0 0
      %2342 = vmatpush1.bf16.msra.mxu0 %v2288
      %2343 = vmatprep.subr.bf16.mxu0 0
      %2344 = vmatpush1.bf16.msra.mxu0 %v2289
      %2345 = vmatprep.subr.bf16.mxu0 0
      %2346 = vmatpush1.bf16.msra.mxu0 %v2290
      %2347 = vmatprep.subr.bf16.mxu0 0
      %2348 = vmatpush1.bf16.msra.mxu0 %v2291
      %2349 = vmatprep.subr.bf16.mxu0 0
      %2350 = vmatpush1.bf16.msra.mxu0 %v2292
      %2351 = vmatprep.subr.bf16.mxu0 0
      %2352 = vmatpush1.bf16.msra.mxu0 %v2293
      %2353 = vmatprep.subr.bf16.mxu0 0
      %2354 = vmatpush1.bf16.msra.mxu0 %v2294
      %2355 = vmatprep.subr.bf16.mxu0 0
      %2356 = vmatpush1.bf16.msra.mxu0 %v2295
      %2357 = vmatprep.subr.bf16.mxu0 0
      %2358 = vmatpush1.bf16.msra.mxu0 %v2296
      %2359 = vmatprep.subr.bf16.mxu0 0
      %2360 = vmatpush1.bf16.msra.mxu0 %v2297
      %2361 = vmatprep.subr.bf16.mxu0 0
      %2362 = vmatpush1.bf16.msra.mxu0 %v2298
      %2363 = vmatprep.mubr.bf16.mxu0 %v2164
      %2364 = vmatmul.mubr.bf16.gmra.mrb[0].mxu0 %v2163
      %v2365 = vpop.f32.mrb[0].mxu0
      %v2366 = vadd.f32 %v2133, %v2365
      %v2367 = vpop.f32.mrb[0].mxu0
      %v2368 = vpop.f32.mrb[0].mxu0
      %v2369 = vadd.f32 %v2136, %v2368
      %v2370 = vpop.f32.mrb[0].mxu0
      %2371 = vmatprep.mubr.bf16.mxu0 %v2167
      %2372 = vmatmul.mubr.bf16.gmra.mrb[0].mxu0 %v2166
      %v2373 = vpop.f32.mrb[0].mxu0
      %v2374 = vadd.f32 %v2141, %v2373
      %v2375 = vpop.f32.mrb[0].mxu0
      %v2376 = vpop.f32.mrb[0].mxu0
      %v2377 = vadd.f32 %v2144, %v2376
      %v2378 = vpop.f32.mrb[0].mxu0
      %2379 = vmatprep.mubr.bf16.mxu0 %v2170
      %2380 = vmatmul.mubr.bf16.gmra.mrb[0].mxu0 %v2169
      %v2381 = vpop.f32.mrb[0].mxu0
      %v2382 = vadd.f32 %v2149, %v2381
      %v2383 = vpop.f32.mrb[0].mxu0
      %v2384 = vpop.f32.mrb[0].mxu0
      %v2385 = vadd.f32 %v2152, %v2384
      %v2386 = vpop.f32.mrb[0].mxu0
      %2387 = vmatprep.mubr.bf16.mxu0 %v2173
      %2388 = vmatmul.mubr.bf16.gmra.mrb[0].mxu0 %v2172
      %v2389 = vpop.f32.mrb[0].mxu0
      %v2390 = vadd.f32 %v2157, %v2389
      %v2391 = vpop.f32.mrb[0].mxu0
      %v2392 = vpop.f32.mrb[0].mxu0
      %v2393 = vadd.f32 %v2160, %v2392
      %v2394 = vpop.f32.mrb[0].mxu0
      %2395 = vdwg.mxu0
      %2396 = vmatprep.subr.bf16.mxu0 0
      %2397 = vmatpush1.bf16.msra.mxu0 %v2299
      %2398 = vmatprep.subr.bf16.mxu0 0
      %2399 = vmatpush1.bf16.msra.mxu0 %v2300
      %2400 = vmatprep.subr.bf16.mxu0 0
      %2401 = vmatpush1.bf16.msra.mxu0 %v2301
      %2402 = vmatprep.subr.bf16.mxu0 0
      %2403 = vmatpush1.bf16.msra.mxu0 %v2302
      %2404 = vmatprep.subr.bf16.mxu0 0
      %2405 = vmatpush1.bf16.msra.mxu0 %v2303
      %2406 = vmatprep.subr.bf16.mxu0 0
      %2407 = vmatpush1.bf16.msra.mxu0 %v2304
      %2408 = vmatprep.subr.bf16.mxu0 0
      %2409 = vmatpush1.bf16.msra.mxu0 %v2305
      %2410 = vmatprep.subr.bf16.mxu0 0
      %2411 = vmatpush1.bf16.msra.mxu0 %v2306
      %2412 = vmatprep.subr.bf16.mxu0 0
      %2413 = vmatpush1.bf16.msra.mxu0 0
      %2414 = vmatprep.subr.bf16.mxu0 0
      %2415 = vmatpush1.bf16.msra.mxu0 0
      %2416 = vmatprep.subr.bf16.mxu0 0
      %2417 = vmatpush1.bf16.msra.mxu0 0
      %2418 = vmatprep.subr.bf16.mxu0 0
      %2419 = vmatpush1.bf16.msra.mxu0 0
      %2420 = vmatprep.subr.bf16.mxu0 0
      %2421 = vmatpush1.bf16.msra.mxu0 0
      %2422 = vmatprep.subr.bf16.mxu0 0
      %2423 = vmatpush1.bf16.msra.mxu0 0
      %2424 = vmatprep.subr.bf16.mxu0 0
      %2425 = vmatpush1.bf16.msra.mxu0 0
      %2426 = vmatprep.subr.bf16.mxu0 0
      %2427 = vmatpush1.bf16.msra.mxu0 0
      %2428 = vmatprep.mubr.bf16.mxu0 0
      %2429 = vmatmul.mubr.bf16.gmra.mrb[0].mxu0 %v2165
      %v2430 = vpop.f32.mrb[0].mxu0
      %v2431 = vadd.f32 %v2366, %v2430
      %v2432 = vpop.f32.mrb[0].mxu0
      %v2433 = vpop.f32.mrb[0].mxu0
      %v2434 = vadd.f32 %v2369, %v2433
      %v2435 = vpop.f32.mrb[0].mxu0
      %2436 = vmatprep.mubr.bf16.mxu0 0
      %2437 = vmatmul.mubr.bf16.gmra.mrb[0].mxu0 %v2168
      %v2438 = vpop.f32.mrb[0].mxu0
      %v2439 = vadd.f32 %v2374, %v2438
      %v2440 = vpop.f32.mrb[0].mxu0
      %v2441 = vpop.f32.mrb[0].mxu0
      %v2442 = vadd.f32 %v2377, %v2441
      %v2443 = vpop.f32.mrb[0].mxu0
      %2444 = vmatprep.mubr.bf16.mxu0 0
      %2445 = vmatmul.mubr.bf16.gmra.mrb[0].mxu0 %v2171
      %v2446 = vpop.f32.mrb[0].mxu0
      %v2447 = vadd.f32 %v2382, %v2446
      %v2448 = vpop.f32.mrb[0].mxu0
      %v2449 = vpop.f32.mrb[0].mxu0
      %v2450 = vadd.f32 %v2385, %v2449
      %v2451 = vpop.f32.mrb[0].mxu0
      %2452 = vmatprep.mubr.bf16.mxu0 0
      %2453 = vmatmul.mubr.bf16.gmra.mrb[0].mxu0 %v2174
      %v2454 = vpop.f32.mrb[0].mxu0
      %v2455 = vadd.f32 %v2390, %v2454
      %v2456 = vpop.f32.mrb[0].mxu0
      %v2457 = vpop.f32.mrb[0].mxu0
      %v2458 = vadd.f32 %v2393, %v2457
      %v2459 = vpop.f32.mrb[0].mxu0
      %2460 = vdwg.mxu0
      %s2461 = scalar_lea.vmem %s2, 384
      %v2462 = vld [vmem:[%s2461] sm:$0xf]
      %v2463 = vld [vmem:[%s2461 + $0x4] sm:$0xf]
      %v2464 = vld [vmem:[%s2461 + $0x8] sm:$0xf]
      %v2465 = vld [vmem:[%s2461 + $0xc] sm:$0xf]
      %v2466 = vld [vmem:[%s2461 + $0x10] sm:$0xf]
      %v2467 = vld [vmem:[%s2461 + $0x14] sm:$0xf]
      %v2468 = vld [vmem:[%s2461 + $0x18] sm:$0xf]
      %v2469 = vld [vmem:[%s2461 + $0x1c] sm:$0xf]
      %v2470 = vld [vmem:[%s2461 + $0x20] sm:$0xf]
      %v2471 = vld [vmem:[%s2461 + $0x24] sm:$0xf]
      %v2472 = vld [vmem:[%s2461 + $0x28] sm:$0xf]
      %v2473 = vld [vmem:[%s2461 + $0x2c] sm:$0xf]
      %v2474 = vld [vmem:[%s2461 + $0x30] sm:$0xf]
      %v2475 = vld [vmem:[%s2461 + $0x34] sm:$0xf]
      %v2476 = vld [vmem:[%s2461 + $0x38] sm:$0xf]
      %v2477 = vld [vmem:[%s2461 + $0x3c] sm:$0xf]
      %v2478 = vld [vmem:[%s2461 + $0x40] sm:$0xf]
      %v2479 = vld [vmem:[%s2461 + $0x44] sm:$0xf]
      %v2480 = vld [vmem:[%s2461 + $0x48] sm:$0xf]
      %v2481 = vld [vmem:[%s2461 + $0x4c] sm:$0xf]
      %v2482 = vld [vmem:[%s2461 + $0x50] sm:$0xf]
      %v2483 = vld [vmem:[%s2461 + $0x54] sm:$0xf]
      %v2484 = vld [vmem:[%s2461 + $0x58] sm:$0xf]
      %v2485 = vld [vmem:[%s2461 + $0x5c] sm:$0xf]
      %v2486 = vld [vmem:[%s2461 + $0x60] sm:$0xf]
      %v2487 = vld [vmem:[%s2461 + $0x64] sm:$0xf]
      %v2488 = vld [vmem:[%s2461 + $0x68] sm:$0xf]
      %v2489 = vld [vmem:[%s2461 + $0x6c] sm:$0xf]
      %v2490 = vld [vmem:[%s2461 + $0x70] sm:$0xf]
      %v2491 = vld [vmem:[%s2461 + $0x74] sm:$0xf]
      %v2492 = vld [vmem:[%s2461 + $0x78] sm:$0xf]
      %v2493 = vld [vmem:[%s2461 + $0x7c] sm:$0xf]
      %v2494 = vld [vmem:[%s2461 + $0x80] sm:$0xf]
      %v2495 = vld [vmem:[%s2461 + $0x84] sm:$0xf]
      %v2496 = vld [vmem:[%s2461 + $0x88] sm:$0xf]
      %v2497 = vld [vmem:[%s2461 + $0x8c] sm:$0xf]
      %v2498 = vld [vmem:[%s2461 + $0x90] sm:$0xf]
      %v2499 = vld [vmem:[%s2461 + $0x94] sm:$0xf]
      %v2500 = vld [vmem:[%s2461 + $0x98] sm:$0xf]
      %v2501 = vld [vmem:[%s2461 + $0x9c] sm:$0xf]
      %v2502 = vld [vmem:[%s2461 + $0xa0] sm:$0xf]
      %v2503 = vld [vmem:[%s2461 + $0xa4] sm:$0xf]
      %v2504 = vld [vmem:[%s2461 + $0xa8] sm:$0xf]
      %v2505 = vld [vmem:[%s2461 + $0xac] sm:$0xf]
      %v2506 = vld [vmem:[%s2461 + $0xb0] sm:$0xf]
      %v2507 = vld [vmem:[%s2461 + $0xb4] sm:$0xf]
      %v2508 = vld [vmem:[%s2461 + $0xb8] sm:$0xf]
      %v2509 = vld [vmem:[%s2461 + $0xbc] sm:$0xf]
      %v2510 = vpack.c.b16 %v1740, %v1813
      %v2511 = vpack.c.b16 %v1740, %v1814
      %v2512 = vpack.c.b16 %v1740, %v1815
      %v2564 = vunpack.c.l.b16 %v2462
      %v2565 = vunpack.c.l.b16 %v2463
      %v2566 = vunpack.c.l.b16 %v2464
      %v2567 = vunpack.c.l.b16 %v2465
      %v2568 = vunpack.c.l.b16 %v2466
      %v2569 = vunpack.c.l.b16 %v2467
      %v2570 = vunpack.c.l.b16 %v2468
      %v2571 = vunpack.c.l.b16 %v2469
      %v2572 = vunpack.c.l.b16 %v2470
      %v2573 = vunpack.c.l.b16 %v2471
      %v2574 = vunpack.c.l.b16 %v2472
      %v2575 = vunpack.c.l.b16 %v2473
      %v2576 = vunpack.c.l.b16 %v2474
      %v2577 = vunpack.c.l.b16 %v2475
      %v2578 = vunpack.c.l.b16 %v2476
      %v2579 = vunpack.c.l.b16 %v2477
      %v2580 = vunpack.c.l.b16 %v2478
      %v2581 = vunpack.c.l.b16 %v2479
      %v2582 = vunpack.c.l.b16 %v2480
      %v2583 = vunpack.c.l.b16 %v2481
      %v2584 = vunpack.c.l.b16 %v2482
      %v2585 = vunpack.c.l.b16 %v2483
      %v2586 = vunpack.c.l.b16 %v2484
      %v2587 = vunpack.c.l.b16 %v2485
      %v2588 = vunpack.c.l.b16 %v2486
      %v2589 = vunpack.c.l.b16 %v2487
      %v2590 = vunpack.c.l.b16 %v2488
      %v2591 = vunpack.c.l.b16 %v2489
      %v2592 = vunpack.c.l.b16 %v2490
      %v2593 = vunpack.c.l.b16 %v2491
      %v2594 = vunpack.c.l.b16 %v2492
      %v2595 = vunpack.c.l.b16 %v2493
      %v2596 = vunpack.c.l.b16 %v2494
      %v2597 = vunpack.c.l.b16 %v2495
      %v2598 = vunpack.c.l.b16 %v2496
      %v2599 = vunpack.c.l.b16 %v2497
      %v2600 = vunpack.c.l.b16 %v2498
      %v2601 = vunpack.c.l.b16 %v2499
      %v2602 = vunpack.c.l.b16 %v2500
      %v2603 = vunpack.c.l.b16 %v2501
      %v2604 = vunpack.c.l.b16 %v2502
      %v2605 = vunpack.c.l.b16 %v2503
      %v2606 = vunpack.c.l.b16 %v2504
      %v2607 = vunpack.c.l.b16 %v2505
      %v2608 = vunpack.c.l.b16 %v2506
      %v2609 = vunpack.c.l.b16 %v2507
      %v2610 = vunpack.c.l.b16 %v2508
      %v2611 = vunpack.c.l.b16 %v2509
      %v2612 = vpack.c.b16 %v2565, %v2564
      %v2613 = vpack.c.b16 %v2567, %v2566
      %v2614 = vpack.c.b16 %v2569, %v2568
      %v2615 = vpack.c.b16 %v2571, %v2570
      %v2616 = vpack.c.b16 %v2573, %v2572
      %v2617 = vpack.c.b16 %v2575, %v2574
      %v2618 = vpack.c.b16 %v2577, %v2576
      %v2619 = vpack.c.b16 %v2579, %v2578
      %v2620 = vpack.c.b16 %v2581, %v2580
      %v2621 = vpack.c.b16 %v2583, %v2582
      %v2622 = vpack.c.b16 %v2585, %v2584
      %v2623 = vpack.c.b16 %v2587, %v2586
      %v2624 = vpack.c.b16 %v2589, %v2588
      %v2625 = vpack.c.b16 %v2591, %v2590
      %v2626 = vpack.c.b16 %v2593, %v2592
      %v2627 = vpack.c.b16 %v2595, %v2594
      %v2628 = vpack.c.b16 %v2597, %v2596
      %v2629 = vpack.c.b16 %v2599, %v2598
      %v2630 = vpack.c.b16 %v2601, %v2600
      %v2631 = vpack.c.b16 %v2603, %v2602
      %v2632 = vpack.c.b16 %v2605, %v2604
      %v2633 = vpack.c.b16 %v2607, %v2606
      %v2634 = vpack.c.b16 %v2609, %v2608
      %v2635 = vpack.c.b16 %v2611, %v2610
      %2660 = vmatprep.subr.bf16.mxu0 0
      %2661 = vmatpush1.bf16.msra.mxu0 %v2612
      %2662 = vmatprep.subr.bf16.mxu0 0
      %2663 = vmatpush1.bf16.msra.mxu0 %v2613
      %2664 = vmatprep.subr.bf16.mxu0 0
      %2665 = vmatpush1.bf16.msra.mxu0 %v2614
      %2666 = vmatprep.subr.bf16.mxu0 0
      %2667 = vmatpush1.bf16.msra.mxu0 %v2615
      %2668 = vmatprep.subr.bf16.mxu0 0
      %2669 = vmatpush1.bf16.msra.mxu0 %v2616
      %2670 = vmatprep.subr.bf16.mxu0 0
      %2671 = vmatpush1.bf16.msra.mxu0 %v2617
      %2672 = vmatprep.subr.bf16.mxu0 0
      %2673 = vmatpush1.bf16.msra.mxu0 %v2618
      %2674 = vmatprep.subr.bf16.mxu0 0
      %2675 = vmatpush1.bf16.msra.mxu0 %v2619
      %2676 = vmatprep.subr.bf16.mxu0 0
      %2677 = vmatpush1.bf16.msra.mxu0 %v2620
      %2678 = vmatprep.subr.bf16.mxu0 0
      %2679 = vmatpush1.bf16.msra.mxu0 %v2621
      %2680 = vmatprep.subr.bf16.mxu0 0
      %2681 = vmatpush1.bf16.msra.mxu0 %v2622
      %2682 = vmatprep.subr.bf16.mxu0 0
      %2683 = vmatpush1.bf16.msra.mxu0 %v2623
      %2684 = vmatprep.subr.bf16.mxu0 0
      %2685 = vmatpush1.bf16.msra.mxu0 %v2624
      %2686 = vmatprep.subr.bf16.mxu0 0
      %2687 = vmatpush1.bf16.msra.mxu0 %v2625
      %2688 = vmatprep.subr.bf16.mxu0 0
      %2689 = vmatpush1.bf16.msra.mxu0 %v2626
      %2690 = vmatprep.subr.bf16.mxu0 0
      %2691 = vmatpush1.bf16.msra.mxu0 %v2627
      %2692 = vmatprep.mubr.bf16.mxu0 %v2167
      %2693 = vmatmul.mubr.bf16.gmra.mrb[0].mxu0 %v2166
      %v2694 = vpop.f32.mrb[0].mxu0
      %v2695 = vadd.f32 0.0, %v2694
      %v2696 = vpop.f32.mrb[0].mxu0
      %v2697 = vpop.f32.mrb[0].mxu0
      %v2698 = vadd.f32 0.0, %v2697
      %v2699 = vpop.f32.mrb[0].mxu0
      %2700 = vmatprep.mubr.bf16.mxu0 %v2170
      %2701 = vmatmul.mubr.bf16.gmra.mrb[0].mxu0 %v2169
      %v2702 = vpop.f32.mrb[0].mxu0
      %v2703 = vadd.f32 0.0, %v2702
      %v2704 = vpop.f32.mrb[0].mxu0
      %v2705 = vpop.f32.mrb[0].mxu0
      %v2706 = vadd.f32 0.0, %v2705
      %v2707 = vpop.f32.mrb[0].mxu0
      %2708 = vmatprep.mubr.bf16.mxu0 %v2173
      %2709 = vmatmul.mubr.bf16.gmra.mrb[0].mxu0 %v2172
      %v2710 = vpop.f32.mrb[0].mxu0
      %v2711 = vadd.f32 0.0, %v2710
      %v2712 = vpop.f32.mrb[0].mxu0
      %v2713 = vpop.f32.mrb[0].mxu0
      %v2714 = vadd.f32 0.0, %v2713
      %v2715 = vpop.f32.mrb[0].mxu0
      %2716 = vmatprep.mubr.bf16.mxu0 %v2511
      %2717 = vmatmul.mubr.bf16.gmra.mrb[0].mxu0 %v2510
      %v2718 = vpop.f32.mrb[0].mxu0
      %v2719 = vadd.f32 0.0, %v2718
      %v2720 = vpop.f32.mrb[0].mxu0
      %v2721 = vpop.f32.mrb[0].mxu0
      %v2722 = vadd.f32 0.0, %v2721
      %v2723 = vpop.f32.mrb[0].mxu0
      %2724 = vdwg.mxu0
      %2725 = vmatprep.subr.bf16.mxu0 0
      %2726 = vmatpush1.bf16.msra.mxu0 %v2628
      %2727 = vmatprep.subr.bf16.mxu0 0
      %2728 = vmatpush1.bf16.msra.mxu0 %v2629
      %2729 = vmatprep.subr.bf16.mxu0 0
      %2730 = vmatpush1.bf16.msra.mxu0 %v2630
      %2731 = vmatprep.subr.bf16.mxu0 0
      %2732 = vmatpush1.bf16.msra.mxu0 %v2631
      %2733 = vmatprep.subr.bf16.mxu0 0
      %2734 = vmatpush1.bf16.msra.mxu0 %v2632
      %2735 = vmatprep.subr.bf16.mxu0 0
      %2736 = vmatpush1.bf16.msra.mxu0 %v2633
      %2737 = vmatprep.subr.bf16.mxu0 0
      %2738 = vmatpush1.bf16.msra.mxu0 %v2634
      %2739 = vmatprep.subr.bf16.mxu0 0
      %2740 = vmatpush1.bf16.msra.mxu0 %v2635
      %2741 = vmatprep.subr.bf16.mxu0 0
      %2742 = vmatpush1.bf16.msra.mxu0 0
      %2743 = vmatprep.subr.bf16.mxu0 0
      %2744 = vmatpush1.bf16.msra.mxu0 0
      %2745 = vmatprep.subr.bf16.mxu0 0
      %2746 = vmatpush1.bf16.msra.mxu0 0
      %2747 = vmatprep.subr.bf16.mxu0 0
      %2748 = vmatpush1.bf16.msra.mxu0 0
      %2749 = vmatprep.subr.bf16.mxu0 0
      %2750 = vmatpush1.bf16.msra.mxu0 0
      %2751 = vmatprep.subr.bf16.mxu0 0
      %2752 = vmatpush1.bf16.msra.mxu0 0
      %2753 = vmatprep.subr.bf16.mxu0 0
      %2754 = vmatpush1.bf16.msra.mxu0 0
      %2755 = vmatprep.subr.bf16.mxu0 0
      %2756 = vmatpush1.bf16.msra.mxu0 0
      %2757 = vmatprep.mubr.bf16.mxu0 0
      %2758 = vmatmul.mubr.bf16.gmra.mrb[0].mxu0 %v2168
      %v2759 = vpop.f32.mrb[0].mxu0
      %v2760 = vadd.f32 %v2695, %v2759
      %v2761 = vpop.f32.mrb[0].mxu0
      %v2762 = vpop.f32.mrb[0].mxu0
      %v2763 = vadd.f32 %v2698, %v2762
      %v2764 = vpop.f32.mrb[0].mxu0
      %2765 = vmatprep.mubr.bf16.mxu0 0
      %2766 = vmatmul.mubr.bf16.gmra.mrb[0].mxu0 %v2171
      %v2767 = vpop.f32.mrb[0].mxu0
      %v2768 = vadd.f32 %v2703, %v2767
      %v2769 = vpop.f32.mrb[0].mxu0
      %v2770 = vpop.f32.mrb[0].mxu0
      %v2771 = vadd.f32 %v2706, %v2770
      %v2772 = vpop.f32.mrb[0].mxu0
      %2773 = vmatprep.mubr.bf16.mxu0 0
      %2774 = vmatmul.mubr.bf16.gmra.mrb[0].mxu0 %v2174
      %v2775 = vpop.f32.mrb[0].mxu0
      %v2776 = vadd.f32 %v2711, %v2775
      %v2777 = vpop.f32.mrb[0].mxu0
      %v2778 = vpop.f32.mrb[0].mxu0
      %v2779 = vadd.f32 %v2714, %v2778
      %v2780 = vpop.f32.mrb[0].mxu0
      %2781 = vmatprep.mubr.bf16.mxu0 0
      %2782 = vmatmul.mubr.bf16.gmra.mrb[0].mxu0 %v2512
      %v2783 = vpop.f32.mrb[0].mxu0
      %v2784 = vadd.f32 %v2719, %v2783
      %v2785 = vpop.f32.mrb[0].mxu0
      %v2786 = vpop.f32.mrb[0].mxu0
      %v2787 = vadd.f32 %v2722, %v2786
      %v2788 = vpop.f32.mrb[0].mxu0
      %2789 = vdwg.mxu0
      %v2790 = vadd.f32 %v2431, %v2760
      %v2791 = vadd.f32 %v2434, %v2763
      %v2792 = vadd.f32 %v2439, %v2768
      %v2793 = vadd.f32 %v2442, %v2771
      %v2794 = vadd.f32 %v2447, %v2776
      %v2795 = vadd.f32 %v2450, %v2779
      %v2796 = vadd.f32 %v2455, %v2784
      %v2797 = vadd.f32 %v2458, %v2787
      %v2798 = vld [vmem:[%s5] sm:$0x1]
      %v2800 = vlaneseq
      %v2801 = vshrl.u32 %v2800, 7
      %v2802 = vsub.s32 0, %v2801
      %v2803 = vrot.slane %v2798, %v2802
      %v2805 = vmul.f32 %v2790, %v2803
      %v2806 = vmul.f32 %v2791, %v2803
      %v2807 = vmul.f32 %v2792, %v2803
      %v2808 = vmul.f32 %v2793, %v2803
      %v2809 = vmul.f32 %v2794, %v2803
      %v2810 = vmul.f32 %v2795, %v2803
      %v2811 = vmul.f32 %v2796, %v2803
      %v2812 = vmul.f32 %v2797, %v2803
      %v2813 = vld [vmem:[%s6] sm:$0x1]
      %v2815 = vlaneseq
      %v2816 = vshrl.u32 %v2815, 7
      %v2817 = vsub.s32 0, %v2816
      %v2818 = vrot.slane %v2813, %v2817
      %v2820 = vadd.f32 %v2805, %v2818
      %v2821 = vadd.f32 %v2806, %v2818
      %v2822 = vadd.f32 %v2807, %v2818
      %v2823 = vadd.f32 %v2808, %v2818
      %v2824 = vadd.f32 %v2809, %v2818
      %v2825 = vadd.f32 %v2810, %v2818
      %v2826 = vadd.f32 %v2811, %v2818
      %v2827 = vadd.f32 %v2812, %v2818
      %v2828 = vld [vmem:[%s7] sm:$0xf]
      %v2829 = vld [vmem:[%s7 + $0x4] sm:$0xf]
      %v2830 = vld [vmem:[%s7 + $0x8] sm:$0xf]
      %v2831 = vld [vmem:[%s7 + $0xc] sm:$0xf]
      %v2832 = vld [vmem:[%s7 + $0x10] sm:$0xf]
      %v2833 = vld [vmem:[%s7 + $0x14] sm:$0xf]
      %v2834 = vld [vmem:[%s7 + $0x18] sm:$0xf]
      %v2835 = vld [vmem:[%s7 + $0x1c] sm:$0xf]
      %v2836 = vpack.c.b16 %v636, %v635
      %v2837 = vpack.c.b16 %v638, %v637
      %v2838 = vpack.c.b16 %v640, %v639
      %v2839 = vpack.c.b16 %v642, %v641
      %v2848 = vunpack.c.l.b16 %v2828
      %v2849 = vunpack.c.l.b16 %v2829
      %v2850 = vunpack.c.l.b16 %v2830
      %v2851 = vunpack.c.l.b16 %v2831
      %v2852 = vunpack.c.l.b16 %v2832
      %v2853 = vunpack.c.l.b16 %v2833
      %v2854 = vunpack.c.l.b16 %v2834
      %v2855 = vunpack.c.l.b16 %v2835
      %v2856 = vpack.c.b16 %v2849, %v2848
      %v2857 = vpack.c.b16 %v2851, %v2850
      %v2858 = vpack.c.b16 %v2853, %v2852
      %v2859 = vpack.c.b16 %v2855, %v2854
      %v2865 = vsel %vm528, %v2836, 0
      %v2868 = vsel %vm528, %v2837, 0
      %v2871 = vsel %vm528, %v2838, 0
      %v2874 = vsel %vm528, %v2839, 0
      %2876 = vmatprep.subr.bf16.mxu0 0
      %2877 = vmatpush1.bf16.msra.mxu0 %v2856
      %2878 = vmatprep.subr.bf16.mxu0 0
      %2879 = vmatpush1.bf16.msra.mxu0 %v2857
      %2880 = vmatprep.subr.bf16.mxu0 0
      %2881 = vmatpush1.bf16.msra.mxu0 %v2858
      %2882 = vmatprep.subr.bf16.mxu0 0
      %2883 = vmatpush1.bf16.msra.mxu0 %v2859
      %2884 = vmatprep.subr.bf16.mxu0 0
      %2885 = vmatpush1.bf16.msra.mxu0 0
      %2886 = vmatprep.subr.bf16.mxu0 0
      %2887 = vmatpush1.bf16.msra.mxu0 0
      %2888 = vmatprep.subr.bf16.mxu0 0
      %2889 = vmatpush1.bf16.msra.mxu0 0
      %2890 = vmatprep.subr.bf16.mxu0 0
      %2891 = vmatpush1.bf16.msra.mxu0 0
      %2892 = vmatprep.subr.bf16.mxu0 0
      %2893 = vmatpush1.bf16.msra.mxu0 0
      %2894 = vmatprep.subr.bf16.mxu0 0
      %2895 = vmatpush1.bf16.msra.mxu0 0
      %2896 = vmatprep.subr.bf16.mxu0 0
      %2897 = vmatpush1.bf16.msra.mxu0 0
      %2898 = vmatprep.subr.bf16.mxu0 0
      %2899 = vmatpush1.bf16.msra.mxu0 0
      %2900 = vmatprep.subr.bf16.mxu0 0
      %2901 = vmatpush1.bf16.msra.mxu0 0
      %2902 = vmatprep.subr.bf16.mxu0 0
      %2903 = vmatpush1.bf16.msra.mxu0 0
      %2904 = vmatprep.subr.bf16.mxu0 0
      %2905 = vmatpush1.bf16.msra.mxu0 0
      %2906 = vmatprep.subr.bf16.mxu0 0
      %2907 = vmatpush1.bf16.msra.mxu0 0
      %2908 = vmatprep.mubr.bf16.mxu0 0
      %2909 = vmatmul.mubr.bf16.gmra.mrb[0].mxu0 %v2865
      %v2910 = vpop.f32.mrb[0].mxu0
      %v2911 = vadd.f32 0.0, %v2910
      %v2912 = vpop.f32.mrb[0].mxu0
      %v2913 = vpop.f32.mrb[0].mxu0
      %v2914 = vadd.f32 0.0, %v2913
      %v2915 = vpop.f32.mrb[0].mxu0
      %2916 = vmatprep.mubr.bf16.mxu0 0
      %2917 = vmatmul.mubr.bf16.gmra.mrb[0].mxu0 %v2868
      %v2918 = vpop.f32.mrb[0].mxu0
      %v2919 = vadd.f32 0.0, %v2918
      %v2920 = vpop.f32.mrb[0].mxu0
      %v2921 = vpop.f32.mrb[0].mxu0
      %v2922 = vadd.f32 0.0, %v2921
      %v2923 = vpop.f32.mrb[0].mxu0
      %2924 = vmatprep.mubr.bf16.mxu0 0
      %2925 = vmatmul.mubr.bf16.gmra.mrb[0].mxu0 %v2871
      %v2926 = vpop.f32.mrb[0].mxu0
      %v2927 = vadd.f32 0.0, %v2926
      %v2928 = vpop.f32.mrb[0].mxu0
      %v2929 = vpop.f32.mrb[0].mxu0
      %v2930 = vadd.f32 0.0, %v2929
      %v2931 = vpop.f32.mrb[0].mxu0
      %2932 = vmatprep.mubr.bf16.mxu0 0
      %2933 = vmatmul.mubr.bf16.gmra.mrb[0].mxu0 %v2874
      %v2934 = vpop.f32.mrb[0].mxu0
      %v2935 = vadd.f32 0.0, %v2934
      %v2936 = vpop.f32.mrb[0].mxu0
      %v2937 = vpop.f32.mrb[0].mxu0
      %v2938 = vadd.f32 0.0, %v2937
      %v2939 = vpop.f32.mrb[0].mxu0
      %2940 = vdwg.mxu0
      %v2941 = vld [vmem:[%s8] sm:$0x1]
      %v2943 = vlaneseq
      %v2944 = vshrl.u32 %v2943, 7
      %v2945 = vsub.s32 0, %v2944
      %v2946 = vrot.slane %v2941, %v2945
      %v2948 = vmul.f32 %v2911, %v2946
      %v2949 = vmul.f32 %v2914, %v2946
      %v2950 = vmul.f32 %v2919, %v2946
      %v2951 = vmul.f32 %v2922, %v2946
      %v2952 = vmul.f32 %v2927, %v2946
      %v2953 = vmul.f32 %v2930, %v2946
      %v2954 = vmul.f32 %v2935, %v2946
      %v2955 = vmul.f32 %v2938, %v2946
      %v2956 = vld [vmem:[%s9] sm:$0x1]
      %v2958 = vlaneseq
      %v2959 = vshrl.u32 %v2958, 7
      %v2960 = vsub.s32 0, %v2959
      %v2961 = vrot.slane %v2956, %v2960
      %v2963 = vadd.f32 %v2948, %v2961
      %v2964 = vadd.f32 %v2949, %v2961
      %v2965 = vadd.f32 %v2950, %v2961
      %v2966 = vadd.f32 %v2951, %v2961
      %v2967 = vadd.f32 %v2952, %v2961
      %v2968 = vadd.f32 %v2953, %v2961
      %v2969 = vadd.f32 %v2954, %v2961
      %v2970 = vadd.f32 %v2955, %v2961
      %v2971 = vadd.f32 %v2820, %v2963
      %v2972 = vadd.f32 %v2821, %v2964
      %v2973 = vadd.f32 %v2822, %v2965
      %v2974 = vadd.f32 %v2823, %v2966
      %v2975 = vadd.f32 %v2824, %v2967
      %v2976 = vadd.f32 %v2825, %v2968
      %v2977 = vadd.f32 %v2826, %v2969
      %v2978 = vadd.f32 %v2827, %v2970
      %v2979 = vmax.f32 %v2971, 0.0
      %v2980 = vmax.f32 %v2972, 0.0
      %v2981 = vmax.f32 %v2973, 0.0
      %v2982 = vmax.f32 %v2974, 0.0
      %v2983 = vmax.f32 %v2975, 0.0
      %v2984 = vmax.f32 %v2976, 0.0
      %v2985 = vmax.f32 %v2977, 0.0
      %v2986 = vmax.f32 %v2978, 0.0
      %v2987 = vpack.c.bf16 %v2979, %v2979
      %v2988 = vpack.c.bf16 %v2980, %v2980
      %v2989 = vpack.c.bf16 %v2981, %v2981
      %v2990 = vpack.c.bf16 %v2982, %v2982
      %v2991 = vpack.c.bf16 %v2983, %v2983
      %v2992 = vpack.c.bf16 %v2984, %v2984
      %v2993 = vpack.c.bf16 %v2985, %v2985
      %v2994 = vpack.c.bf16 %v2986, %v2986
      %2995 = vst [vmem:[%s364] sm:$0xf] %v2987
      %2996 = vst [vmem:[%s364 + $0x4] sm:$0xf] %v2988
      %2997 = vst [vmem:[%s364 + $0x8] sm:$0xf] %v2989
      %2998 = vst [vmem:[%s364 + $0xc] sm:$0xf] %v2990
      %2999 = vst [vmem:[%s364 + $0x10] sm:$0xf] %v2991
      %3000 = vst [vmem:[%s364 + $0x14] sm:$0xf] %v2992
      %3001 = vst [vmem:[%s364 + $0x18] sm:$0xf] %v2993
      %3002 = vst [vmem:[%s364 + $0x1c] sm:$0xf] %v2994
      %s3003 = smul.u32 8, %s21
      %p3004 = scmp.lt.s32.totalorder %s3003, 15
      %s3005 = scalar_select %p3004, %s3003, 15
      %s3006 = smul.addr %s3005, 4
      %s3007 = scalar_lea.vmem %s10, %s3006
      // Predicated region
      $region61: #{model_forward.2} parent=59 // pred_check
        %p3008 = pneg %p254
      $region62: #{model_forward.2} parent=59 // pred_check_branch
        %3010 = sbr.rel (%p3008) target = $region64
      $region63: #{model_forward.2} parent=59 // pred_region
        %s3011 = smul.u32 8, %s21
      $region64: #{model_forward.2} parent=59 // pred_fallthru
        _
    $region60: #{model_forward.2} parent=5 // pred_fallthru
      _
    %p3012 = scmp.le.s32.totalorder 2, %s16
    // Predicated region
    $region65: #{model_forward.2} parent=5 // pred_check
      %p3013 = pneg %p3012
    $region66: #{model_forward.2} parent=5 // pred_check_branch
      %3015 = sbr.rel (%p3013) target = $region68
    $region67: #{model_forward.2} parent=5 // pred_region
      %s3016 = ssub.s32 %s16, 2
      // Predicated region
      $region69: #{model_forward.2} parent=67 // pred_check
        %p3017 = pneg %p260
      $region70: #{model_forward.2} parent=67 // pred_check_branch
        %3019 = sbr.rel (%p3017) target = $region72
      $region71: #{model_forward.2} parent=67 // pred_region
        %s3020 = smul.u32 8, %s22
        %p3021 = scmp.lt.s32.totalorder %s3020, 15
        %s3022 = scalar_select %p3021, %s3020, 15
        %s3023 = smul.addr %s3022, 4
        %s3024 = scalar_lea.vmem %s10, %s3023
      $region72: #{model_forward.2} parent=67 // pred_fallthru
        _
    $region68: #{model_forward.2} parent=5 // pred_fallthru
      _
  $region6: #{model_forward.2} parent=0 // loop_footer
    %s20 = sadd.s32 1, %s16
  $region7: #{model_forward.2} parent=0 // loop_footer_branch
    %15 = sbr.rel target = $region3
  $region8: #{model_forward.2} parent=0 // loop_exit
    _

// kernel: model_forward.3
$region0: #{model_forward.3}
  #allocation0 [shape = 'u32[]', space=smem, size = 0x4, offset = 0x4, fixed_abs, tag = 'smem constant byte address 0x4 - core index']
  #allocation1 [shape = 'u32[144,128]{1,0:T(1,128)}', space=vmem, size = 0x12000, scoped, tag = 'internal scratch']
  %s0 = inlined_call_operand.vmem [shape: bf16[16,8,128], index: 0, kind: input, shape index: {}]
  %s1 = inlined_call_operand.vmem [shape: bf16[3,384,128], index: 1, kind: input, shape index: {}]
  %s2 = inlined_call_operand.vmem [shape: bf16[3,384,128], index: 2, kind: input, shape index: {}]
  %s3 = inlined_call_operand.vmem [shape: f32[1,128], index: 3, kind: input, shape index: {}]
  %s4 = inlined_call_operand.vmem [shape: f32[1,128], index: 4, kind: input, shape index: {}]
  %s5 = inlined_call_operand.vmem [shape: f32[1,128], index: 5, kind: input, shape index: {}]
  %s6 = inlined_call_operand.vmem [shape: f32[1,128], index: 6, kind: input, shape index: {}]
  %s7 = inlined_call_operand.hbm [shape: f32[16,8,128], index: 7, kind: output, shape index: {}]
  %s8 = sld [smem:[#allocation0]]
  $region61: #{model_forward.3} parent=0
    _
  %s10 = ssub.s32 1, %s8
  %s11 = scalar_select 0, %s10, %s8
  $region1: #{model_forward.3} parent=0
    #allocation2 [shape = 'u8[65536]{0}', space=vmem, size = 0x10000, scoped, tag = 'output window, operand 0']
    #allocation3 [shape = 's32[2]{0}', space=sflag, size = 0x8, scoped, tag = 'scoped memory for model_forward.3']
    %12 = vsyncpa [#allocation3], 0
    %s13 = scalar_lea.sflag [#allocation3], 1
    %14 = vsyncpa %s13, 0
    loop: start=0, step=1, limit=4
    $region2: #{model_forward.3} parent=1 // loop_pre_header
      _
    $region3: #{model_forward.3} parent=1 // loop_header
      %s16 = sphi 0, %s20
      %p17 = scmp.ge.s32.totalorder %s16, 4
      %s26 = sphi 0, %s28
      %s29 = sphi 0, %s26
      %s30 = sphi 0, %s29
      %s46 = sphi 0, %s30
      %s50 = sphi 0, %s50
      %s52 = sphi 0, %s50
      %s53 = sphi 0, %s52
      %s67 = sphi 0, %s53
      %s71 = sphi 0, %s71
      %s73 = sphi 0, %s71
      %s74 = sphi 0, %s73
      %s88 = sphi 0, %s74
      %s92 = sphi 0, %s92
      %s94 = sphi 0, %s92
      %s95 = sphi 0, %s94
      %s109 = sphi 0, %s95
      %s113 = sphi 0, %s113
      %s115 = sphi 0, %s113
      %s116 = sphi 0, %s115
      %s130 = sphi 0, %s116
      %s134 = sphi 0, %s134
      %s136 = sphi 0, %s134
      %s137 = sphi 0, %s136
      %s151 = sphi 0, %s137
      %s155 = sphi 0, %s155
      %s157 = sphi 0, %s155
      %s158 = sphi 0, %s157
      %s172 = sphi 0, %s158
      %s178 = sphi 0, %s180
      %s181 = sphi 0, %s178
      %s182 = sphi 0, %s181
      %s198 = sphi 0, %s182
    $region4: #{model_forward.3} parent=1 // loop_header_branch
      %19 = sbr.rel (%p17) target = $region8
    $region5: #{model_forward.3} parent=1 // loop_body
      %s21 = ssub.s32 %s16, 1
      %s22 = ssub.s32 %s16, 2
      %s23 = sadd.s32 %s16, 1
      %s24 = ssub.s32 %s16, %s23
      %p25 = scmp.eq.s32.totalorder %s24, 0
      %s27 = sadd.s32 %s26, 1
      %s28 = scalar_select %p25, %s26, %s27
      %p31 = pneg %p25
      %p32 = scmp.eq.s32.totalorder %s16, 1
      %p33 = por %p31, %p32
      %p34 = scmp.ne.s32.totalorder %s26, %s29
      %p35 = scmp.eq.s32.totalorder %s16, 0
      %p36 = por %p34, %p35
      %p37 = scmp.ne.s32.totalorder %s26, %s29
      %p38 = scmp.eq.s32.totalorder %s21, 1
      %p39 = por %p37, %p38
      %p40 = scmp.ne.s32.totalorder %s29, %s30
      %p41 = scmp.eq.s32.totalorder %s21, 0
      %p42 = por %p40, %p41
      %p43 = scmp.ne.s32.totalorder %s29, %s30
      %p44 = scmp.eq.s32.totalorder %s22, 1
      %p45 = por %p43, %p44
      %p47 = scmp.ne.s32.totalorder %s30, %s46
      %p48 = scmp.eq.s32.totalorder %s22, 0
      %p49 = por %p47, %p48
      %s51 = sadd.s32 %s50, 1
      %p54 = scmp.eq.s32.totalorder %s16, 1
      %p55 = scmp.ne.s32.totalorder %s50, %s52
      %p56 = scmp.eq.s32.totalorder %s16, 0
      %p57 = por %p55, %p56
      %p58 = scmp.ne.s32.totalorder %s50, %s52
      %p59 = scmp.eq.s32.totalorder %s21, 1
      %p60 = por %p58, %p59
      %p61 = scmp.ne.s32.totalorder %s52, %s53
      %p62 = scmp.eq.s32.totalorder %s21, 0
      %p63 = por %p61, %p62
      %p64 = scmp.ne.s32.totalorder %s52, %s53
      %p65 = scmp.eq.s32.totalorder %s22, 1
      %p66 = por %p64, %p65
      %p68 = scmp.ne.s32.totalorder %s53, %s67
      %p69 = scmp.eq.s32.totalorder %s22, 0
      %p70 = por %p68, %p69
      %s72 = sadd.s32 %s71, 1
      %p75 = scmp.eq.s32.totalorder %s16, 1
      %p76 = scmp.ne.s32.totalorder %s71, %s73
      %p77 = scmp.eq.s32.totalorder %s16, 0
      %p78 = por %p76, %p77
      %p79 = scmp.ne.s32.totalorder %s71, %s73
      %p80 = scmp.eq.s32.totalorder %s21, 1
      %p81 = por %p79, %p80
      %p82 = scmp.ne.s32.totalorder %s73, %s74
      %p83 = scmp.eq.s32.totalorder %s21, 0
      %p84 = por %p82, %p83
      %p85 = scmp.ne.s32.totalorder %s73, %s74
      %p86 = scmp.eq.s32.totalorder %s22, 1
      %p87 = por %p85, %p86
      %p89 = scmp.ne.s32.totalorder %s74, %s88
      %p90 = scmp.eq.s32.totalorder %s22, 0
      %p91 = por %p89, %p90
      %s93 = sadd.s32 %s92, 1
      %p96 = scmp.eq.s32.totalorder %s16, 1
      %p97 = scmp.ne.s32.totalorder %s92, %s94
      %p98 = scmp.eq.s32.totalorder %s16, 0
      %p99 = por %p97, %p98
      %p100 = scmp.ne.s32.totalorder %s92, %s94
      %p101 = scmp.eq.s32.totalorder %s21, 1
      %p102 = por %p100, %p101
      %p103 = scmp.ne.s32.totalorder %s94, %s95
      %p104 = scmp.eq.s32.totalorder %s21, 0
      %p105 = por %p103, %p104
      %p106 = scmp.ne.s32.totalorder %s94, %s95
      %p107 = scmp.eq.s32.totalorder %s22, 1
      %p108 = por %p106, %p107
      %p110 = scmp.ne.s32.totalorder %s95, %s109
      %p111 = scmp.eq.s32.totalorder %s22, 0
      %p112 = por %p110, %p111
      %s114 = sadd.s32 %s113, 1
      %p117 = scmp.eq.s32.totalorder %s16, 1
      %p118 = scmp.ne.s32.totalorder %s113, %s115
      %p119 = scmp.eq.s32.totalorder %s16, 0
      %p120 = por %p118, %p119
      %p121 = scmp.ne.s32.totalorder %s113, %s115
      %p122 = scmp.eq.s32.totalorder %s21, 1
      %p123 = por %p121, %p122
      %p124 = scmp.ne.s32.totalorder %s115, %s116
      %p125 = scmp.eq.s32.totalorder %s21, 0
      %p126 = por %p124, %p125
      %p127 = scmp.ne.s32.totalorder %s115, %s116
      %p128 = scmp.eq.s32.totalorder %s22, 1
      %p129 = por %p127, %p128
      %p131 = scmp.ne.s32.totalorder %s116, %s130
      %p132 = scmp.eq.s32.totalorder %s22, 0
      %p133 = por %p131, %p132
      %s135 = sadd.s32 %s134, 1
      %p138 = scmp.eq.s32.totalorder %s16, 1
      %p139 = scmp.ne.s32.totalorder %s134, %s136
      %p140 = scmp.eq.s32.totalorder %s16, 0
      %p141 = por %p139, %p140
      %p142 = scmp.ne.s32.totalorder %s134, %s136
      %p143 = scmp.eq.s32.totalorder %s21, 1
      %p144 = por %p142, %p143
      %p145 = scmp.ne.s32.totalorder %s136, %s137
      %p146 = scmp.eq.s32.totalorder %s21, 0
      %p147 = por %p145, %p146
      %p148 = scmp.ne.s32.totalorder %s136, %s137
      %p149 = scmp.eq.s32.totalorder %s22, 1
      %p150 = por %p148, %p149
      %p152 = scmp.ne.s32.totalorder %s137, %s151
      %p153 = scmp.eq.s32.totalorder %s22, 0
      %p154 = por %p152, %p153
      %s156 = sadd.s32 %s155, 1
      %p159 = scmp.eq.s32.totalorder %s16, 1
      %p160 = scmp.ne.s32.totalorder %s155, %s157
      %p161 = scmp.eq.s32.totalorder %s16, 0
      %p162 = por %p160, %p161
      %p163 = scmp.ne.s32.totalorder %s155, %s157
      %p164 = scmp.eq.s32.totalorder %s21, 1
      %p165 = por %p163, %p164
      %p166 = scmp.ne.s32.totalorder %s157, %s158
      %p167 = scmp.eq.s32.totalorder %s21, 0
      %p168 = por %p166, %p167
      %p169 = scmp.ne.s32.totalorder %s157, %s158
      %p170 = scmp.eq.s32.totalorder %s22, 1
      %p171 = por %p169, %p170
      %p173 = scmp.ne.s32.totalorder %s158, %s172
      %p174 = scmp.eq.s32.totalorder %s22, 0
      %p175 = por %p173, %p174
      %s176 = ssub.s32 %s16, %s23
      %p177 = scmp.eq.s32.totalorder %s176, 0
      %s179 = sadd.s32 %s178, 1
      %s180 = scalar_select %p177, %s178, %s179
      %p183 = pneg %p177
      %p184 = scmp.eq.s32.totalorder %s16, 1
      %p185 = por %p183, %p184
      %p186 = scmp.ne.s32.totalorder %s178, %s181
      %p187 = scmp.eq.s32.totalorder %s16, 0
      %p188 = por %p186, %p187
      %p189 = scmp.ne.s32.totalorder %s178, %s181
      %p190 = scmp.eq.s32.totalorder %s21, 1
      %p191 = por %p189, %p190
      %p192 = scmp.ne.s32.totalorder %s181, %s182
      %p193 = scmp.eq.s32.totalorder %s21, 0
      %p194 = por %p192, %p193
      %p195 = scmp.ne.s32.totalorder %s181, %s182
      %p196 = scmp.eq.s32.totalorder %s22, 1
      %p197 = por %p195, %p196
      %p199 = scmp.ne.s32.totalorder %s182, %s198
      %p200 = scmp.eq.s32.totalorder %s22, 0
      %p201 = por %p199, %p200
      %p202 = scmp.le.s32.totalorder 1, %s16
      %p203 = scmp.lt.s32.totalorder %s16, 3
      %p204 = pnand %p202, %p203
      %p205 = pneg %p204
      // Predicated region
      $region9: #{model_forward.3} parent=5 // pred_check
        _
      $region10: #{model_forward.3} parent=5 // pred_check_branch
        %207 = sbr.rel (%p204) target = $region12
      $region11: #{model_forward.3} parent=5 // pred_region
        %s208 = ssub.s32 %s16, 1
        // Predicated region
        $region13: #{model_forward.3} parent=11 // pred_check
          %p209 = pneg %p63
        $region14: #{model_forward.3} parent=11 // pred_check_branch
          %211 = sbr.rel (%p209) target = $region16
        $region15: #{model_forward.3} parent=11 // pred_region
          _
        $region16: #{model_forward.3} parent=11 // pred_fallthru
          _
        // Predicated region
        $region17: #{model_forward.3} parent=11 // pred_check
          %p212 = pneg %p84
        $region18: #{model_forward.3} parent=11 // pred_check_branch
          %214 = sbr.rel (%p212) target = $region20
        $region19: #{model_forward.3} parent=11 // pred_region
          _
        $region20: #{model_forward.3} parent=11 // pred_fallthru
          _
        // Predicated region
        $region21: #{model_forward.3} parent=11 // pred_check
          %p215 = pneg %p105
        $region22: #{model_forward.3} parent=11 // pred_check_branch
          %217 = sbr.rel (%p215) target = $region24
        $region23: #{model_forward.3} parent=11 // pred_region
          _
        $region24: #{model_forward.3} parent=11 // pred_fallthru
          _
        // Predicated region
        $region25: #{model_forward.3} parent=11 // pred_check
          %p218 = pneg %p126
        $region26: #{model_forward.3} parent=11 // pred_check_branch
          %220 = sbr.rel (%p218) target = $region28
        $region27: #{model_forward.3} parent=11 // pred_region
          _
        $region28: #{model_forward.3} parent=11 // pred_fallthru
          _
        // Predicated region
        $region29: #{model_forward.3} parent=11 // pred_check
          %p221 = pneg %p147
        $region30: #{model_forward.3} parent=11 // pred_check_branch
          %223 = sbr.rel (%p221) target = $region32
        $region31: #{model_forward.3} parent=11 // pred_region
          _
        $region32: #{model_forward.3} parent=11 // pred_fallthru
          _
        // Predicated region
        $region33: #{model_forward.3} parent=11 // pred_check
          %p224 = pneg %p168
        $region34: #{model_forward.3} parent=11 // pred_check_branch
          %226 = sbr.rel (%p224) target = $region36
        $region35: #{model_forward.3} parent=11 // pred_region
          _
        $region36: #{model_forward.3} parent=11 // pred_fallthru
          _
      $region12: #{model_forward.3} parent=5 // pred_fallthru
        _
      %p227 = scmp.lt.s32.totalorder %s16, 2
      // Predicated region
      $region37: #{model_forward.3} parent=5 // pred_check
        %p228 = pneg %p227
      $region38: #{model_forward.3} parent=5 // pred_check_branch
        %230 = sbr.rel (%p228) target = $region40
      $region39: #{model_forward.3} parent=5 // pred_region
        // Predicated region
        $region41: #{model_forward.3} parent=39 // pred_check
          %p231 = pneg %p36
        $region42: #{model_forward.3} parent=39 // pred_check_branch
          %233 = sbr.rel (%p231) target = $region44
        $region43: #{model_forward.3} parent=39 // pred_region
          %s234 = smul.u32 8, %s16
          %p235 = scmp.lt.s32.totalorder %s234, 15
          %s236 = scalar_select %p235, %s234, 15
          %s237 = smul.addr %s236, 4
          %s238 = scalar_lea.vmem %s0, %s237
          %s239 = smul.u32 8, %s16
        $region44: #{model_forward.3} parent=39 // pred_fallthru
          _
      $region40: #{model_forward.3} parent=5 // pred_fallthru
        _
      %p240 = scmp.le.s32.totalorder 1, %s16
      %p241 = scmp.lt.s32.totalorder %s16, 3
      %p242 = pnand %p240, %p241
      %p243 = pneg %p242
      // Predicated region
      $region45: #{model_forward.3} parent=5 // pred_check
        _
      $region46: #{model_forward.3} parent=5 // pred_check_branch
        %245 = sbr.rel (%p242) target = $region48
      $region47: #{model_forward.3} parent=5 // pred_region
        %s246 = ssub.s32 %s16, 1
        %s247 = smul.u32 8, %s21
        %p248 = scmp.lt.s32.totalorder %s247, 15
        %s249 = scalar_select %p248, %s247, 15
        %s250 = smul.addr %s249, 4
        %s251 = scalar_lea.vmem %s0, %s250
        %p252 = pneg %p42
        %p253 = pneg %p39
        %p254 = pneg %p63
        %p255 = pneg %p60
        %p256 = pneg %p84
        %p257 = pneg %p81
        %p258 = pneg %p105
        %p259 = pneg %p102
        %p260 = pneg %p126
        %p261 = pneg %p123
        %p262 = pneg %p147
        %p263 = pneg %p144
        %p264 = pneg %p168
        %p265 = pneg %p165
        %p266 = pneg %p194
        %p267 = pneg %p191
        %s268 = sand.u32 %s181, 1
        %s269 = scalar_lea.sflag [#allocation3], %s268
        %s270 = sand.u32 %s181, 1
        %s271 = smul.addr %s270, 64
        %s272 = scalar_lea.vmem [#allocation2], %s271
        %s273 = smul.u32 8, %s21
        %p274 = scmp.lt.s32.totalorder %s273, 15
        %s275 = scalar_select %p274, %s273, 15
        %s276 = smul.addr %s275, 4
        %s277 = scalar_lea.vmem %s0, %s276
        %s278 = smul.u32 8, %s21
        %s279 = smul.u32 8, %s21
        %v281 = vld [vmem:[%s277] sm:$0xf]
        %v282 = vld [vmem:[%s277 + $0x4] sm:$0xf]
        %v283 = vld [vmem:[%s277 + $0x8] sm:$0xf]
        %v284 = vld [vmem:[%s277 + $0xc] sm:$0xf]
        %v285 = vld [vmem:[%s277 + $0x10] sm:$0xf]
        %v286 = vld [vmem:[%s277 + $0x14] sm:$0xf]
        %v287 = vld [vmem:[%s277 + $0x18] sm:$0xf]
        %v288 = vld [vmem:[%s277 + $0x1c] sm:$0xf]
        %v297 = vunpack.c.l.b16 %v281
        %v298 = vunpack.c.l.b16 %v282
        %v299 = vunpack.c.l.b16 %v283
        %v300 = vunpack.c.l.b16 %v284
        %v301 = vunpack.c.l.b16 %v285
        %v302 = vunpack.c.l.b16 %v286
        %v303 = vunpack.c.l.b16 %v287
        %v304 = vunpack.c.l.b16 %v288
        %v305 = vpack.c.b16 %v297, %v297
        %v306 = vpack.c.b16 %v298, %v298
        %v307 = vpack.c.b16 %v299, %v299
        %v308 = vpack.c.b16 %v300, %v300
        %v309 = vpack.c.b16 %v301, %v301
        %v310 = vpack.c.b16 %v302, %v302
        %v311 = vpack.c.b16 %v303, %v303
        %v312 = vpack.c.b16 %v304, %v304
        %v314 = vshrl.u32 %v305, 16
        %v316 = vrot.slane %v314, 7
        %v317 = vshll.u32 %v305, 16
        %v319 = vor.u32 %v316, %v317
        %v321 = vshrl.u32 %v306, 16
        %v323 = vrot.slane %v321, 7
        %v324 = vshll.u32 %v306, 16
        %v326 = vor.u32 %v323, %v324
        %v328 = vshrl.u32 %v307, 16
        %v330 = vrot.slane %v328, 7
        %v331 = vshll.u32 %v307, 16
        %v333 = vor.u32 %v330, %v331
        %v335 = vshrl.u32 %v308, 16
        %v337 = vrot.slane %v335, 7
        %v338 = vshll.u32 %v308, 16
        %v340 = vor.u32 %v337, %v338
        %v342 = vshrl.u32 %v309, 16
        %v344 = vrot.slane %v342, 7
        %v345 = vshll.u32 %v309, 16
        %v347 = vor.u32 %v344, %v345
        %v349 = vshrl.u32 %v310, 16
        %v351 = vrot.slane %v349, 7
        %v352 = vshll.u32 %v310, 16
        %v354 = vor.u32 %v351, %v352
        %v356 = vshrl.u32 %v311, 16
        %v358 = vrot.slane %v356, 7
        %v359 = vshll.u32 %v311, 16
        %v361 = vor.u32 %v358, %v359
        %v363 = vshrl.u32 %v312, 16
        %v365 = vrot.slane %v363, 7
        %v366 = vshll.u32 %v312, 16
        %v368 = vor.u32 %v365, %v366
        %vm377 = vcmask 1040384
        %vm378 = vsmask.f32 256
        %vm379 = vmand %vm377, %vm378
        %v380 = vsel %vm379, 0, %v319
        %v381 = vsel %vm379, 0, %v326
        %v382 = vsel %vm379, 0, %v333
        %v383 = vsel %vm379, 0, %v340
        %v384 = vsel %vm379, 0, %v347
        %v385 = vsel %vm379, 0, %v354
        %v386 = vsel %vm379, 0, %v361
        %v387 = vsel %vm379, 0, %v368
        %v388 = vrot.slane %v317, 1
        %v389 = vor.u32 %v314, %v388
        %v390 = vrot.slane %v324, 1
        %v391 = vor.u32 %v321, %v390
        %v392 = vrot.slane %v331, 1
        %v393 = vor.u32 %v328, %v392
        %v394 = vrot.slane %v338, 1
        %v395 = vor.u32 %v335, %v394
        %v396 = vrot.slane %v345, 1
        %v397 = vor.u32 %v342, %v396
        %v398 = vrot.slane %v352, 1
        %v399 = vor.u32 %v349, %v398
        %v400 = vrot.slane %v359, 1
        %v401 = vor.u32 %v356, %v400
        %v402 = vrot.slane %v366, 1
        %v403 = vor.u32 %v363, %v402
        %vm412 = vcmask 1043456
        %vm413 = vsmask.f32 3328
        %vm414 = vmand %vm412, %vm413
        %v415 = vsel %vm414, %v389, 0
        %v416 = vsel %vm414, %v391, 0
        %v417 = vsel %vm414, %v393, 0
        %v418 = vsel %vm414, %v395, 0
        %v419 = vsel %vm414, %v397, 0
        %v420 = vsel %vm414, %v399, 0
        %v421 = vsel %vm414, %v401, 0
        %v422 = vsel %vm414, %v403, 0
        %v438 = vunpack.c.l.b16 0
        %v439 = vunpack.c.l.b16 %v380
        %v440 = vunpack.c.l.b16 %v415
        %v441 = vunpack.c.l.b16 %v381
        %v442 = vunpack.c.l.b16 %v416
        %v443 = vunpack.c.l.b16 %v382
        %v444 = vunpack.c.l.b16 %v417
        %v445 = vunpack.c.l.b16 %v383
        %v446 = vunpack.c.l.b16 %v418
        %v447 = vunpack.c.l.b16 %v384
        %v448 = vunpack.c.l.b16 %v419
        %v449 = vunpack.c.l.b16 %v385
        %v450 = vunpack.c.l.b16 %v420
        %v451 = vunpack.c.l.b16 %v386
        %v452 = vunpack.c.l.b16 %v421
        %v453 = vld [vmem:[%s1] sm:$0xf]
        %v454 = vld [vmem:[%s1 + $0x4] sm:$0xf]
        %v455 = vld [vmem:[%s1 + $0x8] sm:$0xf]
        %v456 = vld [vmem:[%s1 + $0xc] sm:$0xf]
        %v457 = vld [vmem:[%s1 + $0x10] sm:$0xf]
        %v458 = vld [vmem:[%s1 + $0x14] sm:$0xf]
        %v459 = vld [vmem:[%s1 + $0x18] sm:$0xf]
        %v460 = vld [vmem:[%s1 + $0x1c] sm:$0xf]
        %v461 = vld [vmem:[%s1 + $0x20] sm:$0xf]
        %v462 = vld [vmem:[%s1 + $0x24] sm:$0xf]
        %v463 = vld [vmem:[%s1 + $0x28] sm:$0xf]
        %v464 = vld [vmem:[%s1 + $0x2c] sm:$0xf]
        %v465 = vld [vmem:[%s1 + $0x30] sm:$0xf]
        %v466 = vld [vmem:[%s1 + $0x34] sm:$0xf]
        %v467 = vld [vmem:[%s1 + $0x38] sm:$0xf]
        %v468 = vld [vmem:[%s1 + $0x3c] sm:$0xf]
        %v469 = vld [vmem:[%s1 + $0x40] sm:$0xf]
        %v470 = vld [vmem:[%s1 + $0x44] sm:$0xf]
        %v471 = vld [vmem:[%s1 + $0x48] sm:$0xf]
        %v472 = vld [vmem:[%s1 + $0x4c] sm:$0xf]
        %v473 = vld [vmem:[%s1 + $0x50] sm:$0xf]
        %v474 = vld [vmem:[%s1 + $0x54] sm:$0xf]
        %v475 = vld [vmem:[%s1 + $0x58] sm:$0xf]
        %v476 = vld [vmem:[%s1 + $0x5c] sm:$0xf]
        %v477 = vld [vmem:[%s1 + $0x60] sm:$0xf]
        %v478 = vld [vmem:[%s1 + $0x64] sm:$0xf]
        %v479 = vld [vmem:[%s1 + $0x68] sm:$0xf]
        %v480 = vld [vmem:[%s1 + $0x6c] sm:$0xf]
        %v481 = vld [vmem:[%s1 + $0x70] sm:$0xf]
        %v482 = vld [vmem:[%s1 + $0x74] sm:$0xf]
        %v483 = vld [vmem:[%s1 + $0x78] sm:$0xf]
        %v484 = vld [vmem:[%s1 + $0x7c] sm:$0xf]
        %v485 = vld [vmem:[%s1 + $0x80] sm:$0xf]
        %v486 = vld [vmem:[%s1 + $0x84] sm:$0xf]
        %v487 = vld [vmem:[%s1 + $0x88] sm:$0xf]
        %v488 = vld [vmem:[%s1 + $0x8c] sm:$0xf]
        %v489 = vld [vmem:[%s1 + $0x90] sm:$0xf]
        %v490 = vld [vmem:[%s1 + $0x94] sm:$0xf]
        %v491 = vld [vmem:[%s1 + $0x98] sm:$0xf]
        %v492 = vld [vmem:[%s1 + $0x9c] sm:$0xf]
        %v493 = vld [vmem:[%s1 + $0xa0] sm:$0xf]
        %v494 = vld [vmem:[%s1 + $0xa4] sm:$0xf]
        %v495 = vld [vmem:[%s1 + $0xa8] sm:$0xf]
        %v496 = vld [vmem:[%s1 + $0xac] sm:$0xf]
        %v497 = vld [vmem:[%s1 + $0xb0] sm:$0xf]
        %v498 = vld [vmem:[%s1 + $0xb4] sm:$0xf]
        %v499 = vld [vmem:[%s1 + $0xb8] sm:$0xf]
        %v500 = vld [vmem:[%s1 + $0xbc] sm:$0xf]
        %v503 = vunpack.c.l.b16 %v387
        %v504 = vunpack.c.l.b16 %v422
        %s505 = scalar_lea.vmem %s1, 192
        %v506 = vld [vmem:[%s505] sm:$0xf]
        %v507 = vld [vmem:[%s505 + $0x4] sm:$0xf]
        %v508 = vld [vmem:[%s505 + $0x8] sm:$0xf]
        %v509 = vld [vmem:[%s505 + $0xc] sm:$0xf]
        %v510 = vld [vmem:[%s505 + $0x10] sm:$0xf]
        %v511 = vld [vmem:[%s505 + $0x14] sm:$0xf]
        %v512 = vld [vmem:[%s505 + $0x18] sm:$0xf]
        %v513 = vld [vmem:[%s505 + $0x1c] sm:$0xf]
        %v514 = vld [vmem:[%s505 + $0x20] sm:$0xf]
        %v515 = vld [vmem:[%s505 + $0x24] sm:$0xf]
        %v516 = vld [vmem:[%s505 + $0x28] sm:$0xf]
        %v517 = vld [vmem:[%s505 + $0x2c] sm:$0xf]
        %v518 = vld [vmem:[%s505 + $0x30] sm:$0xf]
        %v519 = vld [vmem:[%s505 + $0x34] sm:$0xf]
        %v520 = vld [vmem:[%s505 + $0x38] sm:$0xf]
        %v521 = vld [vmem:[%s505 + $0x3c] sm:$0xf]
        %v522 = vld [vmem:[%s505 + $0x40] sm:$0xf]
        %v523 = vld [vmem:[%s505 + $0x44] sm:$0xf]
        %v524 = vld [vmem:[%s505 + $0x48] sm:$0xf]
        %v525 = vld [vmem:[%s505 + $0x4c] sm:$0xf]
        %v526 = vld [vmem:[%s505 + $0x50] sm:$0xf]
        %v527 = vld [vmem:[%s505 + $0x54] sm:$0xf]
        %v528 = vld [vmem:[%s505 + $0x58] sm:$0xf]
        %v529 = vld [vmem:[%s505 + $0x5c] sm:$0xf]
        %v530 = vld [vmem:[%s505 + $0x60] sm:$0xf]
        %v531 = vld [vmem:[%s505 + $0x64] sm:$0xf]
        %v532 = vld [vmem:[%s505 + $0x68] sm:$0xf]
        %v533 = vld [vmem:[%s505 + $0x6c] sm:$0xf]
        %v534 = vld [vmem:[%s505 + $0x70] sm:$0xf]
        %v535 = vld [vmem:[%s505 + $0x74] sm:$0xf]
        %v536 = vld [vmem:[%s505 + $0x78] sm:$0xf]
        %v537 = vld [vmem:[%s505 + $0x7c] sm:$0xf]
        %v538 = vld [vmem:[%s505 + $0x80] sm:$0xf]
        %v539 = vld [vmem:[%s505 + $0x84] sm:$0xf]
        %v540 = vld [vmem:[%s505 + $0x88] sm:$0xf]
        %v541 = vld [vmem:[%s505 + $0x8c] sm:$0xf]
        %v542 = vld [vmem:[%s505 + $0x90] sm:$0xf]
        %v543 = vld [vmem:[%s505 + $0x94] sm:$0xf]
        %v544 = vld [vmem:[%s505 + $0x98] sm:$0xf]
        %v545 = vld [vmem:[%s505 + $0x9c] sm:$0xf]
        %v546 = vld [vmem:[%s505 + $0xa0] sm:$0xf]
        %v547 = vld [vmem:[%s505 + $0xa4] sm:$0xf]
        %v548 = vld [vmem:[%s505 + $0xa8] sm:$0xf]
        %v549 = vld [vmem:[%s505 + $0xac] sm:$0xf]
        %v550 = vld [vmem:[%s505 + $0xb0] sm:$0xf]
        %v551 = vld [vmem:[%s505 + $0xb4] sm:$0xf]
        %v552 = vld [vmem:[%s505 + $0xb8] sm:$0xf]
        %v553 = vld [vmem:[%s505 + $0xbc] sm:$0xf]
        %v554 = vpack.c.b16 %v441, %v439
        %v555 = vpack.c.b16 %v298, %v297
        %v556 = vpack.c.b16 %v442, %v440
        %v557 = vpack.c.b16 %v445, %v443
        %v558 = vpack.c.b16 %v300, %v299
        %v559 = vpack.c.b16 %v446, %v444
        %v560 = vpack.c.b16 %v449, %v447
        %v561 = vpack.c.b16 %v302, %v301
        %v562 = vpack.c.b16 %v450, %v448
        %v563 = vpack.c.b16 %v503, %v451
        %v564 = vpack.c.b16 %v304, %v303
        %v565 = vpack.c.b16 %v504, %v452
        %v626 = vunpack.c.l.b16 %v506
        %v627 = vunpack.c.l.b16 %v507
        %v628 = vunpack.c.l.b16 %v508
        %v629 = vunpack.c.l.b16 %v509
        %v630 = vunpack.c.l.b16 %v510
        %v631 = vunpack.c.l.b16 %v511
        %v632 = vunpack.c.l.b16 %v512
        %v633 = vunpack.c.l.b16 %v513
        %v634 = vunpack.c.l.b16 %v514
        %v635 = vunpack.c.l.b16 %v515
        %v636 = vunpack.c.l.b16 %v516
        %v637 = vunpack.c.l.b16 %v517
        %v638 = vunpack.c.l.b16 %v518
        %v639 = vunpack.c.l.b16 %v519
        %v640 = vunpack.c.l.b16 %v520
        %v641 = vunpack.c.l.b16 %v521
        %v642 = vunpack.c.l.b16 %v522
        %v643 = vunpack.c.l.b16 %v523
        %v644 = vunpack.c.l.b16 %v524
        %v645 = vunpack.c.l.b16 %v525
        %v646 = vunpack.c.l.b16 %v526
        %v647 = vunpack.c.l.b16 %v527
        %v648 = vunpack.c.l.b16 %v528
        %v649 = vunpack.c.l.b16 %v529
        %v650 = vunpack.c.l.b16 %v530
        %v651 = vunpack.c.l.b16 %v531
        %v652 = vunpack.c.l.b16 %v532
        %v653 = vunpack.c.l.b16 %v533
        %v654 = vunpack.c.l.b16 %v534
        %v655 = vunpack.c.l.b16 %v535
        %v656 = vunpack.c.l.b16 %v536
        %v657 = vunpack.c.l.b16 %v537
        %v658 = vunpack.c.l.b16 %v538
        %v659 = vunpack.c.l.b16 %v539
        %v660 = vunpack.c.l.b16 %v540
        %v661 = vunpack.c.l.b16 %v541
        %v662 = vunpack.c.l.b16 %v542
        %v663 = vunpack.c.l.b16 %v543
        %v664 = vunpack.c.l.b16 %v544
        %v665 = vunpack.c.l.b16 %v545
        %v666 = vunpack.c.l.b16 %v546
        %v667 = vunpack.c.l.b16 %v547
        %v668 = vunpack.c.l.b16 %v548
        %v669 = vunpack.c.l.b16 %v549
        %v670 = vunpack.c.l.b16 %v550
        %v671 = vunpack.c.l.b16 %v551
        %v672 = vunpack.c.l.b16 %v552
        %v673 = vunpack.c.l.b16 %v553
        %v674 = vpack.c.b16 %v627, %v626
        %v675 = vpack.c.b16 %v629, %v628
        %v676 = vpack.c.b16 %v631, %v630
        %v677 = vpack.c.b16 %v633, %v632
        %v678 = vpack.c.b16 %v635, %v634
        %v679 = vpack.c.b16 %v637, %v636
        %v680 = vpack.c.b16 %v639, %v638
        %v681 = vpack.c.b16 %v641, %v640
        %v682 = vpack.c.b16 %v643, %v642
        %v683 = vpack.c.b16 %v645, %v644
        %v684 = vpack.c.b16 %v647, %v646
        %v685 = vpack.c.b16 %v649, %v648
        %v686 = vpack.c.b16 %v651, %v650
        %v687 = vpack.c.b16 %v653, %v652
        %v688 = vpack.c.b16 %v655, %v654
        %v689 = vpack.c.b16 %v657, %v656
        %v690 = vpack.c.b16 %v659, %v658
        %v691 = vpack.c.b16 %v661, %v660
        %v692 = vpack.c.b16 %v663, %v662
        %v693 = vpack.c.b16 %v665, %v664
        %v694 = vpack.c.b16 %v667, %v666
        %v695 = vpack.c.b16 %v669, %v668
        %v696 = vpack.c.b16 %v671, %v670
        %v697 = vpack.c.b16 %v673, %v672
        %722 = vmatprep.subr.bf16.mxu0 0
        %723 = vmatpush1.bf16.msra.mxu0 %v674
        %724 = vmatprep.subr.bf16.mxu0 0
        %725 = vmatpush1.bf16.msra.mxu0 %v675
        %726 = vmatprep.subr.bf16.mxu0 0
        %727 = vmatpush1.bf16.msra.mxu0 %v676
        %728 = vmatprep.subr.bf16.mxu0 0
        %729 = vmatpush1.bf16.msra.mxu0 %v677
        %730 = vmatprep.subr.bf16.mxu0 0
        %731 = vmatpush1.bf16.msra.mxu0 %v678
        %732 = vmatprep.subr.bf16.mxu0 0
        %733 = vmatpush1.bf16.msra.mxu0 %v679
        %734 = vmatprep.subr.bf16.mxu0 0
        %735 = vmatpush1.bf16.msra.mxu0 %v680
        %736 = vmatprep.subr.bf16.mxu0 0
        %737 = vmatpush1.bf16.msra.mxu0 %v681
        %738 = vmatprep.subr.bf16.mxu0 0
        %739 = vmatpush1.bf16.msra.mxu0 %v682
        %740 = vmatprep.subr.bf16.mxu0 0
        %741 = vmatpush1.bf16.msra.mxu0 %v683
        %742 = vmatprep.subr.bf16.mxu0 0
        %743 = vmatpush1.bf16.msra.mxu0 %v684
        %744 = vmatprep.subr.bf16.mxu0 0
        %745 = vmatpush1.bf16.msra.mxu0 %v685
        %746 = vmatprep.subr.bf16.mxu0 0
        %747 = vmatpush1.bf16.msra.mxu0 %v686
        %748 = vmatprep.subr.bf16.mxu0 0
        %749 = vmatpush1.bf16.msra.mxu0 %v687
        %750 = vmatprep.subr.bf16.mxu0 0
        %751 = vmatpush1.bf16.msra.mxu0 %v688
        %752 = vmatprep.subr.bf16.mxu0 0
        %753 = vmatpush1.bf16.msra.mxu0 %v689
        %754 = vmatprep.mubr.bf16.mxu0 %v555
        %755 = vmatmul.mubr.bf16.gmra.mrb[0].mxu0 %v554
        %v756 = vpop.f32.mrb[0].mxu0
        %v757 = vadd.f32 0.0, %v756
        %v758 = vpop.f32.mrb[0].mxu0
        %v759 = vpop.f32.mrb[0].mxu0
        %v760 = vadd.f32 0.0, %v759
        %v761 = vpop.f32.mrb[0].mxu0
        %762 = vmatprep.mubr.bf16.mxu0 %v558
        %763 = vmatmul.mubr.bf16.gmra.mrb[0].mxu0 %v557
        %v764 = vpop.f32.mrb[0].mxu0
        %v765 = vadd.f32 0.0, %v764
        %v766 = vpop.f32.mrb[0].mxu0
        %v767 = vpop.f32.mrb[0].mxu0
        %v768 = vadd.f32 0.0, %v767
        %v769 = vpop.f32.mrb[0].mxu0
        %770 = vmatprep.mubr.bf16.mxu0 %v561
        %771 = vmatmul.mubr.bf16.gmra.mrb[0].mxu0 %v560
        %v772 = vpop.f32.mrb[0].mxu0
        %v773 = vadd.f32 0.0, %v772
        %v774 = vpop.f32.mrb[0].mxu0
        %v775 = vpop.f32.mrb[0].mxu0
        %v776 = vadd.f32 0.0, %v775
        %v777 = vpop.f32.mrb[0].mxu0
        %778 = vmatprep.mubr.bf16.mxu0 %v564
        %779 = vmatmul.mubr.bf16.gmra.mrb[0].mxu0 %v563
        %v780 = vpop.f32.mrb[0].mxu0
        %v781 = vadd.f32 0.0, %v780
        %v782 = vpop.f32.mrb[0].mxu0
        %v783 = vpop.f32.mrb[0].mxu0
        %v784 = vadd.f32 0.0, %v783
        %v785 = vpop.f32.mrb[0].mxu0
        %786 = vdwg.mxu0
        %787 = vmatprep.subr.bf16.mxu0 0
        %788 = vmatpush1.bf16.msra.mxu0 %v690
        %789 = vmatprep.subr.bf16.mxu0 0
        %790 = vmatpush1.bf16.msra.mxu0 %v691
        %791 = vmatprep.subr.bf16.mxu0 0
        %792 = vmatpush1.bf16.msra.mxu0 %v692
        %793 = vmatprep.subr.bf16.mxu0 0
        %794 = vmatpush1.bf16.msra.mxu0 %v693
        %795 = vmatprep.subr.bf16.mxu0 0
        %796 = vmatpush1.bf16.msra.mxu0 %v694
        %797 = vmatprep.subr.bf16.mxu0 0
        %798 = vmatpush1.bf16.msra.mxu0 %v695
        %799 = vmatprep.subr.bf16.mxu0 0
        %800 = vmatpush1.bf16.msra.mxu0 %v696
        %801 = vmatprep.subr.bf16.mxu0 0
        %802 = vmatpush1.bf16.msra.mxu0 %v697
        %803 = vmatprep.subr.bf16.mxu0 0
        %804 = vmatpush1.bf16.msra.mxu0 0
        %805 = vmatprep.subr.bf16.mxu0 0
        %806 = vmatpush1.bf16.msra.mxu0 0
        %807 = vmatprep.subr.bf16.mxu0 0
        %808 = vmatpush1.bf16.msra.mxu0 0
        %809 = vmatprep.subr.bf16.mxu0 0
        %810 = vmatpush1.bf16.msra.mxu0 0
        %811 = vmatprep.subr.bf16.mxu0 0
        %812 = vmatpush1.bf16.msra.mxu0 0
        %813 = vmatprep.subr.bf16.mxu0 0
        %814 = vmatpush1.bf16.msra.mxu0 0
        %815 = vmatprep.subr.bf16.mxu0 0
        %816 = vmatpush1.bf16.msra.mxu0 0
        %817 = vmatprep.subr.bf16.mxu0 0
        %818 = vmatpush1.bf16.msra.mxu0 0
        %819 = vmatprep.mubr.bf16.mxu0 0
        %820 = vmatmul.mubr.bf16.gmra.mrb[0].mxu0 %v556
        %v821 = vpop.f32.mrb[0].mxu0
        %v822 = vadd.f32 %v757, %v821
        %v823 = vpop.f32.mrb[0].mxu0
        %v824 = vpop.f32.mrb[0].mxu0
        %v825 = vadd.f32 %v760, %v824
        %v826 = vpop.f32.mrb[0].mxu0
        %827 = vmatprep.mubr.bf16.mxu0 0
        %828 = vmatmul.mubr.bf16.gmra.mrb[0].mxu0 %v559
        %v829 = vpop.f32.mrb[0].mxu0
        %v830 = vadd.f32 %v765, %v829
        %v831 = vpop.f32.mrb[0].mxu0
        %v832 = vpop.f32.mrb[0].mxu0
        %v833 = vadd.f32 %v768, %v832
        %v834 = vpop.f32.mrb[0].mxu0
        %835 = vmatprep.mubr.bf16.mxu0 0
        %836 = vmatmul.mubr.bf16.gmra.mrb[0].mxu0 %v562
        %v837 = vpop.f32.mrb[0].mxu0
        %v838 = vadd.f32 %v773, %v837
        %v839 = vpop.f32.mrb[0].mxu0
        %v840 = vpop.f32.mrb[0].mxu0
        %v841 = vadd.f32 %v776, %v840
        %v842 = vpop.f32.mrb[0].mxu0
        %843 = vmatprep.mubr.bf16.mxu0 0
        %844 = vmatmul.mubr.bf16.gmra.mrb[0].mxu0 %v565
        %v845 = vpop.f32.mrb[0].mxu0
        %v846 = vadd.f32 %v781, %v845
        %v847 = vpop.f32.mrb[0].mxu0
        %v848 = vpop.f32.mrb[0].mxu0
        %v849 = vadd.f32 %v784, %v848
        %v850 = vpop.f32.mrb[0].mxu0
        %851 = vdwg.mxu0
        %v852 = vpack.c.b16 %v439, %v438
        %v853 = vpack.c.b16 %v297, %v438
        %v854 = vpack.c.b16 %v440, %v438
        %v855 = vpack.c.b16 %v443, %v441
        %v856 = vpack.c.b16 %v299, %v298
        %v857 = vpack.c.b16 %v444, %v442
        %v858 = vpack.c.b16 %v447, %v445
        %v859 = vpack.c.b16 %v301, %v300
        %v860 = vpack.c.b16 %v448, %v446
        %v861 = vpack.c.b16 %v451, %v449
        %v862 = vpack.c.b16 %v303, %v302
        %v863 = vpack.c.b16 %v452, %v450
        %v924 = vunpack.c.l.b16 %v453
        %v925 = vunpack.c.l.b16 %v454
        %v926 = vunpack.c.l.b16 %v455
        %v927 = vunpack.c.l.b16 %v456
        %v928 = vunpack.c.l.b16 %v457
        %v929 = vunpack.c.l.b16 %v458
        %v930 = vunpack.c.l.b16 %v459
        %v931 = vunpack.c.l.b16 %v460
        %v932 = vunpack.c.l.b16 %v461
        %v933 = vunpack.c.l.b16 %v462
        %v934 = vunpack.c.l.b16 %v463
        %v935 = vunpack.c.l.b16 %v464
        %v936 = vunpack.c.l.b16 %v465
        %v937 = vunpack.c.l.b16 %v466
        %v938 = vunpack.c.l.b16 %v467
        %v939 = vunpack.c.l.b16 %v468
        %v940 = vunpack.c.l.b16 %v469
        %v941 = vunpack.c.l.b16 %v470
        %v942 = vunpack.c.l.b16 %v471
        %v943 = vunpack.c.l.b16 %v472
        %v944 = vunpack.c.l.b16 %v473
        %v945 = vunpack.c.l.b16 %v474
        %v946 = vunpack.c.l.b16 %v475
        %v947 = vunpack.c.l.b16 %v476
        %v948 = vunpack.c.l.b16 %v477
        %v949 = vunpack.c.l.b16 %v478
        %v950 = vunpack.c.l.b16 %v479
        %v951 = vunpack.c.l.b16 %v480
        %v952 = vunpack.c.l.b16 %v481
        %v953 = vunpack.c.l.b16 %v482
        %v954 = vunpack.c.l.b16 %v483
        %v955 = vunpack.c.l.b16 %v484
        %v956 = vunpack.c.l.b16 %v485
        %v957 = vunpack.c.l.b16 %v486
        %v958 = vunpack.c.l.b16 %v487
        %v959 = vunpack.c.l.b16 %v488
        %v960 = vunpack.c.l.b16 %v489
        %v961 = vunpack.c.l.b16 %v490
        %v962 = vunpack.c.l.b16 %v491
        %v963 = vunpack.c.l.b16 %v492
        %v964 = vunpack.c.l.b16 %v493
        %v965 = vunpack.c.l.b16 %v494
        %v966 = vunpack.c.l.b16 %v495
        %v967 = vunpack.c.l.b16 %v496
        %v968 = vunpack.c.l.b16 %v497
        %v969 = vunpack.c.l.b16 %v498
        %v970 = vunpack.c.l.b16 %v499
        %v971 = vunpack.c.l.b16 %v500
        %v972 = vpack.c.b16 %v925, %v924
        %v973 = vpack.c.b16 %v927, %v926
        %v974 = vpack.c.b16 %v929, %v928
        %v975 = vpack.c.b16 %v931, %v930
        %v976 = vpack.c.b16 %v933, %v932
        %v977 = vpack.c.b16 %v935, %v934
        %v978 = vpack.c.b16 %v937, %v936
        %v979 = vpack.c.b16 %v939, %v938
        %v980 = vpack.c.b16 %v941, %v940
        %v981 = vpack.c.b16 %v943, %v942
        %v982 = vpack.c.b16 %v945, %v944
        %v983 = vpack.c.b16 %v947, %v946
        %v984 = vpack.c.b16 %v949, %v948
        %v985 = vpack.c.b16 %v951, %v950
        %v986 = vpack.c.b16 %v953, %v952
        %v987 = vpack.c.b16 %v955, %v954
        %v988 = vpack.c.b16 %v957, %v956
        %v989 = vpack.c.b16 %v959, %v958
        %v990 = vpack.c.b16 %v961, %v960
        %v991 = vpack.c.b16 %v963, %v962
        %v992 = vpack.c.b16 %v965, %v964
        %v993 = vpack.c.b16 %v967, %v966
        %v994 = vpack.c.b16 %v969, %v968
        %v995 = vpack.c.b16 %v971, %v970
        %1020 = vmatprep.subr.bf16.mxu0 0
        %1021 = vmatpush1.bf16.msra.mxu0 %v972
        %1022 = vmatprep.subr.bf16.mxu0 0
        %1023 = vmatpush1.bf16.msra.mxu0 %v973
        %1024 = vmatprep.subr.bf16.mxu0 0
        %1025 = vmatpush1.bf16.msra.mxu0 %v974
        %1026 = vmatprep.subr.bf16.mxu0 0
        %1027 = vmatpush1.bf16.msra.mxu0 %v975
        %1028 = vmatprep.subr.bf16.mxu0 0
        %1029 = vmatpush1.bf16.msra.mxu0 %v976
        %1030 = vmatprep.subr.bf16.mxu0 0
        %1031 = vmatpush1.bf16.msra.mxu0 %v977
        %1032 = vmatprep.subr.bf16.mxu0 0
        %1033 = vmatpush1.bf16.msra.mxu0 %v978
        %1034 = vmatprep.subr.bf16.mxu0 0
        %1035 = vmatpush1.bf16.msra.mxu0 %v979
        %1036 = vmatprep.subr.bf16.mxu0 0
        %1037 = vmatpush1.bf16.msra.mxu0 %v980
        %1038 = vmatprep.subr.bf16.mxu0 0
        %1039 = vmatpush1.bf16.msra.mxu0 %v981
        %1040 = vmatprep.subr.bf16.mxu0 0
        %1041 = vmatpush1.bf16.msra.mxu0 %v982
        %1042 = vmatprep.subr.bf16.mxu0 0
        %1043 = vmatpush1.bf16.msra.mxu0 %v983
        %1044 = vmatprep.subr.bf16.mxu0 0
        %1045 = vmatpush1.bf16.msra.mxu0 %v984
        %1046 = vmatprep.subr.bf16.mxu0 0
        %1047 = vmatpush1.bf16.msra.mxu0 %v985
        %1048 = vmatprep.subr.bf16.mxu0 0
        %1049 = vmatpush1.bf16.msra.mxu0 %v986
        %1050 = vmatprep.subr.bf16.mxu0 0
        %1051 = vmatpush1.bf16.msra.mxu0 %v987
        %1052 = vmatprep.mubr.bf16.mxu0 %v853
        %1053 = vmatmul.mubr.bf16.gmra.mrb[0].mxu0 %v852
        %v1054 = vpop.f32.mrb[0].mxu0
        %v1055 = vadd.f32 %v822, %v1054
        %v1056 = vpop.f32.mrb[0].mxu0
        %v1057 = vpop.f32.mrb[0].mxu0
        %v1058 = vadd.f32 %v825, %v1057
        %v1059 = vpop.f32.mrb[0].mxu0
        %1060 = vmatprep.mubr.bf16.mxu0 %v856
        %1061 = vmatmul.mubr.bf16.gmra.mrb[0].mxu0 %v855
        %v1062 = vpop.f32.mrb[0].mxu0
        %v1063 = vadd.f32 %v830, %v1062
        %v1064 = vpop.f32.mrb[0].mxu0
        %v1065 = vpop.f32.mrb[0].mxu0
        %v1066 = vadd.f32 %v833, %v1065
        %v1067 = vpop.f32.mrb[0].mxu0
        %1068 = vmatprep.mubr.bf16.mxu0 %v859
        %1069 = vmatmul.mubr.bf16.gmra.mrb[0].mxu0 %v858
        %v1070 = vpop.f32.mrb[0].mxu0
        %v1071 = vadd.f32 %v838, %v1070
        %v1072 = vpop.f32.mrb[0].mxu0
        %v1073 = vpop.f32.mrb[0].mxu0
        %v1074 = vadd.f32 %v841, %v1073
        %v1075 = vpop.f32.mrb[0].mxu0
        %1076 = vmatprep.mubr.bf16.mxu0 %v862
        %1077 = vmatmul.mubr.bf16.gmra.mrb[0].mxu0 %v861
        %v1078 = vpop.f32.mrb[0].mxu0
        %v1079 = vadd.f32 %v846, %v1078
        %v1080 = vpop.f32.mrb[0].mxu0
        %v1081 = vpop.f32.mrb[0].mxu0
        %v1082 = vadd.f32 %v849, %v1081
        %v1083 = vpop.f32.mrb[0].mxu0
        %1084 = vdwg.mxu0
        %1085 = vmatprep.subr.bf16.mxu0 0
        %1086 = vmatpush1.bf16.msra.mxu0 %v988
        %1087 = vmatprep.subr.bf16.mxu0 0
        %1088 = vmatpush1.bf16.msra.mxu0 %v989
        %1089 = vmatprep.subr.bf16.mxu0 0
        %1090 = vmatpush1.bf16.msra.mxu0 %v990
        %1091 = vmatprep.subr.bf16.mxu0 0
        %1092 = vmatpush1.bf16.msra.mxu0 %v991
        %1093 = vmatprep.subr.bf16.mxu0 0
        %1094 = vmatpush1.bf16.msra.mxu0 %v992
        %1095 = vmatprep.subr.bf16.mxu0 0
        %1096 = vmatpush1.bf16.msra.mxu0 %v993
        %1097 = vmatprep.subr.bf16.mxu0 0
        %1098 = vmatpush1.bf16.msra.mxu0 %v994
        %1099 = vmatprep.subr.bf16.mxu0 0
        %1100 = vmatpush1.bf16.msra.mxu0 %v995
        %1101 = vmatprep.subr.bf16.mxu0 0
        %1102 = vmatpush1.bf16.msra.mxu0 0
        %1103 = vmatprep.subr.bf16.mxu0 0
        %1104 = vmatpush1.bf16.msra.mxu0 0
        %1105 = vmatprep.subr.bf16.mxu0 0
        %1106 = vmatpush1.bf16.msra.mxu0 0
        %1107 = vmatprep.subr.bf16.mxu0 0
        %1108 = vmatpush1.bf16.msra.mxu0 0
        %1109 = vmatprep.subr.bf16.mxu0 0
        %1110 = vmatpush1.bf16.msra.mxu0 0
        %1111 = vmatprep.subr.bf16.mxu0 0
        %1112 = vmatpush1.bf16.msra.mxu0 0
        %1113 = vmatprep.subr.bf16.mxu0 0
        %1114 = vmatpush1.bf16.msra.mxu0 0
        %1115 = vmatprep.subr.bf16.mxu0 0
        %1116 = vmatpush1.bf16.msra.mxu0 0
        %1117 = vmatprep.mubr.bf16.mxu0 0
        %1118 = vmatmul.mubr.bf16.gmra.mrb[0].mxu0 %v854
        %v1119 = vpop.f32.mrb[0].mxu0
        %v1120 = vadd.f32 %v1055, %v1119
        %v1121 = vpop.f32.mrb[0].mxu0
        %v1122 = vpop.f32.mrb[0].mxu0
        %v1123 = vadd.f32 %v1058, %v1122
        %v1124 = vpop.f32.mrb[0].mxu0
        %1125 = vmatprep.mubr.bf16.mxu0 0
        %1126 = vmatmul.mubr.bf16.gmra.mrb[0].mxu0 %v857
        %v1127 = vpop.f32.mrb[0].mxu0
        %v1128 = vadd.f32 %v1063, %v1127
        %v1129 = vpop.f32.mrb[0].mxu0
        %v1130 = vpop.f32.mrb[0].mxu0
        %v1131 = vadd.f32 %v1066, %v1130
        %v1132 = vpop.f32.mrb[0].mxu0
        %1133 = vmatprep.mubr.bf16.mxu0 0
        %1134 = vmatmul.mubr.bf16.gmra.mrb[0].mxu0 %v860
        %v1135 = vpop.f32.mrb[0].mxu0
        %v1136 = vadd.f32 %v1071, %v1135
        %v1137 = vpop.f32.mrb[0].mxu0
        %v1138 = vpop.f32.mrb[0].mxu0
        %v1139 = vadd.f32 %v1074, %v1138
        %v1140 = vpop.f32.mrb[0].mxu0
        %1141 = vmatprep.mubr.bf16.mxu0 0
        %1142 = vmatmul.mubr.bf16.gmra.mrb[0].mxu0 %v863
        %v1143 = vpop.f32.mrb[0].mxu0
        %v1144 = vadd.f32 %v1079, %v1143
        %v1145 = vpop.f32.mrb[0].mxu0
        %v1146 = vpop.f32.mrb[0].mxu0
        %v1147 = vadd.f32 %v1082, %v1146
        %v1148 = vpop.f32.mrb[0].mxu0
        %1149 = vdwg.mxu0
        %s1150 = scalar_lea.vmem %s1, 384
        %v1151 = vld [vmem:[%s1150] sm:$0xf]
        %v1152 = vld [vmem:[%s1150 + $0x4] sm:$0xf]
        %v1153 = vld [vmem:[%s1150 + $0x8] sm:$0xf]
        %v1154 = vld [vmem:[%s1150 + $0xc] sm:$0xf]
        %v1155 = vld [vmem:[%s1150 + $0x10] sm:$0xf]
        %v1156 = vld [vmem:[%s1150 + $0x14] sm:$0xf]
        %v1157 = vld [vmem:[%s1150 + $0x18] sm:$0xf]
        %v1158 = vld [vmem:[%s1150 + $0x1c] sm:$0xf]
        %v1159 = vld [vmem:[%s1150 + $0x20] sm:$0xf]
        %v1160 = vld [vmem:[%s1150 + $0x24] sm:$0xf]
        %v1161 = vld [vmem:[%s1150 + $0x28] sm:$0xf]
        %v1162 = vld [vmem:[%s1150 + $0x2c] sm:$0xf]
        %v1163 = vld [vmem:[%s1150 + $0x30] sm:$0xf]
        %v1164 = vld [vmem:[%s1150 + $0x34] sm:$0xf]
        %v1165 = vld [vmem:[%s1150 + $0x38] sm:$0xf]
        %v1166 = vld [vmem:[%s1150 + $0x3c] sm:$0xf]
        %v1167 = vld [vmem:[%s1150 + $0x40] sm:$0xf]
        %v1168 = vld [vmem:[%s1150 + $0x44] sm:$0xf]
        %v1169 = vld [vmem:[%s1150 + $0x48] sm:$0xf]
        %v1170 = vld [vmem:[%s1150 + $0x4c] sm:$0xf]
        %v1171 = vld [vmem:[%s1150 + $0x50] sm:$0xf]
        %v1172 = vld [vmem:[%s1150 + $0x54] sm:$0xf]
        %v1173 = vld [vmem:[%s1150 + $0x58] sm:$0xf]
        %v1174 = vld [vmem:[%s1150 + $0x5c] sm:$0xf]
        %v1175 = vld [vmem:[%s1150 + $0x60] sm:$0xf]
        %v1176 = vld [vmem:[%s1150 + $0x64] sm:$0xf]
        %v1177 = vld [vmem:[%s1150 + $0x68] sm:$0xf]
        %v1178 = vld [vmem:[%s1150 + $0x6c] sm:$0xf]
        %v1179 = vld [vmem:[%s1150 + $0x70] sm:$0xf]
        %v1180 = vld [vmem:[%s1150 + $0x74] sm:$0xf]
        %v1181 = vld [vmem:[%s1150 + $0x78] sm:$0xf]
        %v1182 = vld [vmem:[%s1150 + $0x7c] sm:$0xf]
        %v1183 = vld [vmem:[%s1150 + $0x80] sm:$0xf]
        %v1184 = vld [vmem:[%s1150 + $0x84] sm:$0xf]
        %v1185 = vld [vmem:[%s1150 + $0x88] sm:$0xf]
        %v1186 = vld [vmem:[%s1150 + $0x8c] sm:$0xf]
        %v1187 = vld [vmem:[%s1150 + $0x90] sm:$0xf]
        %v1188 = vld [vmem:[%s1150 + $0x94] sm:$0xf]
        %v1189 = vld [vmem:[%s1150 + $0x98] sm:$0xf]
        %v1190 = vld [vmem:[%s1150 + $0x9c] sm:$0xf]
        %v1191 = vld [vmem:[%s1150 + $0xa0] sm:$0xf]
        %v1192 = vld [vmem:[%s1150 + $0xa4] sm:$0xf]
        %v1193 = vld [vmem:[%s1150 + $0xa8] sm:$0xf]
        %v1194 = vld [vmem:[%s1150 + $0xac] sm:$0xf]
        %v1195 = vld [vmem:[%s1150 + $0xb0] sm:$0xf]
        %v1196 = vld [vmem:[%s1150 + $0xb4] sm:$0xf]
        %v1197 = vld [vmem:[%s1150 + $0xb8] sm:$0xf]
        %v1198 = vld [vmem:[%s1150 + $0xbc] sm:$0xf]
        %v1199 = vpack.c.b16 %v438, %v503
        %v1200 = vpack.c.b16 %v438, %v304
        %v1201 = vpack.c.b16 %v438, %v504
        %v1253 = vunpack.c.l.b16 %v1151
        %v1254 = vunpack.c.l.b16 %v1152
        %v1255 = vunpack.c.l.b16 %v1153
        %v1256 = vunpack.c.l.b16 %v1154
        %v1257 = vunpack.c.l.b16 %v1155
        %v1258 = vunpack.c.l.b16 %v1156
        %v1259 = vunpack.c.l.b16 %v1157
        %v1260 = vunpack.c.l.b16 %v1158
        %v1261 = vunpack.c.l.b16 %v1159
        %v1262 = vunpack.c.l.b16 %v1160
        %v1263 = vunpack.c.l.b16 %v1161
        %v1264 = vunpack.c.l.b16 %v1162
        %v1265 = vunpack.c.l.b16 %v1163
        %v1266 = vunpack.c.l.b16 %v1164
        %v1267 = vunpack.c.l.b16 %v1165
        %v1268 = vunpack.c.l.b16 %v1166
        %v1269 = vunpack.c.l.b16 %v1167
        %v1270 = vunpack.c.l.b16 %v1168
        %v1271 = vunpack.c.l.b16 %v1169
        %v1272 = vunpack.c.l.b16 %v1170
        %v1273 = vunpack.c.l.b16 %v1171
        %v1274 = vunpack.c.l.b16 %v1172
        %v1275 = vunpack.c.l.b16 %v1173
        %v1276 = vunpack.c.l.b16 %v1174
        %v1277 = vunpack.c.l.b16 %v1175
        %v1278 = vunpack.c.l.b16 %v1176
        %v1279 = vunpack.c.l.b16 %v1177
        %v1280 = vunpack.c.l.b16 %v1178
        %v1281 = vunpack.c.l.b16 %v1179
        %v1282 = vunpack.c.l.b16 %v1180
        %v1283 = vunpack.c.l.b16 %v1181
        %v1284 = vunpack.c.l.b16 %v1182
        %v1285 = vunpack.c.l.b16 %v1183
        %v1286 = vunpack.c.l.b16 %v1184
        %v1287 = vunpack.c.l.b16 %v1185
        %v1288 = vunpack.c.l.b16 %v1186
        %v1289 = vunpack.c.l.b16 %v1187
        %v1290 = vunpack.c.l.b16 %v1188
        %v1291 = vunpack.c.l.b16 %v1189
        %v1292 = vunpack.c.l.b16 %v1190
        %v1293 = vunpack.c.l.b16 %v1191
        %v1294 = vunpack.c.l.b16 %v1192
        %v1295 = vunpack.c.l.b16 %v1193
        %v1296 = vunpack.c.l.b16 %v1194
        %v1297 = vunpack.c.l.b16 %v1195
        %v1298 = vunpack.c.l.b16 %v1196
        %v1299 = vunpack.c.l.b16 %v1197
        %v1300 = vunpack.c.l.b16 %v1198
        %v1301 = vpack.c.b16 %v1254, %v1253
        %v1302 = vpack.c.b16 %v1256, %v1255
        %v1303 = vpack.c.b16 %v1258, %v1257
        %v1304 = vpack.c.b16 %v1260, %v1259
        %v1305 = vpack.c.b16 %v1262, %v1261
        %v1306 = vpack.c.b16 %v1264, %v1263
        %v1307 = vpack.c.b16 %v1266, %v1265
        %v1308 = vpack.c.b16 %v1268, %v1267
        %v1309 = vpack.c.b16 %v1270, %v1269
        %v1310 = vpack.c.b16 %v1272, %v1271
        %v1311 = vpack.c.b16 %v1274, %v1273
        %v1312 = vpack.c.b16 %v1276, %v1275
        %v1313 = vpack.c.b16 %v1278, %v1277
        %v1314 = vpack.c.b16 %v1280, %v1279
        %v1315 = vpack.c.b16 %v1282, %v1281
        %v1316 = vpack.c.b16 %v1284, %v1283
        %v1317 = vpack.c.b16 %v1286, %v1285
        %v1318 = vpack.c.b16 %v1288, %v1287
        %v1319 = vpack.c.b16 %v1290, %v1289
        %v1320 = vpack.c.b16 %v1292, %v1291
        %v1321 = vpack.c.b16 %v1294, %v1293
        %v1322 = vpack.c.b16 %v1296, %v1295
        %v1323 = vpack.c.b16 %v1298, %v1297
        %v1324 = vpack.c.b16 %v1300, %v1299
        %1349 = vmatprep.subr.bf16.mxu0 0
        %1350 = vmatpush1.bf16.msra.mxu0 %v1301
        %1351 = vmatprep.subr.bf16.mxu0 0
        %1352 = vmatpush1.bf16.msra.mxu0 %v1302
        %1353 = vmatprep.subr.bf16.mxu0 0
        %1354 = vmatpush1.bf16.msra.mxu0 %v1303
        %1355 = vmatprep.subr.bf16.mxu0 0
        %1356 = vmatpush1.bf16.msra.mxu0 %v1304
        %1357 = vmatprep.subr.bf16.mxu0 0
        %1358 = vmatpush1.bf16.msra.mxu0 %v1305
        %1359 = vmatprep.subr.bf16.mxu0 0
        %1360 = vmatpush1.bf16.msra.mxu0 %v1306
        %1361 = vmatprep.subr.bf16.mxu0 0
        %1362 = vmatpush1.bf16.msra.mxu0 %v1307
        %1363 = vmatprep.subr.bf16.mxu0 0
        %1364 = vmatpush1.bf16.msra.mxu0 %v1308
        %1365 = vmatprep.subr.bf16.mxu0 0
        %1366 = vmatpush1.bf16.msra.mxu0 %v1309
        %1367 = vmatprep.subr.bf16.mxu0 0
        %1368 = vmatpush1.bf16.msra.mxu0 %v1310
        %1369 = vmatprep.subr.bf16.mxu0 0
        %1370 = vmatpush1.bf16.msra.mxu0 %v1311
        %1371 = vmatprep.subr.bf16.mxu0 0
        %1372 = vmatpush1.bf16.msra.mxu0 %v1312
        %1373 = vmatprep.subr.bf16.mxu0 0
        %1374 = vmatpush1.bf16.msra.mxu0 %v1313
        %1375 = vmatprep.subr.bf16.mxu0 0
        %1376 = vmatpush1.bf16.msra.mxu0 %v1314
        %1377 = vmatprep.subr.bf16.mxu0 0
        %1378 = vmatpush1.bf16.msra.mxu0 %v1315
        %1379 = vmatprep.subr.bf16.mxu0 0
        %1380 = vmatpush1.bf16.msra.mxu0 %v1316
        %1381 = vmatprep.mubr.bf16.mxu0 %v856
        %1382 = vmatmul.mubr.bf16.gmra.mrb[0].mxu0 %v855
        %v1383 = vpop.f32.mrb[0].mxu0
        %v1384 = vadd.f32 0.0, %v1383
        %v1385 = vpop.f32.mrb[0].mxu0
        %v1386 = vpop.f32.mrb[0].mxu0
        %v1387 = vadd.f32 0.0, %v1386
        %v1388 = vpop.f32.mrb[0].mxu0
        %1389 = vmatprep.mubr.bf16.mxu0 %v859
        %1390 = vmatmul.mubr.bf16.gmra.mrb[0].mxu0 %v858
        %v1391 = vpop.f32.mrb[0].mxu0
        %v1392 = vadd.f32 0.0, %v1391
        %v1393 = vpop.f32.mrb[0].mxu0
        %v1394 = vpop.f32.mrb[0].mxu0
        %v1395 = vadd.f32 0.0, %v1394
        %v1396 = vpop.f32.mrb[0].mxu0
        %1397 = vmatprep.mubr.bf16.mxu0 %v862
        %1398 = vmatmul.mubr.bf16.gmra.mrb[0].mxu0 %v861
        %v1399 = vpop.f32.mrb[0].mxu0
        %v1400 = vadd.f32 0.0, %v1399
        %v1401 = vpop.f32.mrb[0].mxu0
        %v1402 = vpop.f32.mrb[0].mxu0
        %v1403 = vadd.f32 0.0, %v1402
        %v1404 = vpop.f32.mrb[0].mxu0
        %1405 = vmatprep.mubr.bf16.mxu0 %v1200
        %1406 = vmatmul.mubr.bf16.gmra.mrb[0].mxu0 %v1199
        %v1407 = vpop.f32.mrb[0].mxu0
        %v1408 = vadd.f32 0.0, %v1407
        %v1409 = vpop.f32.mrb[0].mxu0
        %v1410 = vpop.f32.mrb[0].mxu0
        %v1411 = vadd.f32 0.0, %v1410
        %v1412 = vpop.f32.mrb[0].mxu0
        %1413 = vdwg.mxu0
        %1414 = vmatprep.subr.bf16.mxu0 0
        %1415 = vmatpush1.bf16.msra.mxu0 %v1317
        %1416 = vmatprep.subr.bf16.mxu0 0
        %1417 = vmatpush1.bf16.msra.mxu0 %v1318
        %1418 = vmatprep.subr.bf16.mxu0 0
        %1419 = vmatpush1.bf16.msra.mxu0 %v1319
        %1420 = vmatprep.subr.bf16.mxu0 0
        %1421 = vmatpush1.bf16.msra.mxu0 %v1320
        %1422 = vmatprep.subr.bf16.mxu0 0
        %1423 = vmatpush1.bf16.msra.mxu0 %v1321
        %1424 = vmatprep.subr.bf16.mxu0 0
        %1425 = vmatpush1.bf16.msra.mxu0 %v1322
        %1426 = vmatprep.subr.bf16.mxu0 0
        %1427 = vmatpush1.bf16.msra.mxu0 %v1323
        %1428 = vmatprep.subr.bf16.mxu0 0
        %1429 = vmatpush1.bf16.msra.mxu0 %v1324
        %1430 = vmatprep.subr.bf16.mxu0 0
        %1431 = vmatpush1.bf16.msra.mxu0 0
        %1432 = vmatprep.subr.bf16.mxu0 0
        %1433 = vmatpush1.bf16.msra.mxu0 0
        %1434 = vmatprep.subr.bf16.mxu0 0
        %1435 = vmatpush1.bf16.msra.mxu0 0
        %1436 = vmatprep.subr.bf16.mxu0 0
        %1437 = vmatpush1.bf16.msra.mxu0 0
        %1438 = vmatprep.subr.bf16.mxu0 0
        %1439 = vmatpush1.bf16.msra.mxu0 0
        %1440 = vmatprep.subr.bf16.mxu0 0
        %1441 = vmatpush1.bf16.msra.mxu0 0
        %1442 = vmatprep.subr.bf16.mxu0 0
        %1443 = vmatpush1.bf16.msra.mxu0 0
        %1444 = vmatprep.subr.bf16.mxu0 0
        %1445 = vmatpush1.bf16.msra.mxu0 0
        %1446 = vmatprep.mubr.bf16.mxu0 0
        %1447 = vmatmul.mubr.bf16.gmra.mrb[0].mxu0 %v857
        %v1448 = vpop.f32.mrb[0].mxu0
        %v1449 = vadd.f32 %v1384, %v1448
        %v1450 = vpop.f32.mrb[0].mxu0
        %v1451 = vpop.f32.mrb[0].mxu0
        %v1452 = vadd.f32 %v1387, %v1451
        %v1453 = vpop.f32.mrb[0].mxu0
        %1454 = vmatprep.mubr.bf16.mxu0 0
        %1455 = vmatmul.mubr.bf16.gmra.mrb[0].mxu0 %v860
        %v1456 = vpop.f32.mrb[0].mxu0
        %v1457 = vadd.f32 %v1392, %v1456
        %v1458 = vpop.f32.mrb[0].mxu0
        %v1459 = vpop.f32.mrb[0].mxu0
        %v1460 = vadd.f32 %v1395, %v1459
        %v1461 = vpop.f32.mrb[0].mxu0
        %1462 = vmatprep.mubr.bf16.mxu0 0
        %1463 = vmatmul.mubr.bf16.gmra.mrb[0].mxu0 %v863
        %v1464 = vpop.f32.mrb[0].mxu0
        %v1465 = vadd.f32 %v1400, %v1464
        %v1466 = vpop.f32.mrb[0].mxu0
        %v1467 = vpop.f32.mrb[0].mxu0
        %v1468 = vadd.f32 %v1403, %v1467
        %v1469 = vpop.f32.mrb[0].mxu0
        %1470 = vmatprep.mubr.bf16.mxu0 0
        %1471 = vmatmul.mubr.bf16.gmra.mrb[0].mxu0 %v1201
        %v1472 = vpop.f32.mrb[0].mxu0
        %v1473 = vadd.f32 %v1408, %v1472
        %v1474 = vpop.f32.mrb[0].mxu0
        %v1475 = vpop.f32.mrb[0].mxu0
        %v1476 = vadd.f32 %v1411, %v1475
        %v1477 = vpop.f32.mrb[0].mxu0
        %1478 = vdwg.mxu0
        %v1479 = vadd.f32 %v1120, %v1449
        %v1480 = vadd.f32 %v1123, %v1452
        %v1481 = vadd.f32 %v1128, %v1457
        %v1482 = vadd.f32 %v1131, %v1460
        %v1483 = vadd.f32 %v1136, %v1465
        %v1484 = vadd.f32 %v1139, %v1468
        %v1485 = vadd.f32 %v1144, %v1473
        %v1486 = vadd.f32 %v1147, %v1476
        %v1487 = vld [vmem:[%s3] sm:$0x1]
        %v1489 = vlaneseq
        %v1490 = vshrl.u32 %v1489, 7
        %v1491 = vsub.s32 0, %v1490
        %v1492 = vrot.slane %v1487, %v1491
        %v1494 = vmul.f32 %v1479, %v1492
        %v1495 = vmul.f32 %v1480, %v1492
        %v1496 = vmul.f32 %v1481, %v1492
        %v1497 = vmul.f32 %v1482, %v1492
        %v1498 = vmul.f32 %v1483, %v1492
        %v1499 = vmul.f32 %v1484, %v1492
        %v1500 = vmul.f32 %v1485, %v1492
        %v1501 = vmul.f32 %v1486, %v1492
        %v1502 = vld [vmem:[%s4] sm:$0x1]
        %v1504 = vlaneseq
        %v1505 = vshrl.u32 %v1504, 7
        %v1506 = vsub.s32 0, %v1505
        %v1507 = vrot.slane %v1502, %v1506
        %v1509 = vadd.f32 %v1494, %v1507
        %v1510 = vadd.f32 %v1495, %v1507
        %v1511 = vadd.f32 %v1496, %v1507
        %v1512 = vadd.f32 %v1497, %v1507
        %v1513 = vadd.f32 %v1498, %v1507
        %v1514 = vadd.f32 %v1499, %v1507
        %v1515 = vadd.f32 %v1500, %v1507
        %v1516 = vadd.f32 %v1501, %v1507
        %v1517 = vmax.f32 %v1509, 0.0
        %v1518 = vmax.f32 %v1510, 0.0
        %v1519 = vmax.f32 %v1511, 0.0
        %v1520 = vmax.f32 %v1512, 0.0
        %v1521 = vmax.f32 %v1513, 0.0
        %v1522 = vmax.f32 %v1514, 0.0
        %v1523 = vmax.f32 %v1515, 0.0
        %v1524 = vmax.f32 %v1516, 0.0
        %v1525 = vpack.c.bf16 %v1517, %v1517
        %v1526 = vpack.c.bf16 %v1518, %v1518
        %v1527 = vpack.c.bf16 %v1519, %v1519
        %v1528 = vpack.c.bf16 %v1520, %v1520
        %v1529 = vpack.c.bf16 %v1521, %v1521
        %v1530 = vpack.c.bf16 %v1522, %v1522
        %v1531 = vpack.c.bf16 %v1523, %v1523
        %v1532 = vpack.c.bf16 %v1524, %v1524
        %v1534 = vshrl.u32 %v1525, 16
        %v1536 = vrot.slane %v1534, 7
        %v1537 = vshll.u32 %v1525, 16
        %v1539 = vor.u32 %v1536, %v1537
        %v1541 = vshrl.u32 %v1526, 16
        %v1543 = vrot.slane %v1541, 7
        %v1544 = vshll.u32 %v1526, 16
        %v1546 = vor.u32 %v1543, %v1544
        %v1548 = vshrl.u32 %v1527, 16
        %v1550 = vrot.slane %v1548, 7
        %v1551 = vshll.u32 %v1527, 16
        %v1553 = vor.u32 %v1550, %v1551
        %v1555 = vshrl.u32 %v1528, 16
        %v1557 = vrot.slane %v1555, 7
        %v1558 = vshll.u32 %v1528, 16
        %v1560 = vor.u32 %v1557, %v1558
        %v1562 = vshrl.u32 %v1529, 16
        %v1564 = vrot.slane %v1562, 7
        %v1565 = vshll.u32 %v1529, 16
        %v1567 = vor.u32 %v1564, %v1565
        %v1569 = vshrl.u32 %v1530, 16
        %v1571 = vrot.slane %v1569, 7
        %v1572 = vshll.u32 %v1530, 16
        %v1574 = vor.u32 %v1571, %v1572
        %v1576 = vshrl.u32 %v1531, 16
        %v1578 = vrot.slane %v1576, 7
        %v1579 = vshll.u32 %v1531, 16
        %v1581 = vor.u32 %v1578, %v1579
        %v1583 = vshrl.u32 %v1532, 16
        %v1585 = vrot.slane %v1583, 7
        %v1586 = vshll.u32 %v1532, 16
        %v1588 = vor.u32 %v1585, %v1586
        %v1597 = vsel %vm379, 0, %v1539
        %v1598 = vsel %vm379, 0, %v1546
        %v1599 = vsel %vm379, 0, %v1553
        %v1600 = vsel %vm379, 0, %v1560
        %v1601 = vsel %vm379, 0, %v1567
        %v1602 = vsel %vm379, 0, %v1574
        %v1603 = vsel %vm379, 0, %v1581
        %v1604 = vsel %vm379, 0, %v1588
        %v1605 = vrot.slane %v1537, 1
        %v1606 = vor.u32 %v1534, %v1605
        %v1607 = vrot.slane %v1544, 1
        %v1608 = vor.u32 %v1541, %v1607
        %v1609 = vrot.slane %v1551, 1
        %v1610 = vor.u32 %v1548, %v1609
        %v1611 = vrot.slane %v1558, 1
        %v1612 = vor.u32 %v1555, %v1611
        %v1613 = vrot.slane %v1565, 1
        %v1614 = vor.u32 %v1562, %v1613
        %v1615 = vrot.slane %v1572, 1
        %v1616 = vor.u32 %v1569, %v1615
        %v1617 = vrot.slane %v1579, 1
        %v1618 = vor.u32 %v1576, %v1617
        %v1619 = vrot.slane %v1586, 1
        %v1620 = vor.u32 %v1583, %v1619
        %v1629 = vsel %vm414, %v1606, 0
        %v1630 = vsel %vm414, %v1608, 0
        %v1631 = vsel %vm414, %v1610, 0
        %v1632 = vsel %vm414, %v1612, 0
        %v1633 = vsel %vm414, %v1614, 0
        %v1634 = vsel %vm414, %v1616, 0
        %v1635 = vsel %vm414, %v1618, 0
        %v1636 = vsel %vm414, %v1620, 0
        %v1658 = vunpack.c.l.b16 %v1597
        %v1659 = vunpack.c.l.b16 %v1525
        %v1660 = vunpack.c.l.b16 %v1629
        %v1661 = vunpack.c.l.b16 %v1598
        %v1662 = vunpack.c.l.b16 %v1526
        %v1663 = vunpack.c.l.b16 %v1630
        %v1664 = vunpack.c.l.b16 %v1599
        %v1665 = vunpack.c.l.b16 %v1527
        %v1666 = vunpack.c.l.b16 %v1631
        %v1667 = vunpack.c.l.b16 %v1600
        %v1668 = vunpack.c.l.b16 %v1528
        %v1669 = vunpack.c.l.b16 %v1632
        %v1670 = vunpack.c.l.b16 %v1601
        %v1671 = vunpack.c.l.b16 %v1529
        %v1672 = vunpack.c.l.b16 %v1633
        %v1673 = vunpack.c.l.b16 %v1602
        %v1674 = vunpack.c.l.b16 %v1530
        %v1675 = vunpack.c.l.b16 %v1634
        %v1676 = vunpack.c.l.b16 %v1603
        %v1677 = vunpack.c.l.b16 %v1531
        %v1678 = vunpack.c.l.b16 %v1635
        %v1679 = vld [vmem:[%s2] sm:$0xf]
        %v1680 = vld [vmem:[%s2 + $0x4] sm:$0xf]
        %v1681 = vld [vmem:[%s2 + $0x8] sm:$0xf]
        %v1682 = vld [vmem:[%s2 + $0xc] sm:$0xf]
        %v1683 = vld [vmem:[%s2 + $0x10] sm:$0xf]
        %v1684 = vld [vmem:[%s2 + $0x14] sm:$0xf]
        %v1685 = vld [vmem:[%s2 + $0x18] sm:$0xf]
        %v1686 = vld [vmem:[%s2 + $0x1c] sm:$0xf]
        %v1687 = vld [vmem:[%s2 + $0x20] sm:$0xf]
        %v1688 = vld [vmem:[%s2 + $0x24] sm:$0xf]
        %v1689 = vld [vmem:[%s2 + $0x28] sm:$0xf]
        %v1690 = vld [vmem:[%s2 + $0x2c] sm:$0xf]
        %v1691 = vld [vmem:[%s2 + $0x30] sm:$0xf]
        %v1692 = vld [vmem:[%s2 + $0x34] sm:$0xf]
        %v1693 = vld [vmem:[%s2 + $0x38] sm:$0xf]
        %v1694 = vld [vmem:[%s2 + $0x3c] sm:$0xf]
        %v1695 = vld [vmem:[%s2 + $0x40] sm:$0xf]
        %v1696 = vld [vmem:[%s2 + $0x44] sm:$0xf]
        %v1697 = vld [vmem:[%s2 + $0x48] sm:$0xf]
        %v1698 = vld [vmem:[%s2 + $0x4c] sm:$0xf]
        %v1699 = vld [vmem:[%s2 + $0x50] sm:$0xf]
        %v1700 = vld [vmem:[%s2 + $0x54] sm:$0xf]
        %v1701 = vld [vmem:[%s2 + $0x58] sm:$0xf]
        %v1702 = vld [vmem:[%s2 + $0x5c] sm:$0xf]
        %v1703 = vld [vmem:[%s2 + $0x60] sm:$0xf]
        %v1704 = vld [vmem:[%s2 + $0x64] sm:$0xf]
        %v1705 = vld [vmem:[%s2 + $0x68] sm:$0xf]
        %v1706 = vld [vmem:[%s2 + $0x6c] sm:$0xf]
        %v1707 = vld [vmem:[%s2 + $0x70] sm:$0xf]
        %v1708 = vld [vmem:[%s2 + $0x74] sm:$0xf]
        %v1709 = vld [vmem:[%s2 + $0x78] sm:$0xf]
        %v1710 = vld [vmem:[%s2 + $0x7c] sm:$0xf]
        %v1711 = vld [vmem:[%s2 + $0x80] sm:$0xf]
        %v1712 = vld [vmem:[%s2 + $0x84] sm:$0xf]
        %v1713 = vld [vmem:[%s2 + $0x88] sm:$0xf]
        %v1714 = vld [vmem:[%s2 + $0x8c] sm:$0xf]
        %v1715 = vld [vmem:[%s2 + $0x90] sm:$0xf]
        %v1716 = vld [vmem:[%s2 + $0x94] sm:$0xf]
        %v1717 = vld [vmem:[%s2 + $0x98] sm:$0xf]
        %v1718 = vld [vmem:[%s2 + $0x9c] sm:$0xf]
        %v1719 = vld [vmem:[%s2 + $0xa0] sm:$0xf]
        %v1720 = vld [vmem:[%s2 + $0xa4] sm:$0xf]
        %v1721 = vld [vmem:[%s2 + $0xa8] sm:$0xf]
        %v1722 = vld [vmem:[%s2 + $0xac] sm:$0xf]
        %v1723 = vld [vmem:[%s2 + $0xb0] sm:$0xf]
        %v1724 = vld [vmem:[%s2 + $0xb4] sm:$0xf]
        %v1725 = vld [vmem:[%s2 + $0xb8] sm:$0xf]
        %v1726 = vld [vmem:[%s2 + $0xbc] sm:$0xf]
        %v1730 = vunpack.c.l.b16 %v1604
        %v1731 = vunpack.c.l.b16 %v1532
        %v1732 = vunpack.c.l.b16 %v1636
        %s1733 = scalar_lea.vmem %s2, 192
        %v1734 = vld [vmem:[%s1733] sm:$0xf]
        %v1735 = vld [vmem:[%s1733 + $0x4] sm:$0xf]
        %v1736 = vld [vmem:[%s1733 + $0x8] sm:$0xf]
        %v1737 = vld [vmem:[%s1733 + $0xc] sm:$0xf]
        %v1738 = vld [vmem:[%s1733 + $0x10] sm:$0xf]
        %v1739 = vld [vmem:[%s1733 + $0x14] sm:$0xf]
        %v1740 = vld [vmem:[%s1733 + $0x18] sm:$0xf]
        %v1741 = vld [vmem:[%s1733 + $0x1c] sm:$0xf]
        %v1742 = vld [vmem:[%s1733 + $0x20] sm:$0xf]
        %v1743 = vld [vmem:[%s1733 + $0x24] sm:$0xf]
        %v1744 = vld [vmem:[%s1733 + $0x28] sm:$0xf]
        %v1745 = vld [vmem:[%s1733 + $0x2c] sm:$0xf]
        %v1746 = vld [vmem:[%s1733 + $0x30] sm:$0xf]
        %v1747 = vld [vmem:[%s1733 + $0x34] sm:$0xf]
        %v1748 = vld [vmem:[%s1733 + $0x38] sm:$0xf]
        %v1749 = vld [vmem:[%s1733 + $0x3c] sm:$0xf]
        %v1750 = vld [vmem:[%s1733 + $0x40] sm:$0xf]
        %v1751 = vld [vmem:[%s1733 + $0x44] sm:$0xf]
        %v1752 = vld [vmem:[%s1733 + $0x48] sm:$0xf]
        %v1753 = vld [vmem:[%s1733 + $0x4c] sm:$0xf]
        %v1754 = vld [vmem:[%s1733 + $0x50] sm:$0xf]
        %v1755 = vld [vmem:[%s1733 + $0x54] sm:$0xf]
        %v1756 = vld [vmem:[%s1733 + $0x58] sm:$0xf]
        %v1757 = vld [vmem:[%s1733 + $0x5c] sm:$0xf]
        %v1758 = vld [vmem:[%s1733 + $0x60] sm:$0xf]
        %v1759 = vld [vmem:[%s1733 + $0x64] sm:$0xf]
        %v1760 = vld [vmem:[%s1733 + $0x68] sm:$0xf]
        %v1761 = vld [vmem:[%s1733 + $0x6c] sm:$0xf]
        %v1762 = vld [vmem:[%s1733 + $0x70] sm:$0xf]
        %v1763 = vld [vmem:[%s1733 + $0x74] sm:$0xf]
        %v1764 = vld [vmem:[%s1733 + $0x78] sm:$0xf]
        %v1765 = vld [vmem:[%s1733 + $0x7c] sm:$0xf]
        %v1766 = vld [vmem:[%s1733 + $0x80] sm:$0xf]
        %v1767 = vld [vmem:[%s1733 + $0x84] sm:$0xf]
        %v1768 = vld [vmem:[%s1733 + $0x88] sm:$0xf]
        %v1769 = vld [vmem:[%s1733 + $0x8c] sm:$0xf]
        %v1770 = vld [vmem:[%s1733 + $0x90] sm:$0xf]
        %v1771 = vld [vmem:[%s1733 + $0x94] sm:$0xf]
        %v1772 = vld [vmem:[%s1733 + $0x98] sm:$0xf]
        %v1773 = vld [vmem:[%s1733 + $0x9c] sm:$0xf]
        %v1774 = vld [vmem:[%s1733 + $0xa0] sm:$0xf]
        %v1775 = vld [vmem:[%s1733 + $0xa4] sm:$0xf]
        %v1776 = vld [vmem:[%s1733 + $0xa8] sm:$0xf]
        %v1777 = vld [vmem:[%s1733 + $0xac] sm:$0xf]
        %v1778 = vld [vmem:[%s1733 + $0xb0] sm:$0xf]
        %v1779 = vld [vmem:[%s1733 + $0xb4] sm:$0xf]
        %v1780 = vld [vmem:[%s1733 + $0xb8] sm:$0xf]
        %v1781 = vld [vmem:[%s1733 + $0xbc] sm:$0xf]
        %v1782 = vpack.c.b16 %v1661, %v1658
        %v1783 = vpack.c.b16 %v1662, %v1659
        %v1784 = vpack.c.b16 %v1663, %v1660
        %v1785 = vpack.c.b16 %v1667, %v1664
        %v1786 = vpack.c.b16 %v1668, %v1665
        %v1787 = vpack.c.b16 %v1669, %v1666
        %v1788 = vpack.c.b16 %v1673, %v1670
        %v1789 = vpack.c.b16 %v1674, %v1671
        %v1790 = vpack.c.b16 %v1675, %v1672
        %v1791 = vpack.c.b16 %v1730, %v1676
        %v1792 = vpack.c.b16 %v1731, %v1677
        %v1793 = vpack.c.b16 %v1732, %v1678
        %v1854 = vunpack.c.l.b16 %v1734
        %v1855 = vunpack.c.l.b16 %v1735
        %v1856 = vunpack.c.l.b16 %v1736
        %v1857 = vunpack.c.l.b16 %v1737
        %v1858 = vunpack.c.l.b16 %v1738
        %v1859 = vunpack.c.l.b16 %v1739
        %v1860 = vunpack.c.l.b16 %v1740
        %v1861 = vunpack.c.l.b16 %v1741
        %v1862 = vunpack.c.l.b16 %v1742
        %v1863 = vunpack.c.l.b16 %v1743
        %v1864 = vunpack.c.l.b16 %v1744
        %v1865 = vunpack.c.l.b16 %v1745
        %v1866 = vunpack.c.l.b16 %v1746
        %v1867 = vunpack.c.l.b16 %v1747
        %v1868 = vunpack.c.l.b16 %v1748
        %v1869 = vunpack.c.l.b16 %v1749
        %v1870 = vunpack.c.l.b16 %v1750
        %v1871 = vunpack.c.l.b16 %v1751
        %v1872 = vunpack.c.l.b16 %v1752
        %v1873 = vunpack.c.l.b16 %v1753
        %v1874 = vunpack.c.l.b16 %v1754
        %v1875 = vunpack.c.l.b16 %v1755
        %v1876 = vunpack.c.l.b16 %v1756
        %v1877 = vunpack.c.l.b16 %v1757
        %v1878 = vunpack.c.l.b16 %v1758
        %v1879 = vunpack.c.l.b16 %v1759
        %v1880 = vunpack.c.l.b16 %v1760
        %v1881 = vunpack.c.l.b16 %v1761
        %v1882 = vunpack.c.l.b16 %v1762
        %v1883 = vunpack.c.l.b16 %v1763
        %v1884 = vunpack.c.l.b16 %v1764
        %v1885 = vunpack.c.l.b16 %v1765
        %v1886 = vunpack.c.l.b16 %v1766
        %v1887 = vunpack.c.l.b16 %v1767
        %v1888 = vunpack.c.l.b16 %v1768
        %v1889 = vunpack.c.l.b16 %v1769
        %v1890 = vunpack.c.l.b16 %v1770
        %v1891 = vunpack.c.l.b16 %v1771
        %v1892 = vunpack.c.l.b16 %v1772
        %v1893 = vunpack.c.l.b16 %v1773
        %v1894 = vunpack.c.l.b16 %v1774
        %v1895 = vunpack.c.l.b16 %v1775
        %v1896 = vunpack.c.l.b16 %v1776
        %v1897 = vunpack.c.l.b16 %v1777
        %v1898 = vunpack.c.l.b16 %v1778
        %v1899 = vunpack.c.l.b16 %v1779
        %v1900 = vunpack.c.l.b16 %v1780
        %v1901 = vunpack.c.l.b16 %v1781
        %v1902 = vpack.c.b16 %v1855, %v1854
        %v1903 = vpack.c.b16 %v1857, %v1856
        %v1904 = vpack.c.b16 %v1859, %v1858
        %v1905 = vpack.c.b16 %v1861, %v1860
        %v1906 = vpack.c.b16 %v1863, %v1862
        %v1907 = vpack.c.b16 %v1865, %v1864
        %v1908 = vpack.c.b16 %v1867, %v1866
        %v1909 = vpack.c.b16 %v1869, %v1868
        %v1910 = vpack.c.b16 %v1871, %v1870
        %v1911 = vpack.c.b16 %v1873, %v1872
        %v1912 = vpack.c.b16 %v1875, %v1874
        %v1913 = vpack.c.b16 %v1877, %v1876
        %v1914 = vpack.c.b16 %v1879, %v1878
        %v1915 = vpack.c.b16 %v1881, %v1880
        %v1916 = vpack.c.b16 %v1883, %v1882
        %v1917 = vpack.c.b16 %v1885, %v1884
        %v1918 = vpack.c.b16 %v1887, %v1886
        %v1919 = vpack.c.b16 %v1889, %v1888
        %v1920 = vpack.c.b16 %v1891, %v1890
        %v1921 = vpack.c.b16 %v1893, %v1892
        %v1922 = vpack.c.b16 %v1895, %v1894
        %v1923 = vpack.c.b16 %v1897, %v1896
        %v1924 = vpack.c.b16 %v1899, %v1898
        %v1925 = vpack.c.b16 %v1901, %v1900
        %1950 = vmatprep.subr.bf16.mxu0 0
        %1951 = vmatpush1.bf16.msra.mxu0 %v1902
        %1952 = vmatprep.subr.bf16.mxu0 0
        %1953 = vmatpush1.bf16.msra.mxu0 %v1903
        %1954 = vmatprep.subr.bf16.mxu0 0
        %1955 = vmatpush1.bf16.msra.mxu0 %v1904
        %1956 = vmatprep.subr.bf16.mxu0 0
        %1957 = vmatpush1.bf16.msra.mxu0 %v1905
        %1958 = vmatprep.subr.bf16.mxu0 0
        %1959 = vmatpush1.bf16.msra.mxu0 %v1906
        %1960 = vmatprep.subr.bf16.mxu0 0
        %1961 = vmatpush1.bf16.msra.mxu0 %v1907
        %1962 = vmatprep.subr.bf16.mxu0 0
        %1963 = vmatpush1.bf16.msra.mxu0 %v1908
        %1964 = vmatprep.subr.bf16.mxu0 0
        %1965 = vmatpush1.bf16.msra.mxu0 %v1909
        %1966 = vmatprep.subr.bf16.mxu0 0
        %1967 = vmatpush1.bf16.msra.mxu0 %v1910
        %1968 = vmatprep.subr.bf16.mxu0 0
        %1969 = vmatpush1.bf16.msra.mxu0 %v1911
        %1970 = vmatprep.subr.bf16.mxu0 0
        %1971 = vmatpush1.bf16.msra.mxu0 %v1912
        %1972 = vmatprep.subr.bf16.mxu0 0
        %1973 = vmatpush1.bf16.msra.mxu0 %v1913
        %1974 = vmatprep.subr.bf16.mxu0 0
        %1975 = vmatpush1.bf16.msra.mxu0 %v1914
        %1976 = vmatprep.subr.bf16.mxu0 0
        %1977 = vmatpush1.bf16.msra.mxu0 %v1915
        %1978 = vmatprep.subr.bf16.mxu0 0
        %1979 = vmatpush1.bf16.msra.mxu0 %v1916
        %1980 = vmatprep.subr.bf16.mxu0 0
        %1981 = vmatpush1.bf16.msra.mxu0 %v1917
        %1982 = vmatprep.mubr.bf16.mxu0 %v1783
        %1983 = vmatmul.mubr.bf16.gmra.mrb[0].mxu0 %v1782
        %v1984 = vpop.f32.mrb[0].mxu0
        %v1985 = vadd.f32 0.0, %v1984
        %v1986 = vpop.f32.mrb[0].mxu0
        %v1987 = vpop.f32.mrb[0].mxu0
        %v1988 = vadd.f32 0.0, %v1987
        %v1989 = vpop.f32.mrb[0].mxu0
        %1990 = vmatprep.mubr.bf16.mxu0 %v1786
        %1991 = vmatmul.mubr.bf16.gmra.mrb[0].mxu0 %v1785
        %v1992 = vpop.f32.mrb[0].mxu0
        %v1993 = vadd.f32 0.0, %v1992
        %v1994 = vpop.f32.mrb[0].mxu0
        %v1995 = vpop.f32.mrb[0].mxu0
        %v1996 = vadd.f32 0.0, %v1995
        %v1997 = vpop.f32.mrb[0].mxu0
        %1998 = vmatprep.mubr.bf16.mxu0 %v1789
        %1999 = vmatmul.mubr.bf16.gmra.mrb[0].mxu0 %v1788
        %v2000 = vpop.f32.mrb[0].mxu0
        %v2001 = vadd.f32 0.0, %v2000
        %v2002 = vpop.f32.mrb[0].mxu0
        %v2003 = vpop.f32.mrb[0].mxu0
        %v2004 = vadd.f32 0.0, %v2003
        %v2005 = vpop.f32.mrb[0].mxu0
        %2006 = vmatprep.mubr.bf16.mxu0 %v1792
        %2007 = vmatmul.mubr.bf16.gmra.mrb[0].mxu0 %v1791
        %v2008 = vpop.f32.mrb[0].mxu0
        %v2009 = vadd.f32 0.0, %v2008
        %v2010 = vpop.f32.mrb[0].mxu0
        %v2011 = vpop.f32.mrb[0].mxu0
        %v2012 = vadd.f32 0.0, %v2011
        %v2013 = vpop.f32.mrb[0].mxu0
        %2014 = vdwg.mxu0
        %2015 = vmatprep.subr.bf16.mxu0 0
        %2016 = vmatpush1.bf16.msra.mxu0 %v1918
        %2017 = vmatprep.subr.bf16.mxu0 0
        %2018 = vmatpush1.bf16.msra.mxu0 %v1919
        %2019 = vmatprep.subr.bf16.mxu0 0
        %2020 = vmatpush1.bf16.msra.mxu0 %v1920
        %2021 = vmatprep.subr.bf16.mxu0 0
        %2022 = vmatpush1.bf16.msra.mxu0 %v1921
        %2023 = vmatprep.subr.bf16.mxu0 0
        %2024 = vmatpush1.bf16.msra.mxu0 %v1922
        %2025 = vmatprep.subr.bf16.mxu0 0
        %2026 = vmatpush1.bf16.msra.mxu0 %v1923
        %2027 = vmatprep.subr.bf16.mxu0 0
        %2028 = vmatpush1.bf16.msra.mxu0 %v1924
        %2029 = vmatprep.subr.bf16.mxu0 0
        %2030 = vmatpush1.bf16.msra.mxu0 %v1925
        %2031 = vmatprep.subr.bf16.mxu0 0
        %2032 = vmatpush1.bf16.msra.mxu0 0
        %2033 = vmatprep.subr.bf16.mxu0 0
        %2034 = vmatpush1.bf16.msra.mxu0 0
        %2035 = vmatprep.subr.bf16.mxu0 0
        %2036 = vmatpush1.bf16.msra.mxu0 0
        %2037 = vmatprep.subr.bf16.mxu0 0
        %2038 = vmatpush1.bf16.msra.mxu0 0
        %2039 = vmatprep.subr.bf16.mxu0 0
        %2040 = vmatpush1.bf16.msra.mxu0 0
        %2041 = vmatprep.subr.bf16.mxu0 0
        %2042 = vmatpush1.bf16.msra.mxu0 0
        %2043 = vmatprep.subr.bf16.mxu0 0
        %2044 = vmatpush1.bf16.msra.mxu0 0
        %2045 = vmatprep.subr.bf16.mxu0 0
        %2046 = vmatpush1.bf16.msra.mxu0 0
        %2047 = vmatprep.mubr.bf16.mxu0 0
        %2048 = vmatmul.mubr.bf16.gmra.mrb[0].mxu0 %v1784
        %v2049 = vpop.f32.mrb[0].mxu0
        %v2050 = vadd.f32 %v1985, %v2049
        %v2051 = vpop.f32.mrb[0].mxu0
        %v2052 = vpop.f32.mrb[0].mxu0
        %v2053 = vadd.f32 %v1988, %v2052
        %v2054 = vpop.f32.mrb[0].mxu0
        %2055 = vmatprep.mubr.bf16.mxu0 0
        %2056 = vmatmul.mubr.bf16.gmra.mrb[0].mxu0 %v1787
        %v2057 = vpop.f32.mrb[0].mxu0
        %v2058 = vadd.f32 %v1993, %v2057
        %v2059 = vpop.f32.mrb[0].mxu0
        %v2060 = vpop.f32.mrb[0].mxu0
        %v2061 = vadd.f32 %v1996, %v2060
        %v2062 = vpop.f32.mrb[0].mxu0
        %2063 = vmatprep.mubr.bf16.mxu0 0
        %2064 = vmatmul.mubr.bf16.gmra.mrb[0].mxu0 %v1790
        %v2065 = vpop.f32.mrb[0].mxu0
        %v2066 = vadd.f32 %v2001, %v2065
        %v2067 = vpop.f32.mrb[0].mxu0
        %v2068 = vpop.f32.mrb[0].mxu0
        %v2069 = vadd.f32 %v2004, %v2068
        %v2070 = vpop.f32.mrb[0].mxu0
        %2071 = vmatprep.mubr.bf16.mxu0 0
        %2072 = vmatmul.mubr.bf16.gmra.mrb[0].mxu0 %v1793
        %v2073 = vpop.f32.mrb[0].mxu0
        %v2074 = vadd.f32 %v2009, %v2073
        %v2075 = vpop.f32.mrb[0].mxu0
        %v2076 = vpop.f32.mrb[0].mxu0
        %v2077 = vadd.f32 %v2012, %v2076
        %v2078 = vpop.f32.mrb[0].mxu0
        %2079 = vdwg.mxu0
        %v2080 = vpack.c.b16 %v1658, %v438
        %v2081 = vpack.c.b16 %v1659, %v438
        %v2082 = vpack.c.b16 %v1660, %v438
        %v2083 = vpack.c.b16 %v1664, %v1661
        %v2084 = vpack.c.b16 %v1665, %v1662
        %v2085 = vpack.c.b16 %v1666, %v1663
        %v2086 = vpack.c.b16 %v1670, %v1667
        %v2087 = vpack.c.b16 %v1671, %v1668
        %v2088 = vpack.c.b16 %v1672, %v1669
        %v2089 = vpack.c.b16 %v1676, %v1673
        %v2090 = vpack.c.b16 %v1677, %v1674
        %v2091 = vpack.c.b16 %v1678, %v1675
        %v2152 = vunpack.c.l.b16 %v1679
        %v2153 = vunpack.c.l.b16 %v1680
        %v2154 = vunpack.c.l.b16 %v1681
        %v2155 = vunpack.c.l.b16 %v1682
        %v2156 = vunpack.c.l.b16 %v1683
        %v2157 = vunpack.c.l.b16 %v1684
        %v2158 = vunpack.c.l.b16 %v1685
        %v2159 = vunpack.c.l.b16 %v1686
        %v2160 = vunpack.c.l.b16 %v1687
        %v2161 = vunpack.c.l.b16 %v1688
        %v2162 = vunpack.c.l.b16 %v1689
        %v2163 = vunpack.c.l.b16 %v1690
        %v2164 = vunpack.c.l.b16 %v1691
        %v2165 = vunpack.c.l.b16 %v1692
        %v2166 = vunpack.c.l.b16 %v1693
        %v2167 = vunpack.c.l.b16 %v1694
        %v2168 = vunpack.c.l.b16 %v1695
        %v2169 = vunpack.c.l.b16 %v1696
        %v2170 = vunpack.c.l.b16 %v1697
        %v2171 = vunpack.c.l.b16 %v1698
        %v2172 = vunpack.c.l.b16 %v1699
        %v2173 = vunpack.c.l.b16 %v1700
        %v2174 = vunpack.c.l.b16 %v1701
        %v2175 = vunpack.c.l.b16 %v1702
        %v2176 = vunpack.c.l.b16 %v1703
        %v2177 = vunpack.c.l.b16 %v1704
        %v2178 = vunpack.c.l.b16 %v1705
        %v2179 = vunpack.c.l.b16 %v1706
        %v2180 = vunpack.c.l.b16 %v1707
        %v2181 = vunpack.c.l.b16 %v1708
        %v2182 = vunpack.c.l.b16 %v1709
        %v2183 = vunpack.c.l.b16 %v1710
        %v2184 = vunpack.c.l.b16 %v1711
        %v2185 = vunpack.c.l.b16 %v1712
        %v2186 = vunpack.c.l.b16 %v1713
        %v2187 = vunpack.c.l.b16 %v1714
        %v2188 = vunpack.c.l.b16 %v1715
        %v2189 = vunpack.c.l.b16 %v1716
        %v2190 = vunpack.c.l.b16 %v1717
        %v2191 = vunpack.c.l.b16 %v1718
        %v2192 = vunpack.c.l.b16 %v1719
        %v2193 = vunpack.c.l.b16 %v1720
        %v2194 = vunpack.c.l.b16 %v1721
        %v2195 = vunpack.c.l.b16 %v1722
        %v2196 = vunpack.c.l.b16 %v1723
        %v2197 = vunpack.c.l.b16 %v1724
        %v2198 = vunpack.c.l.b16 %v1725
        %v2199 = vunpack.c.l.b16 %v1726
        %v2200 = vpack.c.b16 %v2153, %v2152
        %v2201 = vpack.c.b16 %v2155, %v2154
        %v2202 = vpack.c.b16 %v2157, %v2156
        %v2203 = vpack.c.b16 %v2159, %v2158
        %v2204 = vpack.c.b16 %v2161, %v2160
        %v2205 = vpack.c.b16 %v2163, %v2162
        %v2206 = vpack.c.b16 %v2165, %v2164
        %v2207 = vpack.c.b16 %v2167, %v2166
        %v2208 = vpack.c.b16 %v2169, %v2168
        %v2209 = vpack.c.b16 %v2171, %v2170
        %v2210 = vpack.c.b16 %v2173, %v2172
        %v2211 = vpack.c.b16 %v2175, %v2174
        %v2212 = vpack.c.b16 %v2177, %v2176
        %v2213 = vpack.c.b16 %v2179, %v2178
        %v2214 = vpack.c.b16 %v2181, %v2180
        %v2215 = vpack.c.b16 %v2183, %v2182
        %v2216 = vpack.c.b16 %v2185, %v2184
        %v2217 = vpack.c.b16 %v2187, %v2186
        %v2218 = vpack.c.b16 %v2189, %v2188
        %v2219 = vpack.c.b16 %v2191, %v2190
        %v2220 = vpack.c.b16 %v2193, %v2192
        %v2221 = vpack.c.b16 %v2195, %v2194
        %v2222 = vpack.c.b16 %v2197, %v2196
        %v2223 = vpack.c.b16 %v2199, %v2198
        %2248 = vmatprep.subr.bf16.mxu0 0
        %2249 = vmatpush1.bf16.msra.mxu0 %v2200
        %2250 = vmatprep.subr.bf16.mxu0 0
        %2251 = vmatpush1.bf16.msra.mxu0 %v2201
        %2252 = vmatprep.subr.bf16.mxu0 0
        %2253 = vmatpush1.bf16.msra.mxu0 %v2202
        %2254 = vmatprep.subr.bf16.mxu0 0
        %2255 = vmatpush1.bf16.msra.mxu0 %v2203
        %2256 = vmatprep.subr.bf16.mxu0 0
        %2257 = vmatpush1.bf16.msra.mxu0 %v2204
        %2258 = vmatprep.subr.bf16.mxu0 0
        %2259 = vmatpush1.bf16.msra.mxu0 %v2205
        %2260 = vmatprep.subr.bf16.mxu0 0
        %2261 = vmatpush1.bf16.msra.mxu0 %v2206
        %2262 = vmatprep.subr.bf16.mxu0 0
        %2263 = vmatpush1.bf16.msra.mxu0 %v2207
        %2264 = vmatprep.subr.bf16.mxu0 0
        %2265 = vmatpush1.bf16.msra.mxu0 %v2208
        %2266 = vmatprep.subr.bf16.mxu0 0
        %2267 = vmatpush1.bf16.msra.mxu0 %v2209
        %2268 = vmatprep.subr.bf16.mxu0 0
        %2269 = vmatpush1.bf16.msra.mxu0 %v2210
        %2270 = vmatprep.subr.bf16.mxu0 0
        %2271 = vmatpush1.bf16.msra.mxu0 %v2211
        %2272 = vmatprep.subr.bf16.mxu0 0
        %2273 = vmatpush1.bf16.msra.mxu0 %v2212
        %2274 = vmatprep.subr.bf16.mxu0 0
        %2275 = vmatpush1.bf16.msra.mxu0 %v2213
        %2276 = vmatprep.subr.bf16.mxu0 0
        %2277 = vmatpush1.bf16.msra.mxu0 %v2214
        %2278 = vmatprep.subr.bf16.mxu0 0
        %2279 = vmatpush1.bf16.msra.mxu0 %v2215
        %2280 = vmatprep.mubr.bf16.mxu0 %v2081
        %2281 = vmatmul.mubr.bf16.gmra.mrb[0].mxu0 %v2080
        %v2282 = vpop.f32.mrb[0].mxu0
        %v2283 = vadd.f32 %v2050, %v2282
        %v2284 = vpop.f32.mrb[0].mxu0
        %v2285 = vpop.f32.mrb[0].mxu0
        %v2286 = vadd.f32 %v2053, %v2285
        %v2287 = vpop.f32.mrb[0].mxu0
        %2288 = vmatprep.mubr.bf16.mxu0 %v2084
        %2289 = vmatmul.mubr.bf16.gmra.mrb[0].mxu0 %v2083
        %v2290 = vpop.f32.mrb[0].mxu0
        %v2291 = vadd.f32 %v2058, %v2290
        %v2292 = vpop.f32.mrb[0].mxu0
        %v2293 = vpop.f32.mrb[0].mxu0
        %v2294 = vadd.f32 %v2061, %v2293
        %v2295 = vpop.f32.mrb[0].mxu0
        %2296 = vmatprep.mubr.bf16.mxu0 %v2087
        %2297 = vmatmul.mubr.bf16.gmra.mrb[0].mxu0 %v2086
        %v2298 = vpop.f32.mrb[0].mxu0
        %v2299 = vadd.f32 %v2066, %v2298
        %v2300 = vpop.f32.mrb[0].mxu0
        %v2301 = vpop.f32.mrb[0].mxu0
        %v2302 = vadd.f32 %v2069, %v2301
        %v2303 = vpop.f32.mrb[0].mxu0
        %2304 = vmatprep.mubr.bf16.mxu0 %v2090
        %2305 = vmatmul.mubr.bf16.gmra.mrb[0].mxu0 %v2089
        %v2306 = vpop.f32.mrb[0].mxu0
        %v2307 = vadd.f32 %v2074, %v2306
        %v2308 = vpop.f32.mrb[0].mxu0
        %v2309 = vpop.f32.mrb[0].mxu0
        %v2310 = vadd.f32 %v2077, %v2309
        %v2311 = vpop.f32.mrb[0].mxu0
        %2312 = vdwg.mxu0
        %2313 = vmatprep.subr.bf16.mxu0 0
        %2314 = vmatpush1.bf16.msra.mxu0 %v2216
        %2315 = vmatprep.subr.bf16.mxu0 0
        %2316 = vmatpush1.bf16.msra.mxu0 %v2217
        %2317 = vmatprep.subr.bf16.mxu0 0
        %2318 = vmatpush1.bf16.msra.mxu0 %v2218
        %2319 = vmatprep.subr.bf16.mxu0 0
        %2320 = vmatpush1.bf16.msra.mxu0 %v2219
        %2321 = vmatprep.subr.bf16.mxu0 0
        %2322 = vmatpush1.bf16.msra.mxu0 %v2220
        %2323 = vmatprep.subr.bf16.mxu0 0
        %2324 = vmatpush1.bf16.msra.mxu0 %v2221
        %2325 = vmatprep.subr.bf16.mxu0 0
        %2326 = vmatpush1.bf16.msra.mxu0 %v2222
        %2327 = vmatprep.subr.bf16.mxu0 0
        %2328 = vmatpush1.bf16.msra.mxu0 %v2223
        %2329 = vmatprep.subr.bf16.mxu0 0
        %2330 = vmatpush1.bf16.msra.mxu0 0
        %2331 = vmatprep.subr.bf16.mxu0 0
        %2332 = vmatpush1.bf16.msra.mxu0 0
        %2333 = vmatprep.subr.bf16.mxu0 0
        %2334 = vmatpush1.bf16.msra.mxu0 0
        %2335 = vmatprep.subr.bf16.mxu0 0
        %2336 = vmatpush1.bf16.msra.mxu0 0
        %2337 = vmatprep.subr.bf16.mxu0 0
        %2338 = vmatpush1.bf16.msra.mxu0 0
        %2339 = vmatprep.subr.bf16.mxu0 0
        %2340 = vmatpush1.bf16.msra.mxu0 0
        %2341 = vmatprep.subr.bf16.mxu0 0
        %2342 = vmatpush1.bf16.msra.mxu0 0
        %2343 = vmatprep.subr.bf16.mxu0 0
        %2344 = vmatpush1.bf16.msra.mxu0 0
        %2345 = vmatprep.mubr.bf16.mxu0 0
        %2346 = vmatmul.mubr.bf16.gmra.mrb[0].mxu0 %v2082
        %v2347 = vpop.f32.mrb[0].mxu0
        %v2348 = vadd.f32 %v2283, %v2347
        %v2349 = vpop.f32.mrb[0].mxu0
        %v2350 = vpop.f32.mrb[0].mxu0
        %v2351 = vadd.f32 %v2286, %v2350
        %v2352 = vpop.f32.mrb[0].mxu0
        %2353 = vmatprep.mubr.bf16.mxu0 0
        %2354 = vmatmul.mubr.bf16.gmra.mrb[0].mxu0 %v2085
        %v2355 = vpop.f32.mrb[0].mxu0
        %v2356 = vadd.f32 %v2291, %v2355
        %v2357 = vpop.f32.mrb[0].mxu0
        %v2358 = vpop.f32.mrb[0].mxu0
        %v2359 = vadd.f32 %v2294, %v2358
        %v2360 = vpop.f32.mrb[0].mxu0
        %2361 = vmatprep.mubr.bf16.mxu0 0
        %2362 = vmatmul.mubr.bf16.gmra.mrb[0].mxu0 %v2088
        %v2363 = vpop.f32.mrb[0].mxu0
        %v2364 = vadd.f32 %v2299, %v2363
        %v2365 = vpop.f32.mrb[0].mxu0
        %v2366 = vpop.f32.mrb[0].mxu0
        %v2367 = vadd.f32 %v2302, %v2366
        %v2368 = vpop.f32.mrb[0].mxu0
        %2369 = vmatprep.mubr.bf16.mxu0 0
        %2370 = vmatmul.mubr.bf16.gmra.mrb[0].mxu0 %v2091
        %v2371 = vpop.f32.mrb[0].mxu0
        %v2372 = vadd.f32 %v2307, %v2371
        %v2373 = vpop.f32.mrb[0].mxu0
        %v2374 = vpop.f32.mrb[0].mxu0
        %v2375 = vadd.f32 %v2310, %v2374
        %v2376 = vpop.f32.mrb[0].mxu0
        %2377 = vdwg.mxu0
        %s2378 = scalar_lea.vmem %s2, 384
        %v2379 = vld [vmem:[%s2378] sm:$0xf]
        %v2380 = vld [vmem:[%s2378 + $0x4] sm:$0xf]
        %v2381 = vld [vmem:[%s2378 + $0x8] sm:$0xf]
        %v2382 = vld [vmem:[%s2378 + $0xc] sm:$0xf]
        %v2383 = vld [vmem:[%s2378 + $0x10] sm:$0xf]
        %v2384 = vld [vmem:[%s2378 + $0x14] sm:$0xf]
        %v2385 = vld [vmem:[%s2378 + $0x18] sm:$0xf]
        %v2386 = vld [vmem:[%s2378 + $0x1c] sm:$0xf]
        %v2387 = vld [vmem:[%s2378 + $0x20] sm:$0xf]
        %v2388 = vld [vmem:[%s2378 + $0x24] sm:$0xf]
        %v2389 = vld [vmem:[%s2378 + $0x28] sm:$0xf]
        %v2390 = vld [vmem:[%s2378 + $0x2c] sm:$0xf]
        %v2391 = vld [vmem:[%s2378 + $0x30] sm:$0xf]
        %v2392 = vld [vmem:[%s2378 + $0x34] sm:$0xf]
        %v2393 = vld [vmem:[%s2378 + $0x38] sm:$0xf]
        %v2394 = vld [vmem:[%s2378 + $0x3c] sm:$0xf]
        %v2395 = vld [vmem:[%s2378 + $0x40] sm:$0xf]
        %v2396 = vld [vmem:[%s2378 + $0x44] sm:$0xf]
        %v2397 = vld [vmem:[%s2378 + $0x48] sm:$0xf]
        %v2398 = vld [vmem:[%s2378 + $0x4c] sm:$0xf]
        %v2399 = vld [vmem:[%s2378 + $0x50] sm:$0xf]
        %v2400 = vld [vmem:[%s2378 + $0x54] sm:$0xf]
        %v2401 = vld [vmem:[%s2378 + $0x58] sm:$0xf]
        %v2402 = vld [vmem:[%s2378 + $0x5c] sm:$0xf]
        %v2403 = vld [vmem:[%s2378 + $0x60] sm:$0xf]
        %v2404 = vld [vmem:[%s2378 + $0x64] sm:$0xf]
        %v2405 = vld [vmem:[%s2378 + $0x68] sm:$0xf]
        %v2406 = vld [vmem:[%s2378 + $0x6c] sm:$0xf]
        %v2407 = vld [vmem:[%s2378 + $0x70] sm:$0xf]
        %v2408 = vld [vmem:[%s2378 + $0x74] sm:$0xf]
        %v2409 = vld [vmem:[%s2378 + $0x78] sm:$0xf]
        %v2410 = vld [vmem:[%s2378 + $0x7c] sm:$0xf]
        %v2411 = vld [vmem:[%s2378 + $0x80] sm:$0xf]
        %v2412 = vld [vmem:[%s2378 + $0x84] sm:$0xf]
        %v2413 = vld [vmem:[%s2378 + $0x88] sm:$0xf]
        %v2414 = vld [vmem:[%s2378 + $0x8c] sm:$0xf]
        %v2415 = vld [vmem:[%s2378 + $0x90] sm:$0xf]
        %v2416 = vld [vmem:[%s2378 + $0x94] sm:$0xf]
        %v2417 = vld [vmem:[%s2378 + $0x98] sm:$0xf]
        %v2418 = vld [vmem:[%s2378 + $0x9c] sm:$0xf]
        %v2419 = vld [vmem:[%s2378 + $0xa0] sm:$0xf]
        %v2420 = vld [vmem:[%s2378 + $0xa4] sm:$0xf]
        %v2421 = vld [vmem:[%s2378 + $0xa8] sm:$0xf]
        %v2422 = vld [vmem:[%s2378 + $0xac] sm:$0xf]
        %v2423 = vld [vmem:[%s2378 + $0xb0] sm:$0xf]
        %v2424 = vld [vmem:[%s2378 + $0xb4] sm:$0xf]
        %v2425 = vld [vmem:[%s2378 + $0xb8] sm:$0xf]
        %v2426 = vld [vmem:[%s2378 + $0xbc] sm:$0xf]
        %v2427 = vpack.c.b16 %v438, %v1730
        %v2428 = vpack.c.b16 %v438, %v1731
        %v2429 = vpack.c.b16 %v438, %v1732
        %v2481 = vunpack.c.l.b16 %v2379
        %v2482 = vunpack.c.l.b16 %v2380
        %v2483 = vunpack.c.l.b16 %v2381
        %v2484 = vunpack.c.l.b16 %v2382
        %v2485 = vunpack.c.l.b16 %v2383
        %v2486 = vunpack.c.l.b16 %v2384
        %v2487 = vunpack.c.l.b16 %v2385
        %v2488 = vunpack.c.l.b16 %v2386
        %v2489 = vunpack.c.l.b16 %v2387
        %v2490 = vunpack.c.l.b16 %v2388
        %v2491 = vunpack.c.l.b16 %v2389
        %v2492 = vunpack.c.l.b16 %v2390
        %v2493 = vunpack.c.l.b16 %v2391
        %v2494 = vunpack.c.l.b16 %v2392
        %v2495 = vunpack.c.l.b16 %v2393
        %v2496 = vunpack.c.l.b16 %v2394
        %v2497 = vunpack.c.l.b16 %v2395
        %v2498 = vunpack.c.l.b16 %v2396
        %v2499 = vunpack.c.l.b16 %v2397
        %v2500 = vunpack.c.l.b16 %v2398
        %v2501 = vunpack.c.l.b16 %v2399
        %v2502 = vunpack.c.l.b16 %v2400
        %v2503 = vunpack.c.l.b16 %v2401
        %v2504 = vunpack.c.l.b16 %v2402
        %v2505 = vunpack.c.l.b16 %v2403
        %v2506 = vunpack.c.l.b16 %v2404
        %v2507 = vunpack.c.l.b16 %v2405
        %v2508 = vunpack.c.l.b16 %v2406
        %v2509 = vunpack.c.l.b16 %v2407
        %v2510 = vunpack.c.l.b16 %v2408
        %v2511 = vunpack.c.l.b16 %v2409
        %v2512 = vunpack.c.l.b16 %v2410
        %v2513 = vunpack.c.l.b16 %v2411
        %v2514 = vunpack.c.l.b16 %v2412
        %v2515 = vunpack.c.l.b16 %v2413
        %v2516 = vunpack.c.l.b16 %v2414
        %v2517 = vunpack.c.l.b16 %v2415
        %v2518 = vunpack.c.l.b16 %v2416
        %v2519 = vunpack.c.l.b16 %v2417
        %v2520 = vunpack.c.l.b16 %v2418
        %v2521 = vunpack.c.l.b16 %v2419
        %v2522 = vunpack.c.l.b16 %v2420
        %v2523 = vunpack.c.l.b16 %v2421
        %v2524 = vunpack.c.l.b16 %v2422
        %v2525 = vunpack.c.l.b16 %v2423
        %v2526 = vunpack.c.l.b16 %v2424
        %v2527 = vunpack.c.l.b16 %v2425
        %v2528 = vunpack.c.l.b16 %v2426
        %v2529 = vpack.c.b16 %v2482, %v2481
        %v2530 = vpack.c.b16 %v2484, %v2483
        %v2531 = vpack.c.b16 %v2486, %v2485
        %v2532 = vpack.c.b16 %v2488, %v2487
        %v2533 = vpack.c.b16 %v2490, %v2489
        %v2534 = vpack.c.b16 %v2492, %v2491
        %v2535 = vpack.c.b16 %v2494, %v2493
        %v2536 = vpack.c.b16 %v2496, %v2495
        %v2537 = vpack.c.b16 %v2498, %v2497
        %v2538 = vpack.c.b16 %v2500, %v2499
        %v2539 = vpack.c.b16 %v2502, %v2501
        %v2540 = vpack.c.b16 %v2504, %v2503
        %v2541 = vpack.c.b16 %v2506, %v2505
        %v2542 = vpack.c.b16 %v2508, %v2507
        %v2543 = vpack.c.b16 %v2510, %v2509
        %v2544 = vpack.c.b16 %v2512, %v2511
        %v2545 = vpack.c.b16 %v2514, %v2513
        %v2546 = vpack.c.b16 %v2516, %v2515
        %v2547 = vpack.c.b16 %v2518, %v2517
        %v2548 = vpack.c.b16 %v2520, %v2519
        %v2549 = vpack.c.b16 %v2522, %v2521
        %v2550 = vpack.c.b16 %v2524, %v2523
        %v2551 = vpack.c.b16 %v2526, %v2525
        %v2552 = vpack.c.b16 %v2528, %v2527
        %2577 = vmatprep.subr.bf16.mxu0 0
        %2578 = vmatpush1.bf16.msra.mxu0 %v2529
        %2579 = vmatprep.subr.bf16.mxu0 0
        %2580 = vmatpush1.bf16.msra.mxu0 %v2530
        %2581 = vmatprep.subr.bf16.mxu0 0
        %2582 = vmatpush1.bf16.msra.mxu0 %v2531
        %2583 = vmatprep.subr.bf16.mxu0 0
        %2584 = vmatpush1.bf16.msra.mxu0 %v2532
        %2585 = vmatprep.subr.bf16.mxu0 0
        %2586 = vmatpush1.bf16.msra.mxu0 %v2533
        %2587 = vmatprep.subr.bf16.mxu0 0
        %2588 = vmatpush1.bf16.msra.mxu0 %v2534
        %2589 = vmatprep.subr.bf16.mxu0 0
        %2590 = vmatpush1.bf16.msra.mxu0 %v2535
        %2591 = vmatprep.subr.bf16.mxu0 0
        %2592 = vmatpush1.bf16.msra.mxu0 %v2536
        %2593 = vmatprep.subr.bf16.mxu0 0
        %2594 = vmatpush1.bf16.msra.mxu0 %v2537
        %2595 = vmatprep.subr.bf16.mxu0 0
        %2596 = vmatpush1.bf16.msra.mxu0 %v2538
        %2597 = vmatprep.subr.bf16.mxu0 0
        %2598 = vmatpush1.bf16.msra.mxu0 %v2539
        %2599 = vmatprep.subr.bf16.mxu0 0
        %2600 = vmatpush1.bf16.msra.mxu0 %v2540
        %2601 = vmatprep.subr.bf16.mxu0 0
        %2602 = vmatpush1.bf16.msra.mxu0 %v2541
        %2603 = vmatprep.subr.bf16.mxu0 0
        %2604 = vmatpush1.bf16.msra.mxu0 %v2542
        %2605 = vmatprep.subr.bf16.mxu0 0
        %2606 = vmatpush1.bf16.msra.mxu0 %v2543
        %2607 = vmatprep.subr.bf16.mxu0 0
        %2608 = vmatpush1.bf16.msra.mxu0 %v2544
        %2609 = vmatprep.mubr.bf16.mxu0 %v2084
        %2610 = vmatmul.mubr.bf16.gmra.mrb[0].mxu0 %v2083
        %v2611 = vpop.f32.mrb[0].mxu0
        %v2612 = vadd.f32 0.0, %v2611
        %v2613 = vpop.f32.mrb[0].mxu0
        %v2614 = vpop.f32.mrb[0].mxu0
        %v2615 = vadd.f32 0.0, %v2614
        %v2616 = vpop.f32.mrb[0].mxu0
        %2617 = vmatprep.mubr.bf16.mxu0 %v2087
        %2618 = vmatmul.mubr.bf16.gmra.mrb[0].mxu0 %v2086
        %v2619 = vpop.f32.mrb[0].mxu0
        %v2620 = vadd.f32 0.0, %v2619
        %v2621 = vpop.f32.mrb[0].mxu0
        %v2622 = vpop.f32.mrb[0].mxu0
        %v2623 = vadd.f32 0.0, %v2622
        %v2624 = vpop.f32.mrb[0].mxu0
        %2625 = vmatprep.mubr.bf16.mxu0 %v2090
        %2626 = vmatmul.mubr.bf16.gmra.mrb[0].mxu0 %v2089
        %v2627 = vpop.f32.mrb[0].mxu0
        %v2628 = vadd.f32 0.0, %v2627
        %v2629 = vpop.f32.mrb[0].mxu0
        %v2630 = vpop.f32.mrb[0].mxu0
        %v2631 = vadd.f32 0.0, %v2630
        %v2632 = vpop.f32.mrb[0].mxu0
        %2633 = vmatprep.mubr.bf16.mxu0 %v2428
        %2634 = vmatmul.mubr.bf16.gmra.mrb[0].mxu0 %v2427
        %v2635 = vpop.f32.mrb[0].mxu0
        %v2636 = vadd.f32 0.0, %v2635
        %v2637 = vpop.f32.mrb[0].mxu0
        %v2638 = vpop.f32.mrb[0].mxu0
        %v2639 = vadd.f32 0.0, %v2638
        %v2640 = vpop.f32.mrb[0].mxu0
        %2641 = vdwg.mxu0
        %2642 = vmatprep.subr.bf16.mxu0 0
        %2643 = vmatpush1.bf16.msra.mxu0 %v2545
        %2644 = vmatprep.subr.bf16.mxu0 0
        %2645 = vmatpush1.bf16.msra.mxu0 %v2546
        %2646 = vmatprep.subr.bf16.mxu0 0
        %2647 = vmatpush1.bf16.msra.mxu0 %v2547
        %2648 = vmatprep.subr.bf16.mxu0 0
        %2649 = vmatpush1.bf16.msra.mxu0 %v2548
        %2650 = vmatprep.subr.bf16.mxu0 0
        %2651 = vmatpush1.bf16.msra.mxu0 %v2549
        %2652 = vmatprep.subr.bf16.mxu0 0
        %2653 = vmatpush1.bf16.msra.mxu0 %v2550
        %2654 = vmatprep.subr.bf16.mxu0 0
        %2655 = vmatpush1.bf16.msra.mxu0 %v2551
        %2656 = vmatprep.subr.bf16.mxu0 0
        %2657 = vmatpush1.bf16.msra.mxu0 %v2552
        %2658 = vmatprep.subr.bf16.mxu0 0
        %2659 = vmatpush1.bf16.msra.mxu0 0
        %2660 = vmatprep.subr.bf16.mxu0 0
        %2661 = vmatpush1.bf16.msra.mxu0 0
        %2662 = vmatprep.subr.bf16.mxu0 0
        %2663 = vmatpush1.bf16.msra.mxu0 0
        %2664 = vmatprep.subr.bf16.mxu0 0
        %2665 = vmatpush1.bf16.msra.mxu0 0
        %2666 = vmatprep.subr.bf16.mxu0 0
        %2667 = vmatpush1.bf16.msra.mxu0 0
        %2668 = vmatprep.subr.bf16.mxu0 0
        %2669 = vmatpush1.bf16.msra.mxu0 0
        %2670 = vmatprep.subr.bf16.mxu0 0
        %2671 = vmatpush1.bf16.msra.mxu0 0
        %2672 = vmatprep.subr.bf16.mxu0 0
        %2673 = vmatpush1.bf16.msra.mxu0 0
        %2674 = vmatprep.mubr.bf16.mxu0 0
        %2675 = vmatmul.mubr.bf16.gmra.mrb[0].mxu0 %v2085
        %v2676 = vpop.f32.mrb[0].mxu0
        %v2677 = vadd.f32 %v2612, %v2676
        %v2678 = vpop.f32.mrb[0].mxu0
        %v2679 = vpop.f32.mrb[0].mxu0
        %v2680 = vadd.f32 %v2615, %v2679
        %v2681 = vpop.f32.mrb[0].mxu0
        %2682 = vmatprep.mubr.bf16.mxu0 0
        %2683 = vmatmul.mubr.bf16.gmra.mrb[0].mxu0 %v2088
        %v2684 = vpop.f32.mrb[0].mxu0
        %v2685 = vadd.f32 %v2620, %v2684
        %v2686 = vpop.f32.mrb[0].mxu0
        %v2687 = vpop.f32.mrb[0].mxu0
        %v2688 = vadd.f32 %v2623, %v2687
        %v2689 = vpop.f32.mrb[0].mxu0
        %2690 = vmatprep.mubr.bf16.mxu0 0
        %2691 = vmatmul.mubr.bf16.gmra.mrb[0].mxu0 %v2091
        %v2692 = vpop.f32.mrb[0].mxu0
        %v2693 = vadd.f32 %v2628, %v2692
        %v2694 = vpop.f32.mrb[0].mxu0
        %v2695 = vpop.f32.mrb[0].mxu0
        %v2696 = vadd.f32 %v2631, %v2695
        %v2697 = vpop.f32.mrb[0].mxu0
        %2698 = vmatprep.mubr.bf16.mxu0 0
        %2699 = vmatmul.mubr.bf16.gmra.mrb[0].mxu0 %v2429
        %v2700 = vpop.f32.mrb[0].mxu0
        %v2701 = vadd.f32 %v2636, %v2700
        %v2702 = vpop.f32.mrb[0].mxu0
        %v2703 = vpop.f32.mrb[0].mxu0
        %v2704 = vadd.f32 %v2639, %v2703
        %v2705 = vpop.f32.mrb[0].mxu0
        %2706 = vdwg.mxu0
        %v2707 = vadd.f32 %v2348, %v2677
        %v2708 = vadd.f32 %v2351, %v2680
        %v2709 = vadd.f32 %v2356, %v2685
        %v2710 = vadd.f32 %v2359, %v2688
        %v2711 = vadd.f32 %v2364, %v2693
        %v2712 = vadd.f32 %v2367, %v2696
        %v2713 = vadd.f32 %v2372, %v2701
        %v2714 = vadd.f32 %v2375, %v2704
        %v2715 = vld [vmem:[%s5] sm:$0x1]
        %v2717 = vlaneseq
        %v2718 = vshrl.u32 %v2717, 7
        %v2719 = vsub.s32 0, %v2718
        %v2720 = vrot.slane %v2715, %v2719
        %v2722 = vmul.f32 %v2707, %v2720
        %v2723 = vmul.f32 %v2708, %v2720
        %v2724 = vmul.f32 %v2709, %v2720
        %v2725 = vmul.f32 %v2710, %v2720
        %v2726 = vmul.f32 %v2711, %v2720
        %v2727 = vmul.f32 %v2712, %v2720
        %v2728 = vmul.f32 %v2713, %v2720
        %v2729 = vmul.f32 %v2714, %v2720
        %v2730 = vld [vmem:[%s6] sm:$0x1]
        %v2732 = vlaneseq
        %v2733 = vshrl.u32 %v2732, 7
        %v2734 = vsub.s32 0, %v2733
        %v2735 = vrot.slane %v2730, %v2734
        %v2737 = vadd.f32 %v2722, %v2735
        %v2738 = vadd.f32 %v2723, %v2735
        %v2739 = vadd.f32 %v2724, %v2735
        %v2740 = vadd.f32 %v2725, %v2735
        %v2741 = vadd.f32 %v2726, %v2735
        %v2742 = vadd.f32 %v2727, %v2735
        %v2743 = vadd.f32 %v2728, %v2735
        %v2744 = vadd.f32 %v2729, %v2735
        %v2745 = vunpack.c.l.bf16 %v281
        %v2746 = vunpack.c.l.bf16 %v282
        %v2747 = vunpack.c.l.bf16 %v283
        %v2748 = vunpack.c.l.bf16 %v284
        %v2749 = vunpack.c.l.bf16 %v285
        %v2750 = vunpack.c.l.bf16 %v286
        %v2751 = vunpack.c.l.bf16 %v287
        %v2752 = vunpack.c.l.bf16 %v288
        %v2753 = vadd.f32 %v2737, %v2745
        %v2754 = vadd.f32 %v2738, %v2746
        %v2755 = vadd.f32 %v2739, %v2747
        %v2756 = vadd.f32 %v2740, %v2748
        %v2757 = vadd.f32 %v2741, %v2749
        %v2758 = vadd.f32 %v2742, %v2750
        %v2759 = vadd.f32 %v2743, %v2751
        %v2760 = vadd.f32 %v2744, %v2752
        %v2761 = vmax.f32 %v2753, 0.0
        %v2762 = vmax.f32 %v2754, 0.0
        %v2763 = vmax.f32 %v2755, 0.0
        %v2764 = vmax.f32 %v2756, 0.0
        %v2765 = vmax.f32 %v2757, 0.0
        %v2766 = vmax.f32 %v2758, 0.0
        %v2767 = vmax.f32 %v2759, 0.0
        %v2768 = vmax.f32 %v2760, 0.0
        %2769 = vst [vmem:[%s272] sm:$0xff] %v2761
        %2770 = vst [vmem:[%s272 + $0x8] sm:$0xff] %v2762
        %2771 = vst [vmem:[%s272 + $0x10] sm:$0xff] %v2763
        %2772 = vst [vmem:[%s272 + $0x18] sm:$0xff] %v2764
        %2773 = vst [vmem:[%s272 + $0x20] sm:$0xff] %v2765
        %2774 = vst [vmem:[%s272 + $0x28] sm:$0xff] %v2766
        %2775 = vst [vmem:[%s272 + $0x30] sm:$0xff] %v2767
        %2776 = vst [vmem:[%s272 + $0x38] sm:$0xff] %v2768
        %s2777 = sand.u32 %s181, 1
        %s2778 = scalar_lea.sflag [#allocation3], %s2777
        %s2779 = sand.u32 %s181, 1
        %s2780 = smul.addr %s2779, 64
        %s2781 = scalar_lea.vmem [#allocation2], %s2780
        // Predicated region
        $region49: #{model_forward.3} parent=47 // pred_check
          %p2782 = pneg %p191
        $region50: #{model_forward.3} parent=47 // pred_check_branch
          %2784 = sbr.rel (%p2782) target = $region52
        $region51: #{model_forward.3} parent=47 // pred_region
          %s2785 = smul.u32 8, %s21
          %s2787 = ssub.s32 1024, 1024
          %2788 = vsyncadd %s2778, %s2787
          %s2789 = smul.addr %s2785, 128
          %s2790 = scalar_lea.hbm %s7, %s2789
          %s2791 = sshll.u32 %s2781, 4
          %s2792 = int_to_ptr.vmem [resolvable:$true] %s2791
          %2797 = dma.vmem_to_hbm [thread:$0]  %s2792, 1024, %s2790, %s2778, 128, 128, 8
        $region52: #{model_forward.3} parent=47 // pred_fallthru
          _
      $region48: #{model_forward.3} parent=5 // pred_fallthru
        _
      %p2798 = scmp.le.s32.totalorder 2, %s16
      // Predicated region
      $region53: #{model_forward.3} parent=5 // pred_check
        %p2799 = pneg %p2798
      $region54: #{model_forward.3} parent=5 // pred_check_branch
        %2801 = sbr.rel (%p2799) target = $region56
      $region55: #{model_forward.3} parent=5 // pred_region
        %s2802 = ssub.s32 %s16, 2
        // Predicated region
        $region57: #{model_forward.3} parent=55 // pred_check
          %p2803 = pneg %p197
        $region58: #{model_forward.3} parent=55 // pred_check_branch
          %2805 = sbr.rel (%p2803) target = $region60
        $region59: #{model_forward.3} parent=55 // pred_region
          %s2806 = sand.u32 %s182, 1
          %s2807 = scalar_lea.sflag [#allocation3], %s2806
          %s2808 = sand.u32 %s182, 1
          %s2809 = smul.addr %s2808, 64
          %s2810 = scalar_lea.vmem [#allocation2], %s2809
          %2811 = dma.done %s2807, 1024
        $region60: #{model_forward.3} parent=55 // pred_fallthru
          _
      $region56: #{model_forward.3} parent=5 // pred_fallthru
        _
    $region6: #{model_forward.3} parent=1 // loop_footer
      %s20 = sadd.s32 1, %s16
    $region7: #{model_forward.3} parent=1 // loop_footer_branch
      %15 = sbr.rel target = $region3
    $region8: #{model_forward.3} parent=1 // loop_exit
      _
    %2812 = vsyncpa [#allocation3], 1
    %s2813 = scalar_lea.sflag [#allocation3], 1
    %2814 = vsyncpa %s2813, 1

</llo_original>
